<compile_context>
chip_gen: v6e
topology: v6e:2x2x1
jax: 0.10.0
libtpu: 0.0.40
codegen_flags: <defaults>
</compile_context>

<pallas_src>
import functools

import jax
import jax.numpy as jnp
from jax import lax
from jax.experimental import pallas as pl
from jax.experimental.pallas import tpu as pltpu

NEG_SLOPE = 0.01   # nn.LeakyReLU default
LN_EPS = 1e-5      # nn.LayerNorm default


# ----------------------------- in-kernel helpers -----------------------------

def _lrelu(y):
    return jnp.where(y >= 0, y, NEG_SLOPE * y)


def _layernorm(x, g, b):
    mu = jnp.mean(x, axis=-1, keepdims=True)
    var = jnp.mean((x - mu) * (x - mu), axis=-1, keepdims=True)
    return (x - mu) * lax.rsqrt(var + LN_EPS) * g + b


# ----------------------------- fused encoder kernel --------------------------

def _encoder_kernel(x_ref, e1w_ref, e1b_ref, e2w_ref, e2b_ref,
                    ln1g_ref, ln1b_ref, wqkv_ref, bqkv_ref, wo_ref, bo_ref,
                    ln2g_ref, ln2b_ref, w1_ref, b1_ref, w2_ref, b2_ref,
                    o_ref, merged_ref, *, n_layers, n_heads, scale):
    """One batch element per grid step: embedding + all encoder layers fused."""
    # ---------------- embeddings: LeakyReLU(emb1(x)) -> LeakyReLU(emb2(.)) ----
    x = x_ref[...]                                            # (S, input_dim)
    y = jnp.dot(x, e1w_ref[...], preferred_element_type=jnp.float32)
    y = _lrelu(y + e1b_ref[...])
    y = jnp.dot(y, e2w_ref[...], preferred_element_type=jnp.float32)
    h = _lrelu(y + e2b_ref[...])                              # (S, hidden)

    hid = h.shape[-1]
    dh = hid // n_heads
    inv_scale = 1.0 / scale

    # Statically-unrolled layer loop; weights for layer `li` are static slices
    # of the stacked, VMEM-resident parameter refs.
    for li in range(n_layers):
        # -------------------- attention sub-block -----------------------------
        n1 = _layernorm(h, ln1g_ref[li], ln1b_ref[li])
        # single fused QKV matmul: (S, hid) @ (hid, 3*hid)
        qkv = jnp.dot(n1, wqkv_ref[li], preferred_element_type=jnp.float32)
        qkv = qkv + bqkv_ref[li]

        for hh in range(n_heads):
            qh = qkv[:, hh * dh:(hh + 1) * dh]                         # (S, dh)
            kh = qkv[:, hid + hh * dh:hid + (hh + 1) * dh]             # (S, dh)
            vh = qkv[:, 2 * hid + hh * dh:2 * hid + (hh + 1) * dh]     # (S, dh)

            # QK^T without materializing a transpose: contract last dims.
            e = lax.dot_general(qh, kh, (((1,), (1,)), ((), ())),
                                preferred_element_type=jnp.float32) * inv_scale
            m = jnp.max(e, axis=-1, keepdims=True)
            p = jnp.exp(e - m)
            l = jnp.sum(p, axis=-1, keepdims=True)
            ctx = jnp.dot(p, vh, preferred_element_type=jnp.float32)   # (S, dh)
            # fold 1/l into (S, dh) context rather than dividing (S, S) probs
            merged_ref[:, hh * dh:(hh + 1) * dh] = ctx * pl.reciprocal(
                l, approx=False)

        o = jnp.dot(merged_ref[...], wo_ref[li],
                    preferred_element_type=jnp.float32) + bo_ref[li]
        h = o + h                                             # residual add

        # -------------------- feed-forward sub-block --------------------------
        n2 = _layernorm(h, ln2g_ref[li], ln2b_ref[li])
        f = jnp.dot(n2, w1_ref[li], preferred_element_type=jnp.float32)
        f = _lrelu(f + b1_ref[li])
        f = jnp.dot(f, w2_ref[li], preferred_element_type=jnp.float32)
        f = _lrelu(f + b2_ref[li])
        h = h + f                                             # residual add

    o_ref[...] = h


# ----------------------------- Pallas wrapper --------------------------------

def encoder_forward(src, params, n_heads):
    """src: (B, S, input_dim) f32 -> (B, S, hidden_dim)."""
    B, S, input_dim = src.shape
    hidden = params["emb2_w"].shape[1]
    n_layers = len(params["layers"])
    pf = params["layers"][0]["w1"].shape[1]
    head_dim = hidden // n_heads
    scale = float(head_dim) ** 0.5
    L = params["layers"]

    # Stack per-layer weights along a leading layer axis (one-time XLA concat /
    # stack per call; inside the kernel layer `li` is a static slice).
    ln1g = jnp.stack([lp["ln1_g"] for lp in L])[:, None, :]            # (L,1,H)
    ln1b = jnp.stack([lp["ln1_b"] for lp in L])[:, None, :]
    wqkv = jnp.stack([jnp.concatenate([lp["wq"], lp["wk"], lp["wv"]], axis=1)
                      for lp in L])                                    # (L,H,3H)
    bqkv = jnp.stack([jnp.concatenate([lp["bq"], lp["bk"], lp["bv"]], axis=0)
                      for lp in L])[:, None, :]                        # (L,1,3H)
    wo = jnp.stack([lp["wo"] for lp in L])                             # (L,H,H)
    bo = jnp.stack([lp["bo"] for lp in L])[:, None, :]                 # (L,1,H)
    ln2g = jnp.stack([lp["ln2_g"] for lp in L])[:, None, :]
    ln2b = jnp.stack([lp["ln2_b"] for lp in L])[:, None, :]
    w1 = jnp.stack([lp["w1"] for lp in L])                             # (L,H,PF)
    b1 = jnp.stack([lp["b1"] for lp in L])[:, None, :]                 # (L,1,PF)
    w2 = jnp.stack([lp["w2"] for lp in L])                             # (L,PF,H)
    b2 = jnp.stack([lp["b2"] for lp in L])[:, None, :]                 # (L,1,H)

    x2 = src.reshape(B * S, input_dim)

    def _const(shape):
        nd = len(shape)
        return pl.BlockSpec(shape, lambda b, _nd=nd: (0,) * _nd)

    kernel = functools.partial(_encoder_kernel, n_layers=n_layers,
                               n_heads=n_heads, scale=scale)
    out = pl.pallas_call(
        kernel,
        out_shape=jax.ShapeDtypeStruct((B * S, hidden), jnp.float32),
        grid=(B,),
        in_specs=[
            pl.BlockSpec((S, input_dim), lambda b: (b, 0)),   # one batch of rows
            _const((input_dim, hidden)),                      # emb1 W
            _const((1, hidden)),                              # emb1 b
            _const((hidden, hidden)),                         # emb2 W
            _const((1, hidden)),                              # emb2 b
            _const((n_layers, 1, hidden)),                    # ln1 gamma
            _const((n_layers, 1, hidden)),                    # ln1 beta
            _const((n_layers, hidden, 3 * hidden)),           # Wq|Wk|Wv
            _const((n_layers, 1, 3 * hidden)),                # bq|bk|bv
            _const((n_layers, hidden, hidden)),               # Wo
            _const((n_layers, 1, hidden)),                    # bo
            _const((n_layers, 1, hidden)),                    # ln2 gamma
            _const((n_layers, 1, hidden)),                    # ln2 beta
            _const((n_layers, hidden, pf)),                   # FF1 W
            _const((n_layers, 1, pf)),                        # FF1 b
            _const((n_layers, pf, hidden)),                   # FF2 W
            _const((n_layers, 1, hidden)),                    # FF2 b
        ],
        out_specs=pl.BlockSpec((S, hidden), lambda b: (b, 0)),
        scratch_shapes=[pltpu.VMEM((S, hidden), jnp.float32)],   # merged heads
        compiler_params=pltpu.CompilerParams(
            dimension_semantics=("parallel",)),
    )(x2,
      params["emb1_w"], params["emb1_b"].reshape(1, -1),
      params["emb2_w"], params["emb2_b"].reshape(1, -1),
      ln1g, ln1b, wqkv, bqkv, wo, bo, ln2g, ln2b, w1, b1, w2, b2)

    return out.reshape(B, S, hidden)


# ----------------------------- pure-JAX reference ----------------------------

def _ln_ref(x, g, b):
    mu = jnp.mean(x, axis=-1, keepdims=True)
    var = jnp.mean((x - mu) ** 2, axis=-1, keepdims=True)
    return (x - mu) / jnp.sqrt(var + LN_EPS) * g + b


def encoder_reference(src, params, n_heads):
    B, S, _ = src.shape
    hidden = params["emb2_w"].shape[1]
    head_dim = hidden // n_heads
    scale = float(head_dim) ** 0.5

    x = _lrelu(src @ params["emb1_w"] + params["emb1_b"])
    x = _lrelu(x @ params["emb2_w"] + params["emb2_b"])

    for lp in params["layers"]:
        n1 = _ln_ref(x, lp["ln1_g"], lp["ln1_b"])
        q = (n1 @ lp["wq"] + lp["bq"]).reshape(B, S, n_heads, head_dim).transpose(0, 2, 1, 3)
        k = (n1 @ lp["wk"] + lp["bk"]).reshape(B, S, n_heads, head_dim).transpose(0, 2, 1, 3)
        v = (n1 @ lp["wv"] + lp["bv"]).reshape(B, S, n_heads, head_dim).transpose(0, 2, 1, 3)
        e = jnp.einsum("bhqd,bhkd->bhqk", q, k) / scale
        a = jax.nn.softmax(e, axis=-1)
        o = jnp.einsum("bhqk,bhkd->bhqd", a, v).transpose(0, 2, 1, 3).reshape(B, S, hidden)
        o = o @ lp["wo"] + lp["bo"]
        x = o + x
        n2 = _ln_ref(x, lp["ln2_g"], lp["ln2_b"])
        f = _lrelu(n2 @ lp["w1"] + lp["b1"])
        f = _lrelu(f @ lp["w2"] + lp["b2"])
        x = x + f
    return x


# ----------------------------- parameter init --------------------------------

def init_params(key, input_dim, hidden_dim, n_layers, pf_dim):
    def lin(k, din, dout):
        kw, kb = jax.random.split(k)
        return (jax.random.normal(kw, (din, dout), jnp.float32) * 0.1,
                jax.random.normal(kb, (dout,), jnp.float32) * 0.1)

    keys = jax.random.split(key, 2 + n_layers)
    emb1_w, emb1_b = lin(keys[0], input_dim, hidden_dim)
    emb2_w, emb2_b = lin(keys[1], hidden_dim, hidden_dim)
    layers = []
    for li in range(n_layers):
        lk = jax.random.split(keys[2 + li], 6)
        wq, bq = lin(lk[0], hidden_dim, hidden_dim)
        wk, bk = lin(lk[1], hidden_dim, hidden_dim)
        wv, bv = lin(lk[2], hidden_dim, hidden_dim)
        wo, bo = lin(lk[3], hidden_dim, hidden_dim)
        w1, b1 = lin(lk[4], hidden_dim, pf_dim)
        w2, b2 = lin(lk[5], pf_dim, hidden_dim)
        layers.append(dict(
            ln1_g=jnp.ones((hidden_dim,), jnp.float32),
            ln1_b=jnp.zeros((hidden_dim,), jnp.float32),
            ln2_g=jnp.ones((hidden_dim,), jnp.float32),
            ln2_b=jnp.zeros((hidden_dim,), jnp.float32),
            wq=wq, bq=bq, wk=wk, bk=bk, wv=wv, bv=bv, wo=wo, bo=bo,
            w1=w1, b1=b1, w2=w2, b2=b2,
        ))
    return dict(emb1_w=emb1_w, emb1_b=emb1_b, emb2_w=emb2_w, emb2_b=emb2_b,
                layers=layers)


# ----------------------------------- main ------------------------------------

if __name__ == "__main__":
    # Small shapes consistent with the module's forward.
    B, S = 2, 8
    input_dim, hidden_dim = 16, 32
    n_layers, n_heads, pf_dim = 2, 4, 64

    key = jax.random.PRNGKey(0)
    kx, kp = jax.random.split(key)
    src = jax.random.normal(kx, (B, S, input_dim), jnp.float32)
    params = init_params(kp, input_dim, hidden_dim, n_layers, pf_dim)

    fwd = jax.jit(encoder_forward, static_argnums=2)
    out = fwd(src, params, n_heads)
    out = jax.block_until_ready(out)

    ref = encoder_reference(src, params, n_heads)
    assert out.shape == (B, S, hidden_dim)
    assert jnp.allclose(out, ref, rtol=1e-4, atol=1e-5), "mismatch vs reference"

    print("KERNEL_OK")
</pallas_src>

<mosaic_0001>
module attributes {stable_mosaic.version = 11 : i64} {
  func.func @_encoder_kernel(%arg0: i32, %arg1: memref<8x16xf32, #tpu.memory_space<vmem>>, %arg2: memref<16x32xf32, #tpu.memory_space<vmem>>, %arg3: memref<1x32xf32, #tpu.memory_space<vmem>>, %arg4: memref<32x32xf32, #tpu.memory_space<vmem>>, %arg5: memref<1x32xf32, #tpu.memory_space<vmem>>, %arg6: memref<2x1x32xf32, #tpu.memory_space<vmem>>, %arg7: memref<2x1x32xf32, #tpu.memory_space<vmem>>, %arg8: memref<2x32x96xf32, #tpu.memory_space<vmem>>, %arg9: memref<2x1x96xf32, #tpu.memory_space<vmem>>, %arg10: memref<2x32x32xf32, #tpu.memory_space<vmem>>, %arg11: memref<2x1x32xf32, #tpu.memory_space<vmem>>, %arg12: memref<2x1x32xf32, #tpu.memory_space<vmem>>, %arg13: memref<2x1x32xf32, #tpu.memory_space<vmem>>, %arg14: memref<2x32x64xf32, #tpu.memory_space<vmem>>, %arg15: memref<2x1x64xf32, #tpu.memory_space<vmem>>, %arg16: memref<2x64x32xf32, #tpu.memory_space<vmem>>, %arg17: memref<2x1x32xf32, #tpu.memory_space<vmem>>, %arg18: memref<8x32xf32, #tpu.memory_space<vmem>>, %arg19: memref<8x32xf32, #tpu.memory_space<vmem>>) attributes {dimension_semantics = [#tpu.dimension_semantics<parallel>], iteration_bounds = array<i64: 2>, scalar_prefetch = 0 : i64, scratch_operands = 1 : i64, tpu.core_type = #tpu.core_type<tc>, window_params = [{transform_indices = @transform_0, window_bounds = array<i64: 8, 16>}, {pipeline_mode = #tpu.pipeline_mode<synchronous>, transform_indices = @transform_1, window_bounds = array<i64: 16, 32>}, {pipeline_mode = #tpu.pipeline_mode<synchronous>, transform_indices = @transform_2, window_bounds = array<i64: 1, 32>}, {pipeline_mode = #tpu.pipeline_mode<synchronous>, transform_indices = @transform_3, window_bounds = array<i64: 32, 32>}, {pipeline_mode = #tpu.pipeline_mode<synchronous>, transform_indices = @transform_4, window_bounds = array<i64: 1, 32>}, {pipeline_mode = #tpu.pipeline_mode<synchronous>, transform_indices = @transform_5, window_bounds = array<i64: 2, 1, 32>}, {pipeline_mode = #tpu.pipeline_mode<synchronous>, transform_indices = @transform_6, window_bounds = array<i64: 2, 1, 32>}, {pipeline_mode = #tpu.pipeline_mode<synchronous>, transform_indices = @transform_7, window_bounds = array<i64: 2, 32, 96>}, {pipeline_mode = #tpu.pipeline_mode<synchronous>, transform_indices = @transform_8, window_bounds = array<i64: 2, 1, 96>}, {pipeline_mode = #tpu.pipeline_mode<synchronous>, transform_indices = @transform_9, window_bounds = array<i64: 2, 32, 32>}, {pipeline_mode = #tpu.pipeline_mode<synchronous>, transform_indices = @transform_10, window_bounds = array<i64: 2, 1, 32>}, {pipeline_mode = #tpu.pipeline_mode<synchronous>, transform_indices = @transform_11, window_bounds = array<i64: 2, 1, 32>}, {pipeline_mode = #tpu.pipeline_mode<synchronous>, transform_indices = @transform_12, window_bounds = array<i64: 2, 1, 32>}, {pipeline_mode = #tpu.pipeline_mode<synchronous>, transform_indices = @transform_13, window_bounds = array<i64: 2, 32, 64>}, {pipeline_mode = #tpu.pipeline_mode<synchronous>, transform_indices = @transform_14, window_bounds = array<i64: 2, 1, 64>}, {pipeline_mode = #tpu.pipeline_mode<synchronous>, transform_indices = @transform_15, window_bounds = array<i64: 2, 64, 32>}, {pipeline_mode = #tpu.pipeline_mode<synchronous>, transform_indices = @transform_16, window_bounds = array<i64: 2, 1, 32>}, {transform_indices = @transform_17, window_bounds = array<i64: 8, 32>}]} {
    %c0 = arith.constant 0 : index
    %c0_0 = arith.constant 0 : index
    %0 = vector.load %arg1[%c0, %c0_0] : memref<8x16xf32, #tpu.memory_space<vmem>>, vector<8x16xf32>
    %c0_1 = arith.constant 0 : index
    %c0_2 = arith.constant 0 : index
    %1 = vector.load %arg2[%c0_1, %c0_2] : memref<16x32xf32, #tpu.memory_space<vmem>>, vector<16x32xf32>
    %cst = arith.constant dense<0.000000e+00> : vector<8x32xf32>
    %2 = tpu.matmul %0, %1, %cst {dimension_numbers = #tpu.dot_dimension_numbers<[1], [0], [0], [1], [0, 0, 1, 1], [], []>} : vector<8x16xf32>, vector<16x32xf32>, vector<8x32xf32> -> vector<8x32xf32>
    %c0_3 = arith.constant 0 : index
    %c0_4 = arith.constant 0 : index
    %3 = vector.load %arg3[%c0_3, %c0_4] : memref<1x32xf32, #tpu.memory_space<vmem>>, vector<1x32xf32>
    %4 = vector.broadcast %3 : vector<1x32xf32> to vector<8x32xf32>
    %5 = arith.addf %2, %4 : vector<8x32xf32>
    %cst_5 = arith.constant 0.000000e+00 : f32
    %6 = vector.broadcast %cst_5 : f32 to vector<8x32xf32>
    %7 = arith.cmpf oge, %5, %6 : vector<8x32xf32>
    %cst_6 = arith.constant 0.00999999977 : f32
    %8 = vector.broadcast %cst_6 : f32 to vector<8x32xf32>
    %9 = arith.mulf %8, %5 : vector<8x32xf32>
    %10 = arith.select %7, %5, %9 : vector<8x32xi1>, vector<8x32xf32>
    %c0_7 = arith.constant 0 : index
    %c0_8 = arith.constant 0 : index
    %11 = vector.load %arg4[%c0_7, %c0_8] : memref<32x32xf32, #tpu.memory_space<vmem>>, vector<32x32xf32>
    %cst_9 = arith.constant dense<0.000000e+00> : vector<8x32xf32>
    %12 = tpu.matmul %10, %11, %cst_9 {dimension_numbers = #tpu.dot_dimension_numbers<[1], [0], [0], [1], [0, 0, 1, 1], [], []>} : vector<8x32xf32>, vector<32x32xf32>, vector<8x32xf32> -> vector<8x32xf32>
    %c0_10 = arith.constant 0 : index
    %c0_11 = arith.constant 0 : index
    %13 = vector.load %arg5[%c0_10, %c0_11] : memref<1x32xf32, #tpu.memory_space<vmem>>, vector<1x32xf32>
    %14 = vector.broadcast %13 : vector<1x32xf32> to vector<8x32xf32>
    %15 = arith.addf %12, %14 : vector<8x32xf32>
    %cst_12 = arith.constant 0.000000e+00 : f32
    %16 = vector.broadcast %cst_12 : f32 to vector<8x32xf32>
    %17 = arith.cmpf oge, %15, %16 : vector<8x32xf32>
    %cst_13 = arith.constant 0.00999999977 : f32
    %18 = vector.broadcast %cst_13 : f32 to vector<8x32xf32>
    %19 = arith.mulf %18, %15 : vector<8x32xf32>
    %20 = arith.select %17, %15, %19 : vector<8x32xi1>, vector<8x32xf32>
    %c0_14 = arith.constant 0 : index
    %c0_15 = arith.constant 0 : index
    %c0_16 = arith.constant 0 : index
    %21 = vector.load %arg6[%c0_14, %c0_15, %c0_16] : memref<2x1x32xf32, #tpu.memory_space<vmem>>, vector<1x1x32xf32>
    %22 = vector.shape_cast %21 : vector<1x1x32xf32> to vector<1x32xf32>
    %c0_17 = arith.constant 0 : index
    %c0_18 = arith.constant 0 : index
    %c0_19 = arith.constant 0 : index
    %23 = vector.load %arg7[%c0_17, %c0_18, %c0_19] : memref<2x1x32xf32, #tpu.memory_space<vmem>>, vector<1x1x32xf32>
    %24 = vector.shape_cast %23 : vector<1x1x32xf32> to vector<1x32xf32>
    %cst_20 = arith.constant dense<0.000000e+00> : vector<8xf32>
    %25 = vector.multi_reduction <add>, %20, %cst_20 [1] : vector<8x32xf32> to vector<8xf32>
    %26 = vector.shape_cast %25 : vector<8xf32> to vector<8x1xf32>
    %cst_21 = arith.constant 3.200000e+01 : f32
    %27 = vector.broadcast %cst_21 : f32 to vector<8x1xf32>
    %28 = arith.divf %26, %27 : vector<8x1xf32>
    %29 = vector.broadcast %28 : vector<8x1xf32> to vector<8x32xf32>
    %30 = arith.subf %20, %29 : vector<8x32xf32>
    %31 = vector.broadcast %28 : vector<8x1xf32> to vector<8x32xf32>
    %32 = arith.subf %20, %31 : vector<8x32xf32>
    %33 = arith.mulf %30, %32 : vector<8x32xf32>
    %cst_22 = arith.constant dense<0.000000e+00> : vector<8xf32>
    %34 = vector.multi_reduction <add>, %33, %cst_22 [1] : vector<8x32xf32> to vector<8xf32>
    %35 = vector.shape_cast %34 : vector<8xf32> to vector<8x1xf32>
    %cst_23 = arith.constant 3.200000e+01 : f32
    %36 = vector.broadcast %cst_23 : f32 to vector<8x1xf32>
    %37 = arith.divf %35, %36 : vector<8x1xf32>
    %38 = vector.broadcast %28 : vector<8x1xf32> to vector<8x32xf32>
    %39 = arith.subf %20, %38 : vector<8x32xf32>
    %cst_24 = arith.constant 9.99999974E-6 : f32
    %40 = vector.broadcast %cst_24 : f32 to vector<8x1xf32>
    %41 = arith.addf %37, %40 : vector<8x1xf32>
    %42 = math.rsqrt %41 : vector<8x1xf32>
    %43 = vector.broadcast %42 : vector<8x1xf32> to vector<8x32xf32>
    %44 = arith.mulf %39, %43 : vector<8x32xf32>
    %45 = vector.broadcast %22 : vector<1x32xf32> to vector<8x32xf32>
    %46 = arith.mulf %44, %45 : vector<8x32xf32>
    %47 = vector.broadcast %24 : vector<1x32xf32> to vector<8x32xf32>
    %48 = arith.addf %46, %47 : vector<8x32xf32>
    %c0_25 = arith.constant 0 : index
    %c0_26 = arith.constant 0 : index
    %c0_27 = arith.constant 0 : index
    %49 = vector.load %arg8[%c0_25, %c0_26, %c0_27] : memref<2x32x96xf32, #tpu.memory_space<vmem>>, vector<1x32x96xf32>
    %50 = vector.shape_cast %49 : vector<1x32x96xf32> to vector<32x96xf32>
    %cst_28 = arith.constant dense<0.000000e+00> : vector<8x96xf32>
    %51 = tpu.matmul %48, %50, %cst_28 {dimension_numbers = #tpu.dot_dimension_numbers<[1], [0], [0], [1], [0, 0, 1, 1], [], []>} : vector<8x32xf32>, vector<32x96xf32>, vector<8x96xf32> -> vector<8x96xf32>
    %c0_29 = arith.constant 0 : index
    %c0_30 = arith.constant 0 : index
    %c0_31 = arith.constant 0 : index
    %52 = vector.load %arg9[%c0_29, %c0_30, %c0_31] : memref<2x1x96xf32, #tpu.memory_space<vmem>>, vector<1x1x96xf32>
    %53 = vector.shape_cast %52 : vector<1x1x96xf32> to vector<1x96xf32>
    %54 = vector.broadcast %53 : vector<1x96xf32> to vector<8x96xf32>
    %55 = arith.addf %51, %54 : vector<8x96xf32>
    %56 = vector.extract_strided_slice %55 {offsets = [0, 0], sizes = [8, 8], strides = [1, 1]} : vector<8x96xf32> to vector<8x8xf32>
    %57 = vector.extract_strided_slice %55 {offsets = [0, 32], sizes = [8, 8], strides = [1, 1]} : vector<8x96xf32> to vector<8x8xf32>
    %58 = vector.extract_strided_slice %55 {offsets = [0, 64], sizes = [8, 8], strides = [1, 1]} : vector<8x96xf32> to vector<8x8xf32>
    %cst_32 = arith.constant dense<0.000000e+00> : vector<8x8xf32>
    %59 = tpu.matmul %56, %57, %cst_32 {dimension_numbers = #tpu.dot_dimension_numbers<[1], [1], [0], [0], [0, 0, 1, 0], [], []>} : vector<8x8xf32>, vector<8x8xf32>, vector<8x8xf32> -> vector<8x8xf32>
    %cst_33 = arith.constant 0.353553385 : f32
    %60 = vector.broadcast %cst_33 : f32 to vector<8x8xf32>
    %61 = arith.mulf %59, %60 : vector<8x8xf32>
    %cst_34 = arith.constant dense<0xFF800000> : vector<8xf32>
    %62 = vector.multi_reduction <maximumf>, %61, %cst_34 [1] : vector<8x8xf32> to vector<8xf32>
    %63 = vector.shape_cast %62 : vector<8xf32> to vector<8x1xf32>
    %64 = vector.broadcast %63 : vector<8x1xf32> to vector<8x8xf32>
    %65 = arith.subf %61, %64 : vector<8x8xf32>
    %66 = math.exp %65 : vector<8x8xf32>
    %cst_35 = arith.constant dense<0.000000e+00> : vector<8xf32>
    %67 = vector.multi_reduction <add>, %66, %cst_35 [1] : vector<8x8xf32> to vector<8xf32>
    %68 = vector.shape_cast %67 : vector<8xf32> to vector<8x1xf32>
    %cst_36 = arith.constant dense<0.000000e+00> : vector<8x8xf32>
    %69 = tpu.matmul %66, %58, %cst_36 {dimension_numbers = #tpu.dot_dimension_numbers<[1], [0], [0], [1], [0, 0, 1, 1], [], []>} : vector<8x8xf32>, vector<8x8xf32>, vector<8x8xf32> -> vector<8x8xf32>
    %70 = tpu.reciprocal %68 : vector<8x1xf32> -> vector<8x1xf32>
    %71 = vector.broadcast %70 : vector<8x1xf32> to vector<8x8xf32>
    %72 = arith.mulf %69, %71 : vector<8x8xf32>
    %c0_37 = arith.constant 0 : index
    %c0_38 = arith.constant 0 : index
    %73 = vector.load %arg19[%c0_37, %c0_38] : memref<8x32xf32, #tpu.memory_space<vmem>>, vector<8x8xf32>
    tpu.vector_store %arg19[%c0_37, %c0_38], %72 {strides = array<i32>} : memref<8x32xf32, #tpu.memory_space<vmem>>, vector<8x8xf32>,
    %74 = vector.extract_strided_slice %55 {offsets = [0, 8], sizes = [8, 8], strides = [1, 1]} : vector<8x96xf32> to vector<8x8xf32>
    %75 = vector.extract_strided_slice %55 {offsets = [0, 40], sizes = [8, 8], strides = [1, 1]} : vector<8x96xf32> to vector<8x8xf32>
    %76 = vector.extract_strided_slice %55 {offsets = [0, 72], sizes = [8, 8], strides = [1, 1]} : vector<8x96xf32> to vector<8x8xf32>
    %cst_39 = arith.constant dense<0.000000e+00> : vector<8x8xf32>
    %77 = tpu.matmul %74, %75, %cst_39 {dimension_numbers = #tpu.dot_dimension_numbers<[1], [1], [0], [0], [0, 0, 1, 0], [], []>} : vector<8x8xf32>, vector<8x8xf32>, vector<8x8xf32> -> vector<8x8xf32>
    %cst_40 = arith.constant 0.353553385 : f32
    %78 = vector.broadcast %cst_40 : f32 to vector<8x8xf32>
    %79 = arith.mulf %77, %78 : vector<8x8xf32>
    %cst_41 = arith.constant dense<0xFF800000> : vector<8xf32>
    %80 = vector.multi_reduction <maximumf>, %79, %cst_41 [1] : vector<8x8xf32> to vector<8xf32>
    %81 = vector.shape_cast %80 : vector<8xf32> to vector<8x1xf32>
    %82 = vector.broadcast %81 : vector<8x1xf32> to vector<8x8xf32>
    %83 = arith.subf %79, %82 : vector<8x8xf32>
    %84 = math.exp %83 : vector<8x8xf32>
    %cst_42 = arith.constant dense<0.000000e+00> : vector<8xf32>
    %85 = vector.multi_reduction <add>, %84, %cst_42 [1] : vector<8x8xf32> to vector<8xf32>
    %86 = vector.shape_cast %85 : vector<8xf32> to vector<8x1xf32>
    %cst_43 = arith.constant dense<0.000000e+00> : vector<8x8xf32>
    %87 = tpu.matmul %84, %76, %cst_43 {dimension_numbers = #tpu.dot_dimension_numbers<[1], [0], [0], [1], [0, 0, 1, 1], [], []>} : vector<8x8xf32>, vector<8x8xf32>, vector<8x8xf32> -> vector<8x8xf32>
    %88 = tpu.reciprocal %86 : vector<8x1xf32> -> vector<8x1xf32>
    %89 = vector.broadcast %88 : vector<8x1xf32> to vector<8x8xf32>
    %90 = arith.mulf %87, %89 : vector<8x8xf32>
    %c0_44 = arith.constant 0 : index
    %c8 = arith.constant 8 : index
    %91 = vector.load %arg19[%c0_44, %c8] : memref<8x32xf32, #tpu.memory_space<vmem>>, vector<8x8xf32>
    tpu.vector_store %arg19[%c0_44, %c8], %90 {strides = array<i32>} : memref<8x32xf32, #tpu.memory_space<vmem>>, vector<8x8xf32>,
    %92 = vector.extract_strided_slice %55 {offsets = [0, 16], sizes = [8, 8], strides = [1, 1]} : vector<8x96xf32> to vector<8x8xf32>
    %93 = vector.extract_strided_slice %55 {offsets = [0, 48], sizes = [8, 8], strides = [1, 1]} : vector<8x96xf32> to vector<8x8xf32>
    %94 = vector.extract_strided_slice %55 {offsets = [0, 80], sizes = [8, 8], strides = [1, 1]} : vector<8x96xf32> to vector<8x8xf32>
    %cst_45 = arith.constant dense<0.000000e+00> : vector<8x8xf32>
    %95 = tpu.matmul %92, %93, %cst_45 {dimension_numbers = #tpu.dot_dimension_numbers<[1], [1], [0], [0], [0, 0, 1, 0], [], []>} : vector<8x8xf32>, vector<8x8xf32>, vector<8x8xf32> -> vector<8x8xf32>
    %cst_46 = arith.constant 0.353553385 : f32
    %96 = vector.broadcast %cst_46 : f32 to vector<8x8xf32>
    %97 = arith.mulf %95, %96 : vector<8x8xf32>
    %cst_47 = arith.constant dense<0xFF800000> : vector<8xf32>
    %98 = vector.multi_reduction <maximumf>, %97, %cst_47 [1] : vector<8x8xf32> to vector<8xf32>
    %99 = vector.shape_cast %98 : vector<8xf32> to vector<8x1xf32>
    %100 = vector.broadcast %99 : vector<8x1xf32> to vector<8x8xf32>
    %101 = arith.subf %97, %100 : vector<8x8xf32>
    %102 = math.exp %101 : vector<8x8xf32>
    %cst_48 = arith.constant dense<0.000000e+00> : vector<8xf32>
    %103 = vector.multi_reduction <add>, %102, %cst_48 [1] : vector<8x8xf32> to vector<8xf32>
    %104 = vector.shape_cast %103 : vector<8xf32> to vector<8x1xf32>
    %cst_49 = arith.constant dense<0.000000e+00> : vector<8x8xf32>
    %105 = tpu.matmul %102, %94, %cst_49 {dimension_numbers = #tpu.dot_dimension_numbers<[1], [0], [0], [1], [0, 0, 1, 1], [], []>} : vector<8x8xf32>, vector<8x8xf32>, vector<8x8xf32> -> vector<8x8xf32>
    %106 = tpu.reciprocal %104 : vector<8x1xf32> -> vector<8x1xf32>
    %107 = vector.broadcast %106 : vector<8x1xf32> to vector<8x8xf32>
    %108 = arith.mulf %105, %107 : vector<8x8xf32>
    %c0_50 = arith.constant 0 : index
    %c16 = arith.constant 16 : index
    %109 = vector.load %arg19[%c0_50, %c16] : memref<8x32xf32, #tpu.memory_space<vmem>>, vector<8x8xf32>
    tpu.vector_store %arg19[%c0_50, %c16], %108 {strides = array<i32>} : memref<8x32xf32, #tpu.memory_space<vmem>>, vector<8x8xf32>,
    %110 = vector.extract_strided_slice %55 {offsets = [0, 24], sizes = [8, 8], strides = [1, 1]} : vector<8x96xf32> to vector<8x8xf32>
    %111 = vector.extract_strided_slice %55 {offsets = [0, 56], sizes = [8, 8], strides = [1, 1]} : vector<8x96xf32> to vector<8x8xf32>
    %112 = vector.extract_strided_slice %55 {offsets = [0, 88], sizes = [8, 8], strides = [1, 1]} : vector<8x96xf32> to vector<8x8xf32>
    %cst_51 = arith.constant dense<0.000000e+00> : vector<8x8xf32>
    %113 = tpu.matmul %110, %111, %cst_51 {dimension_numbers = #tpu.dot_dimension_numbers<[1], [1], [0], [0], [0, 0, 1, 0], [], []>} : vector<8x8xf32>, vector<8x8xf32>, vector<8x8xf32> -> vector<8x8xf32>
    %cst_52 = arith.constant 0.353553385 : f32
    %114 = vector.broadcast %cst_52 : f32 to vector<8x8xf32>
    %115 = arith.mulf %113, %114 : vector<8x8xf32>
    %cst_53 = arith.constant dense<0xFF800000> : vector<8xf32>
    %116 = vector.multi_reduction <maximumf>, %115, %cst_53 [1] : vector<8x8xf32> to vector<8xf32>
    %117 = vector.shape_cast %116 : vector<8xf32> to vector<8x1xf32>
    %118 = vector.broadcast %117 : vector<8x1xf32> to vector<8x8xf32>
    %119 = arith.subf %115, %118 : vector<8x8xf32>
    %120 = math.exp %119 : vector<8x8xf32>
    %cst_54 = arith.constant dense<0.000000e+00> : vector<8xf32>
    %121 = vector.multi_reduction <add>, %120, %cst_54 [1] : vector<8x8xf32> to vector<8xf32>
    %122 = vector.shape_cast %121 : vector<8xf32> to vector<8x1xf32>
    %cst_55 = arith.constant dense<0.000000e+00> : vector<8x8xf32>
    %123 = tpu.matmul %120, %112, %cst_55 {dimension_numbers = #tpu.dot_dimension_numbers<[1], [0], [0], [1], [0, 0, 1, 1], [], []>} : vector<8x8xf32>, vector<8x8xf32>, vector<8x8xf32> -> vector<8x8xf32>
    %124 = tpu.reciprocal %122 : vector<8x1xf32> -> vector<8x1xf32>
    %125 = vector.broadcast %124 : vector<8x1xf32> to vector<8x8xf32>
    %126 = arith.mulf %123, %125 : vector<8x8xf32>
    %c0_56 = arith.constant 0 : index
    %c24 = arith.constant 24 : index
    %127 = vector.load %arg19[%c0_56, %c24] : memref<8x32xf32, #tpu.memory_space<vmem>>, vector<8x8xf32>
    tpu.vector_store %arg19[%c0_56, %c24], %126 {strides = array<i32>} : memref<8x32xf32, #tpu.memory_space<vmem>>, vector<8x8xf32>,
    %c0_57 = arith.constant 0 : index
    %c0_58 = arith.constant 0 : index
    %128 = vector.load %arg19[%c0_57, %c0_58] : memref<8x32xf32, #tpu.memory_space<vmem>>, vector<8x32xf32>
    %c0_59 = arith.constant 0 : index
    %c0_60 = arith.constant 0 : index
    %c0_61 = arith.constant 0 : index
    %129 = vector.load %arg10[%c0_59, %c0_60, %c0_61] : memref<2x32x32xf32, #tpu.memory_space<vmem>>, vector<1x32x32xf32>
    %130 = vector.shape_cast %129 : vector<1x32x32xf32> to vector<32x32xf32>
    %cst_62 = arith.constant dense<0.000000e+00> : vector<8x32xf32>
    %131 = tpu.matmul %128, %130, %cst_62 {dimension_numbers = #tpu.dot_dimension_numbers<[1], [0], [0], [1], [0, 0, 1, 1], [], []>} : vector<8x32xf32>, vector<32x32xf32>, vector<8x32xf32> -> vector<8x32xf32>
    %c0_63 = arith.constant 0 : index
    %c0_64 = arith.constant 0 : index
    %c0_65 = arith.constant 0 : index
    %132 = vector.load %arg11[%c0_63, %c0_64, %c0_65] : memref<2x1x32xf32, #tpu.memory_space<vmem>>, vector<1x1x32xf32>
    %133 = vector.shape_cast %132 : vector<1x1x32xf32> to vector<1x32xf32>
    %134 = vector.broadcast %133 : vector<1x32xf32> to vector<8x32xf32>
    %135 = arith.addf %131, %134 : vector<8x32xf32>
    %136 = arith.addf %135, %20 : vector<8x32xf32>
    %c0_66 = arith.constant 0 : index
    %c0_67 = arith.constant 0 : index
    %c0_68 = arith.constant 0 : index
    %137 = vector.load %arg12[%c0_66, %c0_67, %c0_68] : memref<2x1x32xf32, #tpu.memory_space<vmem>>, vector<1x1x32xf32>
    %138 = vector.shape_cast %137 : vector<1x1x32xf32> to vector<1x32xf32>
    %c0_69 = arith.constant 0 : index
    %c0_70 = arith.constant 0 : index
    %c0_71 = arith.constant 0 : index
    %139 = vector.load %arg13[%c0_69, %c0_70, %c0_71] : memref<2x1x32xf32, #tpu.memory_space<vmem>>, vector<1x1x32xf32>
    %140 = vector.shape_cast %139 : vector<1x1x32xf32> to vector<1x32xf32>
    %cst_72 = arith.constant dense<0.000000e+00> : vector<8xf32>
    %141 = vector.multi_reduction <add>, %136, %cst_72 [1] : vector<8x32xf32> to vector<8xf32>
    %142 = vector.shape_cast %141 : vector<8xf32> to vector<8x1xf32>
    %cst_73 = arith.constant 3.200000e+01 : f32
    %143 = vector.broadcast %cst_73 : f32 to vector<8x1xf32>
    %144 = arith.divf %142, %143 : vector<8x1xf32>
    %145 = vector.broadcast %144 : vector<8x1xf32> to vector<8x32xf32>
    %146 = arith.subf %136, %145 : vector<8x32xf32>
    %147 = vector.broadcast %144 : vector<8x1xf32> to vector<8x32xf32>
    %148 = arith.subf %136, %147 : vector<8x32xf32>
    %149 = arith.mulf %146, %148 : vector<8x32xf32>
    %cst_74 = arith.constant dense<0.000000e+00> : vector<8xf32>
    %150 = vector.multi_reduction <add>, %149, %cst_74 [1] : vector<8x32xf32> to vector<8xf32>
    %151 = vector.shape_cast %150 : vector<8xf32> to vector<8x1xf32>
    %cst_75 = arith.constant 3.200000e+01 : f32
    %152 = vector.broadcast %cst_75 : f32 to vector<8x1xf32>
    %153 = arith.divf %151, %152 : vector<8x1xf32>
    %154 = vector.broadcast %144 : vector<8x1xf32> to vector<8x32xf32>
    %155 = arith.subf %136, %154 : vector<8x32xf32>
    %cst_76 = arith.constant 9.99999974E-6 : f32
    %156 = vector.broadcast %cst_76 : f32 to vector<8x1xf32>
    %157 = arith.addf %153, %156 : vector<8x1xf32>
    %158 = math.rsqrt %157 : vector<8x1xf32>
    %159 = vector.broadcast %158 : vector<8x1xf32> to vector<8x32xf32>
    %160 = arith.mulf %155, %159 : vector<8x32xf32>
    %161 = vector.broadcast %138 : vector<1x32xf32> to vector<8x32xf32>
    %162 = arith.mulf %160, %161 : vector<8x32xf32>
    %163 = vector.broadcast %140 : vector<1x32xf32> to vector<8x32xf32>
    %164 = arith.addf %162, %163 : vector<8x32xf32>
    %c0_77 = arith.constant 0 : index
    %c0_78 = arith.constant 0 : index
    %c0_79 = arith.constant 0 : index
    %165 = vector.load %arg14[%c0_77, %c0_78, %c0_79] : memref<2x32x64xf32, #tpu.memory_space<vmem>>, vector<1x32x64xf32>
    %166 = vector.shape_cast %165 : vector<1x32x64xf32> to vector<32x64xf32>
    %cst_80 = arith.constant dense<0.000000e+00> : vector<8x64xf32>
    %167 = tpu.matmul %164, %166, %cst_80 {dimension_numbers = #tpu.dot_dimension_numbers<[1], [0], [0], [1], [0, 0, 1, 1], [], []>} : vector<8x32xf32>, vector<32x64xf32>, vector<8x64xf32> -> vector<8x64xf32>
    %c0_81 = arith.constant 0 : index
    %c0_82 = arith.constant 0 : index
    %c0_83 = arith.constant 0 : index
    %168 = vector.load %arg15[%c0_81, %c0_82, %c0_83] : memref<2x1x64xf32, #tpu.memory_space<vmem>>, vector<1x1x64xf32>
    %169 = vector.shape_cast %168 : vector<1x1x64xf32> to vector<1x64xf32>
    %170 = vector.broadcast %169 : vector<1x64xf32> to vector<8x64xf32>
    %171 = arith.addf %167, %170 : vector<8x64xf32>
    %cst_84 = arith.constant 0.000000e+00 : f32
    %172 = vector.broadcast %cst_84 : f32 to vector<8x64xf32>
    %173 = arith.cmpf oge, %171, %172 : vector<8x64xf32>
    %cst_85 = arith.constant 0.00999999977 : f32
    %174 = vector.broadcast %cst_85 : f32 to vector<8x64xf32>
    %175 = arith.mulf %174, %171 : vector<8x64xf32>
    %176 = arith.select %173, %171, %175 : vector<8x64xi1>, vector<8x64xf32>
    %c0_86 = arith.constant 0 : index
    %c0_87 = arith.constant 0 : index
    %c0_88 = arith.constant 0 : index
    %177 = vector.load %arg16[%c0_86, %c0_87, %c0_88] : memref<2x64x32xf32, #tpu.memory_space<vmem>>, vector<1x64x32xf32>
    %178 = vector.shape_cast %177 : vector<1x64x32xf32> to vector<64x32xf32>
    %cst_89 = arith.constant dense<0.000000e+00> : vector<8x32xf32>
    %179 = tpu.matmul %176, %178, %cst_89 {dimension_numbers = #tpu.dot_dimension_numbers<[1], [0], [0], [1], [0, 0, 1, 1], [], []>} : vector<8x64xf32>, vector<64x32xf32>, vector<8x32xf32> -> vector<8x32xf32>
    %c0_90 = arith.constant 0 : index
    %c0_91 = arith.constant 0 : index
    %c0_92 = arith.constant 0 : index
    %180 = vector.load %arg17[%c0_90, %c0_91, %c0_92] : memref<2x1x32xf32, #tpu.memory_space<vmem>>, vector<1x1x32xf32>
    %181 = vector.shape_cast %180 : vector<1x1x32xf32> to vector<1x32xf32>
    %182 = vector.broadcast %181 : vector<1x32xf32> to vector<8x32xf32>
    %183 = arith.addf %179, %182 : vector<8x32xf32>
    %cst_93 = arith.constant 0.000000e+00 : f32
    %184 = vector.broadcast %cst_93 : f32 to vector<8x32xf32>
    %185 = arith.cmpf oge, %183, %184 : vector<8x32xf32>
    %cst_94 = arith.constant 0.00999999977 : f32
    %186 = vector.broadcast %cst_94 : f32 to vector<8x32xf32>
    %187 = arith.mulf %186, %183 : vector<8x32xf32>
    %188 = arith.select %185, %183, %187 : vector<8x32xi1>, vector<8x32xf32>
    %189 = arith.addf %136, %188 : vector<8x32xf32>
    %c1 = arith.constant 1 : index
    %c0_95 = arith.constant 0 : index
    %c0_96 = arith.constant 0 : index
    %190 = vector.load %arg6[%c1, %c0_95, %c0_96] : memref<2x1x32xf32, #tpu.memory_space<vmem>>, vector<1x1x32xf32>
    %191 = vector.shape_cast %190 : vector<1x1x32xf32> to vector<1x32xf32>
    %c1_97 = arith.constant 1 : index
    %c0_98 = arith.constant 0 : index
    %c0_99 = arith.constant 0 : index
    %192 = vector.load %arg7[%c1_97, %c0_98, %c0_99] : memref<2x1x32xf32, #tpu.memory_space<vmem>>, vector<1x1x32xf32>
    %193 = vector.shape_cast %192 : vector<1x1x32xf32> to vector<1x32xf32>
    %cst_100 = arith.constant dense<0.000000e+00> : vector<8xf32>
    %194 = vector.multi_reduction <add>, %189, %cst_100 [1] : vector<8x32xf32> to vector<8xf32>
    %195 = vector.shape_cast %194 : vector<8xf32> to vector<8x1xf32>
    %cst_101 = arith.constant 3.200000e+01 : f32
    %196 = vector.broadcast %cst_101 : f32 to vector<8x1xf32>
    %197 = arith.divf %195, %196 : vector<8x1xf32>
    %198 = vector.broadcast %197 : vector<8x1xf32> to vector<8x32xf32>
    %199 = arith.subf %189, %198 : vector<8x32xf32>
    %200 = vector.broadcast %197 : vector<8x1xf32> to vector<8x32xf32>
    %201 = arith.subf %189, %200 : vector<8x32xf32>
    %202 = arith.mulf %199, %201 : vector<8x32xf32>
    %cst_102 = arith.constant dense<0.000000e+00> : vector<8xf32>
    %203 = vector.multi_reduction <add>, %202, %cst_102 [1] : vector<8x32xf32> to vector<8xf32>
    %204 = vector.shape_cast %203 : vector<8xf32> to vector<8x1xf32>
    %cst_103 = arith.constant 3.200000e+01 : f32
    %205 = vector.broadcast %cst_103 : f32 to vector<8x1xf32>
    %206 = arith.divf %204, %205 : vector<8x1xf32>
    %207 = vector.broadcast %197 : vector<8x1xf32> to vector<8x32xf32>
    %208 = arith.subf %189, %207 : vector<8x32xf32>
    %cst_104 = arith.constant 9.99999974E-6 : f32
    %209 = vector.broadcast %cst_104 : f32 to vector<8x1xf32>
    %210 = arith.addf %206, %209 : vector<8x1xf32>
    %211 = math.rsqrt %210 : vector<8x1xf32>
    %212 = vector.broadcast %211 : vector<8x1xf32> to vector<8x32xf32>
    %213 = arith.mulf %208, %212 : vector<8x32xf32>
    %214 = vector.broadcast %191 : vector<1x32xf32> to vector<8x32xf32>
    %215 = arith.mulf %213, %214 : vector<8x32xf32>
    %216 = vector.broadcast %193 : vector<1x32xf32> to vector<8x32xf32>
    %217 = arith.addf %215, %216 : vector<8x32xf32>
    %c1_105 = arith.constant 1 : index
    %c0_106 = arith.constant 0 : index
    %c0_107 = arith.constant 0 : index
    %218 = vector.load %arg8[%c1_105, %c0_106, %c0_107] : memref<2x32x96xf32, #tpu.memory_space<vmem>>, vector<1x32x96xf32>
    %219 = vector.shape_cast %218 : vector<1x32x96xf32> to vector<32x96xf32>
    %cst_108 = arith.constant dense<0.000000e+00> : vector<8x96xf32>
    %220 = tpu.matmul %217, %219, %cst_108 {dimension_numbers = #tpu.dot_dimension_numbers<[1], [0], [0], [1], [0, 0, 1, 1], [], []>} : vector<8x32xf32>, vector<32x96xf32>, vector<8x96xf32> -> vector<8x96xf32>
    %c1_109 = arith.constant 1 : index
    %c0_110 = arith.constant 0 : index
    %c0_111 = arith.constant 0 : index
    %221 = vector.load %arg9[%c1_109, %c0_110, %c0_111] : memref<2x1x96xf32, #tpu.memory_space<vmem>>, vector<1x1x96xf32>
    %222 = vector.shape_cast %221 : vector<1x1x96xf32> to vector<1x96xf32>
    %223 = vector.broadcast %222 : vector<1x96xf32> to vector<8x96xf32>
    %224 = arith.addf %220, %223 : vector<8x96xf32>
    %225 = vector.extract_strided_slice %224 {offsets = [0, 0], sizes = [8, 8], strides = [1, 1]} : vector<8x96xf32> to vector<8x8xf32>
    %226 = vector.extract_strided_slice %224 {offsets = [0, 32], sizes = [8, 8], strides = [1, 1]} : vector<8x96xf32> to vector<8x8xf32>
    %227 = vector.extract_strided_slice %224 {offsets = [0, 64], sizes = [8, 8], strides = [1, 1]} : vector<8x96xf32> to vector<8x8xf32>
    %cst_112 = arith.constant dense<0.000000e+00> : vector<8x8xf32>
    %228 = tpu.matmul %225, %226, %cst_112 {dimension_numbers = #tpu.dot_dimension_numbers<[1], [1], [0], [0], [0, 0, 1, 0], [], []>} : vector<8x8xf32>, vector<8x8xf32>, vector<8x8xf32> -> vector<8x8xf32>
    %cst_113 = arith.constant 0.353553385 : f32
    %229 = vector.broadcast %cst_113 : f32 to vector<8x8xf32>
    %230 = arith.mulf %228, %229 : vector<8x8xf32>
    %cst_114 = arith.constant dense<0xFF800000> : vector<8xf32>
    %231 = vector.multi_reduction <maximumf>, %230, %cst_114 [1] : vector<8x8xf32> to vector<8xf32>
    %232 = vector.shape_cast %231 : vector<8xf32> to vector<8x1xf32>
    %233 = vector.broadcast %232 : vector<8x1xf32> to vector<8x8xf32>
    %234 = arith.subf %230, %233 : vector<8x8xf32>
    %235 = math.exp %234 : vector<8x8xf32>
    %cst_115 = arith.constant dense<0.000000e+00> : vector<8xf32>
    %236 = vector.multi_reduction <add>, %235, %cst_115 [1] : vector<8x8xf32> to vector<8xf32>
    %237 = vector.shape_cast %236 : vector<8xf32> to vector<8x1xf32>
    %cst_116 = arith.constant dense<0.000000e+00> : vector<8x8xf32>
    %238 = tpu.matmul %235, %227, %cst_116 {dimension_numbers = #tpu.dot_dimension_numbers<[1], [0], [0], [1], [0, 0, 1, 1], [], []>} : vector<8x8xf32>, vector<8x8xf32>, vector<8x8xf32> -> vector<8x8xf32>
    %239 = tpu.reciprocal %237 : vector<8x1xf32> -> vector<8x1xf32>
    %240 = vector.broadcast %239 : vector<8x1xf32> to vector<8x8xf32>
    %241 = arith.mulf %238, %240 : vector<8x8xf32>
    %c0_117 = arith.constant 0 : index
    %c0_118 = arith.constant 0 : index
    %242 = vector.load %arg19[%c0_117, %c0_118] : memref<8x32xf32, #tpu.memory_space<vmem>>, vector<8x8xf32>
    tpu.vector_store %arg19[%c0_117, %c0_118], %241 {strides = array<i32>} : memref<8x32xf32, #tpu.memory_space<vmem>>, vector<8x8xf32>,
    %243 = vector.extract_strided_slice %224 {offsets = [0, 8], sizes = [8, 8], strides = [1, 1]} : vector<8x96xf32> to vector<8x8xf32>
    %244 = vector.extract_strided_slice %224 {offsets = [0, 40], sizes = [8, 8], strides = [1, 1]} : vector<8x96xf32> to vector<8x8xf32>
    %245 = vector.extract_strided_slice %224 {offsets = [0, 72], sizes = [8, 8], strides = [1, 1]} : vector<8x96xf32> to vector<8x8xf32>
    %cst_119 = arith.constant dense<0.000000e+00> : vector<8x8xf32>
    %246 = tpu.matmul %243, %244, %cst_119 {dimension_numbers = #tpu.dot_dimension_numbers<[1], [1], [0], [0], [0, 0, 1, 0], [], []>} : vector<8x8xf32>, vector<8x8xf32>, vector<8x8xf32> -> vector<8x8xf32>
    %cst_120 = arith.constant 0.353553385 : f32
    %247 = vector.broadcast %cst_120 : f32 to vector<8x8xf32>
    %248 = arith.mulf %246, %247 : vector<8x8xf32>
    %cst_121 = arith.constant dense<0xFF800000> : vector<8xf32>
    %249 = vector.multi_reduction <maximumf>, %248, %cst_121 [1] : vector<8x8xf32> to vector<8xf32>
    %250 = vector.shape_cast %249 : vector<8xf32> to vector<8x1xf32>
    %251 = vector.broadcast %250 : vector<8x1xf32> to vector<8x8xf32>
    %252 = arith.subf %248, %251 : vector<8x8xf32>
    %253 = math.exp %252 : vector<8x8xf32>
    %cst_122 = arith.constant dense<0.000000e+00> : vector<8xf32>
    %254 = vector.multi_reduction <add>, %253, %cst_122 [1] : vector<8x8xf32> to vector<8xf32>
    %255 = vector.shape_cast %254 : vector<8xf32> to vector<8x1xf32>
    %cst_123 = arith.constant dense<0.000000e+00> : vector<8x8xf32>
    %256 = tpu.matmul %253, %245, %cst_123 {dimension_numbers = #tpu.dot_dimension_numbers<[1], [0], [0], [1], [0, 0, 1, 1], [], []>} : vector<8x8xf32>, vector<8x8xf32>, vector<8x8xf32> -> vector<8x8xf32>
    %257 = tpu.reciprocal %255 : vector<8x1xf32> -> vector<8x1xf32>
    %258 = vector.broadcast %257 : vector<8x1xf32> to vector<8x8xf32>
    %259 = arith.mulf %256, %258 : vector<8x8xf32>
    %c0_124 = arith.constant 0 : index
    %c8_125 = arith.constant 8 : index
    %260 = vector.load %arg19[%c0_124, %c8_125] : memref<8x32xf32, #tpu.memory_space<vmem>>, vector<8x8xf32>
    tpu.vector_store %arg19[%c0_124, %c8_125], %259 {strides = array<i32>} : memref<8x32xf32, #tpu.memory_space<vmem>>, vector<8x8xf32>,
    %261 = vector.extract_strided_slice %224 {offsets = [0, 16], sizes = [8, 8], strides = [1, 1]} : vector<8x96xf32> to vector<8x8xf32>
    %262 = vector.extract_strided_slice %224 {offsets = [0, 48], sizes = [8, 8], strides = [1, 1]} : vector<8x96xf32> to vector<8x8xf32>
    %263 = vector.extract_strided_slice %224 {offsets = [0, 80], sizes = [8, 8], strides = [1, 1]} : vector<8x96xf32> to vector<8x8xf32>
    %cst_126 = arith.constant dense<0.000000e+00> : vector<8x8xf32>
    %264 = tpu.matmul %261, %262, %cst_126 {dimension_numbers = #tpu.dot_dimension_numbers<[1], [1], [0], [0], [0, 0, 1, 0], [], []>} : vector<8x8xf32>, vector<8x8xf32>, vector<8x8xf32> -> vector<8x8xf32>
    %cst_127 = arith.constant 0.353553385 : f32
    %265 = vector.broadcast %cst_127 : f32 to vector<8x8xf32>
    %266 = arith.mulf %264, %265 : vector<8x8xf32>
    %cst_128 = arith.constant dense<0xFF800000> : vector<8xf32>
    %267 = vector.multi_reduction <maximumf>, %266, %cst_128 [1] : vector<8x8xf32> to vector<8xf32>
    %268 = vector.shape_cast %267 : vector<8xf32> to vector<8x1xf32>
    %269 = vector.broadcast %268 : vector<8x1xf32> to vector<8x8xf32>
    %270 = arith.subf %266, %269 : vector<8x8xf32>
    %271 = math.exp %270 : vector<8x8xf32>
    %cst_129 = arith.constant dense<0.000000e+00> : vector<8xf32>
    %272 = vector.multi_reduction <add>, %271, %cst_129 [1] : vector<8x8xf32> to vector<8xf32>
    %273 = vector.shape_cast %272 : vector<8xf32> to vector<8x1xf32>
    %cst_130 = arith.constant dense<0.000000e+00> : vector<8x8xf32>
    %274 = tpu.matmul %271, %263, %cst_130 {dimension_numbers = #tpu.dot_dimension_numbers<[1], [0], [0], [1], [0, 0, 1, 1], [], []>} : vector<8x8xf32>, vector<8x8xf32>, vector<8x8xf32> -> vector<8x8xf32>
    %275 = tpu.reciprocal %273 : vector<8x1xf32> -> vector<8x1xf32>
    %276 = vector.broadcast %275 : vector<8x1xf32> to vector<8x8xf32>
    %277 = arith.mulf %274, %276 : vector<8x8xf32>
    %c0_131 = arith.constant 0 : index
    %c16_132 = arith.constant 16 : index
    %278 = vector.load %arg19[%c0_131, %c16_132] : memref<8x32xf32, #tpu.memory_space<vmem>>, vector<8x8xf32>
    tpu.vector_store %arg19[%c0_131, %c16_132], %277 {strides = array<i32>} : memref<8x32xf32, #tpu.memory_space<vmem>>, vector<8x8xf32>,
    %279 = vector.extract_strided_slice %224 {offsets = [0, 24], sizes = [8, 8], strides = [1, 1]} : vector<8x96xf32> to vector<8x8xf32>
    %280 = vector.extract_strided_slice %224 {offsets = [0, 56], sizes = [8, 8], strides = [1, 1]} : vector<8x96xf32> to vector<8x8xf32>
    %281 = vector.extract_strided_slice %224 {offsets = [0, 88], sizes = [8, 8], strides = [1, 1]} : vector<8x96xf32> to vector<8x8xf32>
    %cst_133 = arith.constant dense<0.000000e+00> : vector<8x8xf32>
    %282 = tpu.matmul %279, %280, %cst_133 {dimension_numbers = #tpu.dot_dimension_numbers<[1], [1], [0], [0], [0, 0, 1, 0], [], []>} : vector<8x8xf32>, vector<8x8xf32>, vector<8x8xf32> -> vector<8x8xf32>
    %cst_134 = arith.constant 0.353553385 : f32
    %283 = vector.broadcast %cst_134 : f32 to vector<8x8xf32>
    %284 = arith.mulf %282, %283 : vector<8x8xf32>
    %cst_135 = arith.constant dense<0xFF800000> : vector<8xf32>
    %285 = vector.multi_reduction <maximumf>, %284, %cst_135 [1] : vector<8x8xf32> to vector<8xf32>
    %286 = vector.shape_cast %285 : vector<8xf32> to vector<8x1xf32>
    %287 = vector.broadcast %286 : vector<8x1xf32> to vector<8x8xf32>
    %288 = arith.subf %284, %287 : vector<8x8xf32>
    %289 = math.exp %288 : vector<8x8xf32>
    %cst_136 = arith.constant dense<0.000000e+00> : vector<8xf32>
    %290 = vector.multi_reduction <add>, %289, %cst_136 [1] : vector<8x8xf32> to vector<8xf32>
    %291 = vector.shape_cast %290 : vector<8xf32> to vector<8x1xf32>
    %cst_137 = arith.constant dense<0.000000e+00> : vector<8x8xf32>
    %292 = tpu.matmul %289, %281, %cst_137 {dimension_numbers = #tpu.dot_dimension_numbers<[1], [0], [0], [1], [0, 0, 1, 1], [], []>} : vector<8x8xf32>, vector<8x8xf32>, vector<8x8xf32> -> vector<8x8xf32>
    %293 = tpu.reciprocal %291 : vector<8x1xf32> -> vector<8x1xf32>
    %294 = vector.broadcast %293 : vector<8x1xf32> to vector<8x8xf32>
    %295 = arith.mulf %292, %294 : vector<8x8xf32>
    %c0_138 = arith.constant 0 : index
    %c24_139 = arith.constant 24 : index
    %296 = vector.load %arg19[%c0_138, %c24_139] : memref<8x32xf32, #tpu.memory_space<vmem>>, vector<8x8xf32>
    tpu.vector_store %arg19[%c0_138, %c24_139], %295 {strides = array<i32>} : memref<8x32xf32, #tpu.memory_space<vmem>>, vector<8x8xf32>,
    %c0_140 = arith.constant 0 : index
    %c0_141 = arith.constant 0 : index
    %297 = vector.load %arg19[%c0_140, %c0_141] : memref<8x32xf32, #tpu.memory_space<vmem>>, vector<8x32xf32>
    %c1_142 = arith.constant 1 : index
    %c0_143 = arith.constant 0 : index
    %c0_144 = arith.constant 0 : index
    %298 = vector.load %arg10[%c1_142, %c0_143, %c0_144] : memref<2x32x32xf32, #tpu.memory_space<vmem>>, vector<1x32x32xf32>
    %299 = vector.shape_cast %298 : vector<1x32x32xf32> to vector<32x32xf32>
    %cst_145 = arith.constant dense<0.000000e+00> : vector<8x32xf32>
    %300 = tpu.matmul %297, %299, %cst_145 {dimension_numbers = #tpu.dot_dimension_numbers<[1], [0], [0], [1], [0, 0, 1, 1], [], []>} : vector<8x32xf32>, vector<32x32xf32>, vector<8x32xf32> -> vector<8x32xf32>
    %c1_146 = arith.constant 1 : index
    %c0_147 = arith.constant 0 : index
    %c0_148 = arith.constant 0 : index
    %301 = vector.load %arg11[%c1_146, %c0_147, %c0_148] : memref<2x1x32xf32, #tpu.memory_space<vmem>>, vector<1x1x32xf32>
    %302 = vector.shape_cast %301 : vector<1x1x32xf32> to vector<1x32xf32>
    %303 = vector.broadcast %302 : vector<1x32xf32> to vector<8x32xf32>
    %304 = arith.addf %300, %303 : vector<8x32xf32>
    %305 = arith.addf %304, %189 : vector<8x32xf32>
    %c1_149 = arith.constant 1 : index
    %c0_150 = arith.constant 0 : index
    %c0_151 = arith.constant 0 : index
    %306 = vector.load %arg12[%c1_149, %c0_150, %c0_151] : memref<2x1x32xf32, #tpu.memory_space<vmem>>, vector<1x1x32xf32>
    %307 = vector.shape_cast %306 : vector<1x1x32xf32> to vector<1x32xf32>
    %c1_152 = arith.constant 1 : index
    %c0_153 = arith.constant 0 : index
    %c0_154 = arith.constant 0 : index
    %308 = vector.load %arg13[%c1_152, %c0_153, %c0_154] : memref<2x1x32xf32, #tpu.memory_space<vmem>>, vector<1x1x32xf32>
    %309 = vector.shape_cast %308 : vector<1x1x32xf32> to vector<1x32xf32>
    %cst_155 = arith.constant dense<0.000000e+00> : vector<8xf32>
    %310 = vector.multi_reduction <add>, %305, %cst_155 [1] : vector<8x32xf32> to vector<8xf32>
    %311 = vector.shape_cast %310 : vector<8xf32> to vector<8x1xf32>
    %cst_156 = arith.constant 3.200000e+01 : f32
    %312 = vector.broadcast %cst_156 : f32 to vector<8x1xf32>
    %313 = arith.divf %311, %312 : vector<8x1xf32>
    %314 = vector.broadcast %313 : vector<8x1xf32> to vector<8x32xf32>
    %315 = arith.subf %305, %314 : vector<8x32xf32>
    %316 = vector.broadcast %313 : vector<8x1xf32> to vector<8x32xf32>
    %317 = arith.subf %305, %316 : vector<8x32xf32>
    %318 = arith.mulf %315, %317 : vector<8x32xf32>
    %cst_157 = arith.constant dense<0.000000e+00> : vector<8xf32>
    %319 = vector.multi_reduction <add>, %318, %cst_157 [1] : vector<8x32xf32> to vector<8xf32>
    %320 = vector.shape_cast %319 : vector<8xf32> to vector<8x1xf32>
    %cst_158 = arith.constant 3.200000e+01 : f32
    %321 = vector.broadcast %cst_158 : f32 to vector<8x1xf32>
    %322 = arith.divf %320, %321 : vector<8x1xf32>
    %323 = vector.broadcast %313 : vector<8x1xf32> to vector<8x32xf32>
    %324 = arith.subf %305, %323 : vector<8x32xf32>
    %cst_159 = arith.constant 9.99999974E-6 : f32
    %325 = vector.broadcast %cst_159 : f32 to vector<8x1xf32>
    %326 = arith.addf %322, %325 : vector<8x1xf32>
    %327 = math.rsqrt %326 : vector<8x1xf32>
    %328 = vector.broadcast %327 : vector<8x1xf32> to vector<8x32xf32>
    %329 = arith.mulf %324, %328 : vector<8x32xf32>
    %330 = vector.broadcast %307 : vector<1x32xf32> to vector<8x32xf32>
    %331 = arith.mulf %329, %330 : vector<8x32xf32>
    %332 = vector.broadcast %309 : vector<1x32xf32> to vector<8x32xf32>
    %333 = arith.addf %331, %332 : vector<8x32xf32>
    %c1_160 = arith.constant 1 : index
    %c0_161 = arith.constant 0 : index
    %c0_162 = arith.constant 0 : index
    %334 = vector.load %arg14[%c1_160, %c0_161, %c0_162] : memref<2x32x64xf32, #tpu.memory_space<vmem>>, vector<1x32x64xf32>
    %335 = vector.shape_cast %334 : vector<1x32x64xf32> to vector<32x64xf32>
    %cst_163 = arith.constant dense<0.000000e+00> : vector<8x64xf32>
    %336 = tpu.matmul %333, %335, %cst_163 {dimension_numbers = #tpu.dot_dimension_numbers<[1], [0], [0], [1], [0, 0, 1, 1], [], []>} : vector<8x32xf32>, vector<32x64xf32>, vector<8x64xf32> -> vector<8x64xf32>
    %c1_164 = arith.constant 1 : index
    %c0_165 = arith.constant 0 : index
    %c0_166 = arith.constant 0 : index
    %337 = vector.load %arg15[%c1_164, %c0_165, %c0_166] : memref<2x1x64xf32, #tpu.memory_space<vmem>>, vector<1x1x64xf32>
    %338 = vector.shape_cast %337 : vector<1x1x64xf32> to vector<1x64xf32>
    %339 = vector.broadcast %338 : vector<1x64xf32> to vector<8x64xf32>
    %340 = arith.addf %336, %339 : vector<8x64xf32>
    %cst_167 = arith.constant 0.000000e+00 : f32
    %341 = vector.broadcast %cst_167 : f32 to vector<8x64xf32>
    %342 = arith.cmpf oge, %340, %341 : vector<8x64xf32>
    %cst_168 = arith.constant 0.00999999977 : f32
    %343 = vector.broadcast %cst_168 : f32 to vector<8x64xf32>
    %344 = arith.mulf %343, %340 : vector<8x64xf32>
    %345 = arith.select %342, %340, %344 : vector<8x64xi1>, vector<8x64xf32>
    %c1_169 = arith.constant 1 : index
    %c0_170 = arith.constant 0 : index
    %c0_171 = arith.constant 0 : index
    %346 = vector.load %arg16[%c1_169, %c0_170, %c0_171] : memref<2x64x32xf32, #tpu.memory_space<vmem>>, vector<1x64x32xf32>
    %347 = vector.shape_cast %346 : vector<1x64x32xf32> to vector<64x32xf32>
    %cst_172 = arith.constant dense<0.000000e+00> : vector<8x32xf32>
    %348 = tpu.matmul %345, %347, %cst_172 {dimension_numbers = #tpu.dot_dimension_numbers<[1], [0], [0], [1], [0, 0, 1, 1], [], []>} : vector<8x64xf32>, vector<64x32xf32>, vector<8x32xf32> -> vector<8x32xf32>
    %c1_173 = arith.constant 1 : index
    %c0_174 = arith.constant 0 : index
    %c0_175 = arith.constant 0 : index
    %349 = vector.load %arg17[%c1_173, %c0_174, %c0_175] : memref<2x1x32xf32, #tpu.memory_space<vmem>>, vector<1x1x32xf32>
    %350 = vector.shape_cast %349 : vector<1x1x32xf32> to vector<1x32xf32>
    %351 = vector.broadcast %350 : vector<1x32xf32> to vector<8x32xf32>
    %352 = arith.addf %348, %351 : vector<8x32xf32>
    %cst_176 = arith.constant 0.000000e+00 : f32
    %353 = vector.broadcast %cst_176 : f32 to vector<8x32xf32>
    %354 = arith.cmpf oge, %352, %353 : vector<8x32xf32>
    %cst_177 = arith.constant 0.00999999977 : f32
    %355 = vector.broadcast %cst_177 : f32 to vector<8x32xf32>
    %356 = arith.mulf %355, %352 : vector<8x32xf32>
    %357 = arith.select %354, %352, %356 : vector<8x32xi1>, vector<8x32xf32>
    %358 = arith.addf %305, %357 : vector<8x32xf32>
    %c0_178 = arith.constant 0 : index
    %c0_179 = arith.constant 0 : index
    %359 = vector.load %arg18[%c0_178, %c0_179] : memref<8x32xf32, #tpu.memory_space<vmem>>, vector<8x32xf32>
    tpu.vector_store %arg18[%c0_178, %c0_179], %358 {strides = array<i32>} : memref<8x32xf32, #tpu.memory_space<vmem>>, vector<8x32xf32>,
    return
  }
  func.func @transform_0(%arg0: i32) -> (i32, i32) {
    %c0_i32 = arith.constant 0 : i32
    %c0_i32_0 = arith.constant 0 : i32
    return %arg0, %c0_i32 : i32, i32
  }
  func.func @transform_1(%arg0: i32) -> (i32, i32) {
    %c0_i32 = arith.constant 0 : i32
    %c0_i32_0 = arith.constant 0 : i32
    %c0_i32_1 = arith.constant 0 : i32
    return %c0_i32, %c0_i32_0 : i32, i32
  }
  func.func @transform_2(%arg0: i32) -> (i32, i32) {
    %c0_i32 = arith.constant 0 : i32
    %c0_i32_0 = arith.constant 0 : i32
    %c0_i32_1 = arith.constant 0 : i32
    return %c0_i32, %c0_i32_0 : i32, i32
  }
  func.func @transform_3(%arg0: i32) -> (i32, i32) {
    %c0_i32 = arith.constant 0 : i32
    %c0_i32_0 = arith.constant 0 : i32
    %c0_i32_1 = arith.constant 0 : i32
    return %c0_i32, %c0_i32_0 : i32, i32
  }
  func.func @transform_4(%arg0: i32) -> (i32, i32) {
    %c0_i32 = arith.constant 0 : i32
    %c0_i32_0 = arith.constant 0 : i32
    %c0_i32_1 = arith.constant 0 : i32
    return %c0_i32, %c0_i32_0 : i32, i32
  }
  func.func @transform_5(%arg0: i32) -> (i32, i32, i32) {
    %c0_i32 = arith.constant 0 : i32
    %c0_i32_0 = arith.constant 0 : i32
    %c0_i32_1 = arith.constant 0 : i32
    %c0_i32_2 = arith.constant 0 : i32
    return %c0_i32, %c0_i32_0, %c0_i32_1 : i32, i32, i32
  }
  func.func @transform_6(%arg0: i32) -> (i32, i32, i32) {
    %c0_i32 = arith.constant 0 : i32
    %c0_i32_0 = arith.constant 0 : i32
    %c0_i32_1 = arith.constant 0 : i32
    %c0_i32_2 = arith.constant 0 : i32
    return %c0_i32, %c0_i32_0, %c0_i32_1 : i32, i32, i32
  }
  func.func @transform_7(%arg0: i32) -> (i32, i32, i32) {
    %c0_i32 = arith.constant 0 : i32
    %c0_i32_0 = arith.constant 0 : i32
    %c0_i32_1 = arith.constant 0 : i32
    %c0_i32_2 = arith.constant 0 : i32
    return %c0_i32, %c0_i32_0, %c0_i32_1 : i32, i32, i32
  }
  func.func @transform_8(%arg0: i32) -> (i32, i32, i32) {
    %c0_i32 = arith.constant 0 : i32
    %c0_i32_0 = arith.constant 0 : i32
    %c0_i32_1 = arith.constant 0 : i32
    %c0_i32_2 = arith.constant 0 : i32
    return %c0_i32, %c0_i32_0, %c0_i32_1 : i32, i32, i32
  }
  func.func @transform_9(%arg0: i32) -> (i32, i32, i32) {
    %c0_i32 = arith.constant 0 : i32
    %c0_i32_0 = arith.constant 0 : i32
    %c0_i32_1 = arith.constant 0 : i32
    %c0_i32_2 = arith.constant 0 : i32
    return %c0_i32, %c0_i32_0, %c0_i32_1 : i32, i32, i32
  }
  func.func @transform_10(%arg0: i32) -> (i32, i32, i32) {
    %c0_i32 = arith.constant 0 : i32
    %c0_i32_0 = arith.constant 0 : i32
    %c0_i32_1 = arith.constant 0 : i32
    %c0_i32_2 = arith.constant 0 : i32
    return %c0_i32, %c0_i32_0, %c0_i32_1 : i32, i32, i32
  }
  func.func @transform_11(%arg0: i32) -> (i32, i32, i32) {
    %c0_i32 = arith.constant 0 : i32
    %c0_i32_0 = arith.constant 0 : i32
    %c0_i32_1 = arith.constant 0 : i32
    %c0_i32_2 = arith.constant 0 : i32
    return %c0_i32, %c0_i32_0, %c0_i32_1 : i32, i32, i32
  }
  func.func @transform_12(%arg0: i32) -> (i32, i32, i32) {
    %c0_i32 = arith.constant 0 : i32
    %c0_i32_0 = arith.constant 0 : i32
    %c0_i32_1 = arith.constant 0 : i32
    %c0_i32_2 = arith.constant 0 : i32
    return %c0_i32, %c0_i32_0, %c0_i32_1 : i32, i32, i32
  }
  func.func @transform_13(%arg0: i32) -> (i32, i32, i32) {
    %c0_i32 = arith.constant 0 : i32
    %c0_i32_0 = arith.constant 0 : i32
    %c0_i32_1 = arith.constant 0 : i32
    %c0_i32_2 = arith.constant 0 : i32
    return %c0_i32, %c0_i32_0, %c0_i32_1 : i32, i32, i32
  }
  func.func @transform_14(%arg0: i32) -> (i32, i32, i32) {
    %c0_i32 = arith.constant 0 : i32
    %c0_i32_0 = arith.constant 0 : i32
    %c0_i32_1 = arith.constant 0 : i32
    %c0_i32_2 = arith.constant 0 : i32
    return %c0_i32, %c0_i32_0, %c0_i32_1 : i32, i32, i32
  }
  func.func @transform_15(%arg0: i32) -> (i32, i32, i32) {
    %c0_i32 = arith.constant 0 : i32
    %c0_i32_0 = arith.constant 0 : i32
    %c0_i32_1 = arith.constant 0 : i32
    %c0_i32_2 = arith.constant 0 : i32
    return %c0_i32, %c0_i32_0, %c0_i32_1 : i32, i32, i32
  }
  func.func @transform_16(%arg0: i32) -> (i32, i32, i32) {
    %c0_i32 = arith.constant 0 : i32
    %c0_i32_0 = arith.constant 0 : i32
    %c0_i32_1 = arith.constant 0 : i32
    %c0_i32_2 = arith.constant 0 : i32
    return %c0_i32, %c0_i32_0, %c0_i32_1 : i32, i32, i32
  }
  func.func @transform_17(%arg0: i32) -> (i32, i32) {
    %c0_i32 = arith.constant 0 : i32
    %c0_i32_0 = arith.constant 0 : i32
    return %arg0, %c0_i32 : i32, i32
  }
}

</mosaic_0001>

<llo_original>
// kernel: encoder_forward.1
$region0: #{encoder_forward.1}
  #allocation0 [shape = 'u32[]', space=smem, size = 0x4, offset = 0x4, fixed_abs, tag = 'smem constant byte address 0x4 - core index']
  #allocation1 [shape = 'u32[144,128]{1,0:T(1,128)}', space=vmem, size = 0x12000, scoped, tag = 'internal scratch']
  #allocation2 [shape = 'f32[8,32]{1,0:T(8,128)}', space=vmem, size = 0x1000, scoped, tag = 'scratch operand']
  %s0 = inlined_call_operand.vmem [shape: f32[16,16], index: 0, kind: input, shape index: {}]
  %s1 = inlined_call_operand.vmem [shape: f32[16,32], index: 1, kind: input, shape index: {}]
  %s2 = inlined_call_operand.vmem [shape: f32[1,32], index: 2, kind: input, shape index: {}]
  %s3 = inlined_call_operand.vmem [shape: f32[32,32], index: 3, kind: input, shape index: {}]
  %s4 = inlined_call_operand.vmem [shape: f32[1,32], index: 4, kind: input, shape index: {}]
  %s5 = inlined_call_operand.vmem [shape: f32[2,1,32], index: 5, kind: input, shape index: {}]
  %s6 = inlined_call_operand.vmem [shape: f32[2,1,32], index: 6, kind: input, shape index: {}]
  %s7 = inlined_call_operand.vmem [shape: f32[2,32,96], index: 7, kind: input, shape index: {}]
  %s8 = inlined_call_operand.vmem [shape: f32[2,1,96], index: 8, kind: input, shape index: {}]
  %s9 = inlined_call_operand.vmem [shape: f32[2,32,32], index: 9, kind: input, shape index: {}]
  %s10 = inlined_call_operand.vmem [shape: f32[2,1,32], index: 10, kind: input, shape index: {}]
  %s11 = inlined_call_operand.vmem [shape: f32[2,1,32], index: 11, kind: input, shape index: {}]
  %s12 = inlined_call_operand.vmem [shape: f32[2,1,32], index: 12, kind: input, shape index: {}]
  %s13 = inlined_call_operand.vmem [shape: f32[2,32,64], index: 13, kind: input, shape index: {}]
  %s14 = inlined_call_operand.vmem [shape: f32[2,1,64], index: 14, kind: input, shape index: {}]
  %s15 = inlined_call_operand.vmem [shape: f32[2,64,32], index: 15, kind: input, shape index: {}]
  %s16 = inlined_call_operand.vmem [shape: f32[2,1,32], index: 16, kind: input, shape index: {}]
  %s17 = inlined_call_operand.hbm [shape: f32[16,32], index: 17, kind: output, shape index: {}]
  %s18 = sld [smem:[#allocation0]]
  $region101: #{encoder_forward.1} parent=0
    _
  %s20 = ssub.s32 1, %s18
  %s21 = scalar_select 0, %s20, %s18
  $region1: #{encoder_forward.1} parent=0
    #allocation3 [shape = 'u8[8192]{0}', space=vmem, size = 0x2000, scoped, tag = 'output window, operand 0']
    #allocation4 [shape = 's32[2]{0}', space=sflag, size = 0x8, scoped, tag = 'scoped memory for encoder_forward.1']
    %22 = vsyncpa [#allocation4], 0
    %s23 = scalar_lea.sflag [#allocation4], 1
    %24 = vsyncpa %s23, 0
    loop: start=0, step=1, limit=4
    $region2: #{encoder_forward.1} parent=1 // loop_pre_header
      _
    $region3: #{encoder_forward.1} parent=1 // loop_header
      %s26 = sphi 0, %s30
      %p27 = scmp.ge.s32.totalorder %s26, 4
      %s36 = sphi 0, %s38
      %s39 = sphi 0, %s36
      %s40 = sphi 0, %s39
      %s56 = sphi 0, %s40
      %s60 = sphi 0, %s60
      %s62 = sphi 0, %s60
      %s63 = sphi 0, %s62
      %s77 = sphi 0, %s63
      %s81 = sphi 0, %s81
      %s83 = sphi 0, %s81
      %s84 = sphi 0, %s83
      %s98 = sphi 0, %s84
      %s102 = sphi 0, %s102
      %s104 = sphi 0, %s102
      %s105 = sphi 0, %s104
      %s119 = sphi 0, %s105
      %s123 = sphi 0, %s123
      %s125 = sphi 0, %s123
      %s126 = sphi 0, %s125
      %s140 = sphi 0, %s126
      %s144 = sphi 0, %s144
      %s146 = sphi 0, %s144
      %s147 = sphi 0, %s146
      %s161 = sphi 0, %s147
      %s165 = sphi 0, %s165
      %s167 = sphi 0, %s165
      %s168 = sphi 0, %s167
      %s182 = sphi 0, %s168
      %s186 = sphi 0, %s186
      %s188 = sphi 0, %s186
      %s189 = sphi 0, %s188
      %s203 = sphi 0, %s189
      %s207 = sphi 0, %s207
      %s209 = sphi 0, %s207
      %s210 = sphi 0, %s209
      %s224 = sphi 0, %s210
      %s228 = sphi 0, %s228
      %s230 = sphi 0, %s228
      %s231 = sphi 0, %s230
      %s245 = sphi 0, %s231
      %s249 = sphi 0, %s249
      %s251 = sphi 0, %s249
      %s252 = sphi 0, %s251
      %s266 = sphi 0, %s252
      %s270 = sphi 0, %s270
      %s272 = sphi 0, %s270
      %s273 = sphi 0, %s272
      %s287 = sphi 0, %s273
      %s291 = sphi 0, %s291
      %s293 = sphi 0, %s291
      %s294 = sphi 0, %s293
      %s308 = sphi 0, %s294
      %s312 = sphi 0, %s312
      %s314 = sphi 0, %s312
      %s315 = sphi 0, %s314
      %s329 = sphi 0, %s315
      %s333 = sphi 0, %s333
      %s335 = sphi 0, %s333
      %s336 = sphi 0, %s335
      %s350 = sphi 0, %s336
      %s354 = sphi 0, %s354
      %s356 = sphi 0, %s354
      %s357 = sphi 0, %s356
      %s371 = sphi 0, %s357
      %s375 = sphi 0, %s375
      %s377 = sphi 0, %s375
      %s378 = sphi 0, %s377
      %s392 = sphi 0, %s378
      %s398 = sphi 0, %s400
      %s401 = sphi 0, %s398
      %s402 = sphi 0, %s401
      %s418 = sphi 0, %s402
    $region4: #{encoder_forward.1} parent=1 // loop_header_branch
      %29 = sbr.rel (%p27) target = $region8
    $region5: #{encoder_forward.1} parent=1 // loop_body
      %s31 = ssub.s32 %s26, 1
      %s32 = ssub.s32 %s26, 2
      %s33 = sadd.s32 %s26, 1
      %s34 = ssub.s32 %s26, %s33
      %p35 = scmp.eq.s32.totalorder %s34, 0
      %s37 = sadd.s32 %s36, 1
      %s38 = scalar_select %p35, %s36, %s37
      %p41 = pneg %p35
      %p42 = scmp.eq.s32.totalorder %s26, 1
      %p43 = por %p41, %p42
      %p44 = scmp.ne.s32.totalorder %s36, %s39
      %p45 = scmp.eq.s32.totalorder %s26, 0
      %p46 = por %p44, %p45
      %p47 = scmp.ne.s32.totalorder %s36, %s39
      %p48 = scmp.eq.s32.totalorder %s31, 1
      %p49 = por %p47, %p48
      %p50 = scmp.ne.s32.totalorder %s39, %s40
      %p51 = scmp.eq.s32.totalorder %s31, 0
      %p52 = por %p50, %p51
      %p53 = scmp.ne.s32.totalorder %s39, %s40
      %p54 = scmp.eq.s32.totalorder %s32, 1
      %p55 = por %p53, %p54
      %p57 = scmp.ne.s32.totalorder %s40, %s56
      %p58 = scmp.eq.s32.totalorder %s32, 0
      %p59 = por %p57, %p58
      %s61 = sadd.s32 %s60, 1
      %p64 = scmp.eq.s32.totalorder %s26, 1
      %p65 = scmp.ne.s32.totalorder %s60, %s62
      %p66 = scmp.eq.s32.totalorder %s26, 0
      %p67 = por %p65, %p66
      %p68 = scmp.ne.s32.totalorder %s60, %s62
      %p69 = scmp.eq.s32.totalorder %s31, 1
      %p70 = por %p68, %p69
      %p71 = scmp.ne.s32.totalorder %s62, %s63
      %p72 = scmp.eq.s32.totalorder %s31, 0
      %p73 = por %p71, %p72
      %p74 = scmp.ne.s32.totalorder %s62, %s63
      %p75 = scmp.eq.s32.totalorder %s32, 1
      %p76 = por %p74, %p75
      %p78 = scmp.ne.s32.totalorder %s63, %s77
      %p79 = scmp.eq.s32.totalorder %s32, 0
      %p80 = por %p78, %p79
      %s82 = sadd.s32 %s81, 1
      %p85 = scmp.eq.s32.totalorder %s26, 1
      %p86 = scmp.ne.s32.totalorder %s81, %s83
      %p87 = scmp.eq.s32.totalorder %s26, 0
      %p88 = por %p86, %p87
      %p89 = scmp.ne.s32.totalorder %s81, %s83
      %p90 = scmp.eq.s32.totalorder %s31, 1
      %p91 = por %p89, %p90
      %p92 = scmp.ne.s32.totalorder %s83, %s84
      %p93 = scmp.eq.s32.totalorder %s31, 0
      %p94 = por %p92, %p93
      %p95 = scmp.ne.s32.totalorder %s83, %s84
      %p96 = scmp.eq.s32.totalorder %s32, 1
      %p97 = por %p95, %p96
      %p99 = scmp.ne.s32.totalorder %s84, %s98
      %p100 = scmp.eq.s32.totalorder %s32, 0
      %p101 = por %p99, %p100
      %s103 = sadd.s32 %s102, 1
      %p106 = scmp.eq.s32.totalorder %s26, 1
      %p107 = scmp.ne.s32.totalorder %s102, %s104
      %p108 = scmp.eq.s32.totalorder %s26, 0
      %p109 = por %p107, %p108
      %p110 = scmp.ne.s32.totalorder %s102, %s104
      %p111 = scmp.eq.s32.totalorder %s31, 1
      %p112 = por %p110, %p111
      %p113 = scmp.ne.s32.totalorder %s104, %s105
      %p114 = scmp.eq.s32.totalorder %s31, 0
      %p115 = por %p113, %p114
      %p116 = scmp.ne.s32.totalorder %s104, %s105
      %p117 = scmp.eq.s32.totalorder %s32, 1
      %p118 = por %p116, %p117
      %p120 = scmp.ne.s32.totalorder %s105, %s119
      %p121 = scmp.eq.s32.totalorder %s32, 0
      %p122 = por %p120, %p121
      %s124 = sadd.s32 %s123, 1
      %p127 = scmp.eq.s32.totalorder %s26, 1
      %p128 = scmp.ne.s32.totalorder %s123, %s125
      %p129 = scmp.eq.s32.totalorder %s26, 0
      %p130 = por %p128, %p129
      %p131 = scmp.ne.s32.totalorder %s123, %s125
      %p132 = scmp.eq.s32.totalorder %s31, 1
      %p133 = por %p131, %p132
      %p134 = scmp.ne.s32.totalorder %s125, %s126
      %p135 = scmp.eq.s32.totalorder %s31, 0
      %p136 = por %p134, %p135
      %p137 = scmp.ne.s32.totalorder %s125, %s126
      %p138 = scmp.eq.s32.totalorder %s32, 1
      %p139 = por %p137, %p138
      %p141 = scmp.ne.s32.totalorder %s126, %s140
      %p142 = scmp.eq.s32.totalorder %s32, 0
      %p143 = por %p141, %p142
      %s145 = sadd.s32 %s144, 1
      %p148 = scmp.eq.s32.totalorder %s26, 1
      %p149 = scmp.ne.s32.totalorder %s144, %s146
      %p150 = scmp.eq.s32.totalorder %s26, 0
      %p151 = por %p149, %p150
      %p152 = scmp.ne.s32.totalorder %s144, %s146
      %p153 = scmp.eq.s32.totalorder %s31, 1
      %p154 = por %p152, %p153
      %p155 = scmp.ne.s32.totalorder %s146, %s147
      %p156 = scmp.eq.s32.totalorder %s31, 0
      %p157 = por %p155, %p156
      %p158 = scmp.ne.s32.totalorder %s146, %s147
      %p159 = scmp.eq.s32.totalorder %s32, 1
      %p160 = por %p158, %p159
      %p162 = scmp.ne.s32.totalorder %s147, %s161
      %p163 = scmp.eq.s32.totalorder %s32, 0
      %p164 = por %p162, %p163
      %s166 = sadd.s32 %s165, 1
      %p169 = scmp.eq.s32.totalorder %s26, 1
      %p170 = scmp.ne.s32.totalorder %s165, %s167
      %p171 = scmp.eq.s32.totalorder %s26, 0
      %p172 = por %p170, %p171
      %p173 = scmp.ne.s32.totalorder %s165, %s167
      %p174 = scmp.eq.s32.totalorder %s31, 1
      %p175 = por %p173, %p174
      %p176 = scmp.ne.s32.totalorder %s167, %s168
      %p177 = scmp.eq.s32.totalorder %s31, 0
      %p178 = por %p176, %p177
      %p179 = scmp.ne.s32.totalorder %s167, %s168
      %p180 = scmp.eq.s32.totalorder %s32, 1
      %p181 = por %p179, %p180
      %p183 = scmp.ne.s32.totalorder %s168, %s182
      %p184 = scmp.eq.s32.totalorder %s32, 0
      %p185 = por %p183, %p184
      %s187 = sadd.s32 %s186, 1
      %p190 = scmp.eq.s32.totalorder %s26, 1
      %p191 = scmp.ne.s32.totalorder %s186, %s188
      %p192 = scmp.eq.s32.totalorder %s26, 0
      %p193 = por %p191, %p192
      %p194 = scmp.ne.s32.totalorder %s186, %s188
      %p195 = scmp.eq.s32.totalorder %s31, 1
      %p196 = por %p194, %p195
      %p197 = scmp.ne.s32.totalorder %s188, %s189
      %p198 = scmp.eq.s32.totalorder %s31, 0
      %p199 = por %p197, %p198
      %p200 = scmp.ne.s32.totalorder %s188, %s189
      %p201 = scmp.eq.s32.totalorder %s32, 1
      %p202 = por %p200, %p201
      %p204 = scmp.ne.s32.totalorder %s189, %s203
      %p205 = scmp.eq.s32.totalorder %s32, 0
      %p206 = por %p204, %p205
      %s208 = sadd.s32 %s207, 1
      %p211 = scmp.eq.s32.totalorder %s26, 1
      %p212 = scmp.ne.s32.totalorder %s207, %s209
      %p213 = scmp.eq.s32.totalorder %s26, 0
      %p214 = por %p212, %p213
      %p215 = scmp.ne.s32.totalorder %s207, %s209
      %p216 = scmp.eq.s32.totalorder %s31, 1
      %p217 = por %p215, %p216
      %p218 = scmp.ne.s32.totalorder %s209, %s210
      %p219 = scmp.eq.s32.totalorder %s31, 0
      %p220 = por %p218, %p219
      %p221 = scmp.ne.s32.totalorder %s209, %s210
      %p222 = scmp.eq.s32.totalorder %s32, 1
      %p223 = por %p221, %p222
      %p225 = scmp.ne.s32.totalorder %s210, %s224
      %p226 = scmp.eq.s32.totalorder %s32, 0
      %p227 = por %p225, %p226
      %s229 = sadd.s32 %s228, 1
      %p232 = scmp.eq.s32.totalorder %s26, 1
      %p233 = scmp.ne.s32.totalorder %s228, %s230
      %p234 = scmp.eq.s32.totalorder %s26, 0
      %p235 = por %p233, %p234
      %p236 = scmp.ne.s32.totalorder %s228, %s230
      %p237 = scmp.eq.s32.totalorder %s31, 1
      %p238 = por %p236, %p237
      %p239 = scmp.ne.s32.totalorder %s230, %s231
      %p240 = scmp.eq.s32.totalorder %s31, 0
      %p241 = por %p239, %p240
      %p242 = scmp.ne.s32.totalorder %s230, %s231
      %p243 = scmp.eq.s32.totalorder %s32, 1
      %p244 = por %p242, %p243
      %p246 = scmp.ne.s32.totalorder %s231, %s245
      %p247 = scmp.eq.s32.totalorder %s32, 0
      %p248 = por %p246, %p247
      %s250 = sadd.s32 %s249, 1
      %p253 = scmp.eq.s32.totalorder %s26, 1
      %p254 = scmp.ne.s32.totalorder %s249, %s251
      %p255 = scmp.eq.s32.totalorder %s26, 0
      %p256 = por %p254, %p255
      %p257 = scmp.ne.s32.totalorder %s249, %s251
      %p258 = scmp.eq.s32.totalorder %s31, 1
      %p259 = por %p257, %p258
      %p260 = scmp.ne.s32.totalorder %s251, %s252
      %p261 = scmp.eq.s32.totalorder %s31, 0
      %p262 = por %p260, %p261
      %p263 = scmp.ne.s32.totalorder %s251, %s252
      %p264 = scmp.eq.s32.totalorder %s32, 1
      %p265 = por %p263, %p264
      %p267 = scmp.ne.s32.totalorder %s252, %s266
      %p268 = scmp.eq.s32.totalorder %s32, 0
      %p269 = por %p267, %p268
      %s271 = sadd.s32 %s270, 1
      %p274 = scmp.eq.s32.totalorder %s26, 1
      %p275 = scmp.ne.s32.totalorder %s270, %s272
      %p276 = scmp.eq.s32.totalorder %s26, 0
      %p277 = por %p275, %p276
      %p278 = scmp.ne.s32.totalorder %s270, %s272
      %p279 = scmp.eq.s32.totalorder %s31, 1
      %p280 = por %p278, %p279
      %p281 = scmp.ne.s32.totalorder %s272, %s273
      %p282 = scmp.eq.s32.totalorder %s31, 0
      %p283 = por %p281, %p282
      %p284 = scmp.ne.s32.totalorder %s272, %s273
      %p285 = scmp.eq.s32.totalorder %s32, 1
      %p286 = por %p284, %p285
      %p288 = scmp.ne.s32.totalorder %s273, %s287
      %p289 = scmp.eq.s32.totalorder %s32, 0
      %p290 = por %p288, %p289
      %s292 = sadd.s32 %s291, 1
      %p295 = scmp.eq.s32.totalorder %s26, 1
      %p296 = scmp.ne.s32.totalorder %s291, %s293
      %p297 = scmp.eq.s32.totalorder %s26, 0
      %p298 = por %p296, %p297
      %p299 = scmp.ne.s32.totalorder %s291, %s293
      %p300 = scmp.eq.s32.totalorder %s31, 1
      %p301 = por %p299, %p300
      %p302 = scmp.ne.s32.totalorder %s293, %s294
      %p303 = scmp.eq.s32.totalorder %s31, 0
      %p304 = por %p302, %p303
      %p305 = scmp.ne.s32.totalorder %s293, %s294
      %p306 = scmp.eq.s32.totalorder %s32, 1
      %p307 = por %p305, %p306
      %p309 = scmp.ne.s32.totalorder %s294, %s308
      %p310 = scmp.eq.s32.totalorder %s32, 0
      %p311 = por %p309, %p310
      %s313 = sadd.s32 %s312, 1
      %p316 = scmp.eq.s32.totalorder %s26, 1
      %p317 = scmp.ne.s32.totalorder %s312, %s314
      %p318 = scmp.eq.s32.totalorder %s26, 0
      %p319 = por %p317, %p318
      %p320 = scmp.ne.s32.totalorder %s312, %s314
      %p321 = scmp.eq.s32.totalorder %s31, 1
      %p322 = por %p320, %p321
      %p323 = scmp.ne.s32.totalorder %s314, %s315
      %p324 = scmp.eq.s32.totalorder %s31, 0
      %p325 = por %p323, %p324
      %p326 = scmp.ne.s32.totalorder %s314, %s315
      %p327 = scmp.eq.s32.totalorder %s32, 1
      %p328 = por %p326, %p327
      %p330 = scmp.ne.s32.totalorder %s315, %s329
      %p331 = scmp.eq.s32.totalorder %s32, 0
      %p332 = por %p330, %p331
      %s334 = sadd.s32 %s333, 1
      %p337 = scmp.eq.s32.totalorder %s26, 1
      %p338 = scmp.ne.s32.totalorder %s333, %s335
      %p339 = scmp.eq.s32.totalorder %s26, 0
      %p340 = por %p338, %p339
      %p341 = scmp.ne.s32.totalorder %s333, %s335
      %p342 = scmp.eq.s32.totalorder %s31, 1
      %p343 = por %p341, %p342
      %p344 = scmp.ne.s32.totalorder %s335, %s336
      %p345 = scmp.eq.s32.totalorder %s31, 0
      %p346 = por %p344, %p345
      %p347 = scmp.ne.s32.totalorder %s335, %s336
      %p348 = scmp.eq.s32.totalorder %s32, 1
      %p349 = por %p347, %p348
      %p351 = scmp.ne.s32.totalorder %s336, %s350
      %p352 = scmp.eq.s32.totalorder %s32, 0
      %p353 = por %p351, %p352
      %s355 = sadd.s32 %s354, 1
      %p358 = scmp.eq.s32.totalorder %s26, 1
      %p359 = scmp.ne.s32.totalorder %s354, %s356
      %p360 = scmp.eq.s32.totalorder %s26, 0
      %p361 = por %p359, %p360
      %p362 = scmp.ne.s32.totalorder %s354, %s356
      %p363 = scmp.eq.s32.totalorder %s31, 1
      %p364 = por %p362, %p363
      %p365 = scmp.ne.s32.totalorder %s356, %s357
      %p366 = scmp.eq.s32.totalorder %s31, 0
      %p367 = por %p365, %p366
      %p368 = scmp.ne.s32.totalorder %s356, %s357
      %p369 = scmp.eq.s32.totalorder %s32, 1
      %p370 = por %p368, %p369
      %p372 = scmp.ne.s32.totalorder %s357, %s371
      %p373 = scmp.eq.s32.totalorder %s32, 0
      %p374 = por %p372, %p373
      %s376 = sadd.s32 %s375, 1
      %p379 = scmp.eq.s32.totalorder %s26, 1
      %p380 = scmp.ne.s32.totalorder %s375, %s377
      %p381 = scmp.eq.s32.totalorder %s26, 0
      %p382 = por %p380, %p381
      %p383 = scmp.ne.s32.totalorder %s375, %s377
      %p384 = scmp.eq.s32.totalorder %s31, 1
      %p385 = por %p383, %p384
      %p386 = scmp.ne.s32.totalorder %s377, %s378
      %p387 = scmp.eq.s32.totalorder %s31, 0
      %p388 = por %p386, %p387
      %p389 = scmp.ne.s32.totalorder %s377, %s378
      %p390 = scmp.eq.s32.totalorder %s32, 1
      %p391 = por %p389, %p390
      %p393 = scmp.ne.s32.totalorder %s378, %s392
      %p394 = scmp.eq.s32.totalorder %s32, 0
      %p395 = por %p393, %p394
      %s396 = ssub.s32 %s26, %s33
      %p397 = scmp.eq.s32.totalorder %s396, 0
      %s399 = sadd.s32 %s398, 1
      %s400 = scalar_select %p397, %s398, %s399
      %p403 = pneg %p397
      %p404 = scmp.eq.s32.totalorder %s26, 1
      %p405 = por %p403, %p404
      %p406 = scmp.ne.s32.totalorder %s398, %s401
      %p407 = scmp.eq.s32.totalorder %s26, 0
      %p408 = por %p406, %p407
      %p409 = scmp.ne.s32.totalorder %s398, %s401
      %p410 = scmp.eq.s32.totalorder %s31, 1
      %p411 = por %p409, %p410
      %p412 = scmp.ne.s32.totalorder %s401, %s402
      %p413 = scmp.eq.s32.totalorder %s31, 0
      %p414 = por %p412, %p413
      %p415 = scmp.ne.s32.totalorder %s401, %s402
      %p416 = scmp.eq.s32.totalorder %s32, 1
      %p417 = por %p415, %p416
      %p419 = scmp.ne.s32.totalorder %s402, %s418
      %p420 = scmp.eq.s32.totalorder %s32, 0
      %p421 = por %p419, %p420
      %p422 = scmp.le.s32.totalorder 1, %s26
      %p423 = scmp.lt.s32.totalorder %s26, 3
      %p424 = pnand %p422, %p423
      %p425 = pneg %p424
      // Predicated region
      $region9: #{encoder_forward.1} parent=5 // pred_check
        _
      $region10: #{encoder_forward.1} parent=5 // pred_check_branch
        %427 = sbr.rel (%p424) target = $region12
      $region11: #{encoder_forward.1} parent=5 // pred_region
        %s428 = ssub.s32 %s26, 1
        // Predicated region
        $region13: #{encoder_forward.1} parent=11 // pred_check
          %p429 = pneg %p73
        $region14: #{encoder_forward.1} parent=11 // pred_check_branch
          %431 = sbr.rel (%p429) target = $region16
        $region15: #{encoder_forward.1} parent=11 // pred_region
          _
        $region16: #{encoder_forward.1} parent=11 // pred_fallthru
          _
        // Predicated region
        $region17: #{encoder_forward.1} parent=11 // pred_check
          %p432 = pneg %p94
        $region18: #{encoder_forward.1} parent=11 // pred_check_branch
          %434 = sbr.rel (%p432) target = $region20
        $region19: #{encoder_forward.1} parent=11 // pred_region
          _
        $region20: #{encoder_forward.1} parent=11 // pred_fallthru
          _
        // Predicated region
        $region21: #{encoder_forward.1} parent=11 // pred_check
          %p435 = pneg %p115
        $region22: #{encoder_forward.1} parent=11 // pred_check_branch
          %437 = sbr.rel (%p435) target = $region24
        $region23: #{encoder_forward.1} parent=11 // pred_region
          _
        $region24: #{encoder_forward.1} parent=11 // pred_fallthru
          _
        // Predicated region
        $region25: #{encoder_forward.1} parent=11 // pred_check
          %p438 = pneg %p136
        $region26: #{encoder_forward.1} parent=11 // pred_check_branch
          %440 = sbr.rel (%p438) target = $region28
        $region27: #{encoder_forward.1} parent=11 // pred_region
          _
        $region28: #{encoder_forward.1} parent=11 // pred_fallthru
          _
        // Predicated region
        $region29: #{encoder_forward.1} parent=11 // pred_check
          %p441 = pneg %p157
        $region30: #{encoder_forward.1} parent=11 // pred_check_branch
          %443 = sbr.rel (%p441) target = $region32
        $region31: #{encoder_forward.1} parent=11 // pred_region
          _
        $region32: #{encoder_forward.1} parent=11 // pred_fallthru
          _
        // Predicated region
        $region33: #{encoder_forward.1} parent=11 // pred_check
          %p444 = pneg %p178
        $region34: #{encoder_forward.1} parent=11 // pred_check_branch
          %446 = sbr.rel (%p444) target = $region36
        $region35: #{encoder_forward.1} parent=11 // pred_region
          _
        $region36: #{encoder_forward.1} parent=11 // pred_fallthru
          _
        // Predicated region
        $region37: #{encoder_forward.1} parent=11 // pred_check
          %p447 = pneg %p199
        $region38: #{encoder_forward.1} parent=11 // pred_check_branch
          %449 = sbr.rel (%p447) target = $region40
        $region39: #{encoder_forward.1} parent=11 // pred_region
          _
        $region40: #{encoder_forward.1} parent=11 // pred_fallthru
          _
        // Predicated region
        $region41: #{encoder_forward.1} parent=11 // pred_check
          %p450 = pneg %p220
        $region42: #{encoder_forward.1} parent=11 // pred_check_branch
          %452 = sbr.rel (%p450) target = $region44
        $region43: #{encoder_forward.1} parent=11 // pred_region
          _
        $region44: #{encoder_forward.1} parent=11 // pred_fallthru
          _
        // Predicated region
        $region45: #{encoder_forward.1} parent=11 // pred_check
          %p453 = pneg %p241
        $region46: #{encoder_forward.1} parent=11 // pred_check_branch
          %455 = sbr.rel (%p453) target = $region48
        $region47: #{encoder_forward.1} parent=11 // pred_region
          _
        $region48: #{encoder_forward.1} parent=11 // pred_fallthru
          _
        // Predicated region
        $region49: #{encoder_forward.1} parent=11 // pred_check
          %p456 = pneg %p262
        $region50: #{encoder_forward.1} parent=11 // pred_check_branch
          %458 = sbr.rel (%p456) target = $region52
        $region51: #{encoder_forward.1} parent=11 // pred_region
          _
        $region52: #{encoder_forward.1} parent=11 // pred_fallthru
          _
        // Predicated region
        $region53: #{encoder_forward.1} parent=11 // pred_check
          %p459 = pneg %p283
        $region54: #{encoder_forward.1} parent=11 // pred_check_branch
          %461 = sbr.rel (%p459) target = $region56
        $region55: #{encoder_forward.1} parent=11 // pred_region
          _
        $region56: #{encoder_forward.1} parent=11 // pred_fallthru
          _
        // Predicated region
        $region57: #{encoder_forward.1} parent=11 // pred_check
          %p462 = pneg %p304
        $region58: #{encoder_forward.1} parent=11 // pred_check_branch
          %464 = sbr.rel (%p462) target = $region60
        $region59: #{encoder_forward.1} parent=11 // pred_region
          _
        $region60: #{encoder_forward.1} parent=11 // pred_fallthru
          _
        // Predicated region
        $region61: #{encoder_forward.1} parent=11 // pred_check
          %p465 = pneg %p325
        $region62: #{encoder_forward.1} parent=11 // pred_check_branch
          %467 = sbr.rel (%p465) target = $region64
        $region63: #{encoder_forward.1} parent=11 // pred_region
          _
        $region64: #{encoder_forward.1} parent=11 // pred_fallthru
          _
        // Predicated region
        $region65: #{encoder_forward.1} parent=11 // pred_check
          %p468 = pneg %p346
        $region66: #{encoder_forward.1} parent=11 // pred_check_branch
          %470 = sbr.rel (%p468) target = $region68
        $region67: #{encoder_forward.1} parent=11 // pred_region
          _
        $region68: #{encoder_forward.1} parent=11 // pred_fallthru
          _
        // Predicated region
        $region69: #{encoder_forward.1} parent=11 // pred_check
          %p471 = pneg %p367
        $region70: #{encoder_forward.1} parent=11 // pred_check_branch
          %473 = sbr.rel (%p471) target = $region72
        $region71: #{encoder_forward.1} parent=11 // pred_region
          _
        $region72: #{encoder_forward.1} parent=11 // pred_fallthru
          _
        // Predicated region
        $region73: #{encoder_forward.1} parent=11 // pred_check
          %p474 = pneg %p388
        $region74: #{encoder_forward.1} parent=11 // pred_check_branch
          %476 = sbr.rel (%p474) target = $region76
        $region75: #{encoder_forward.1} parent=11 // pred_region
          _
        $region76: #{encoder_forward.1} parent=11 // pred_fallthru
          _
      $region12: #{encoder_forward.1} parent=5 // pred_fallthru
        _
      %p477 = scmp.lt.s32.totalorder %s26, 2
      // Predicated region
      $region77: #{encoder_forward.1} parent=5 // pred_check
        %p478 = pneg %p477
      $region78: #{encoder_forward.1} parent=5 // pred_check_branch
        %480 = sbr.rel (%p478) target = $region80
      $region79: #{encoder_forward.1} parent=5 // pred_region
        // Predicated region
        $region81: #{encoder_forward.1} parent=79 // pred_check
          %p481 = pneg %p46
        $region82: #{encoder_forward.1} parent=79 // pred_check_branch
          %483 = sbr.rel (%p481) target = $region84
        $region83: #{encoder_forward.1} parent=79 // pred_region
          %p484 = scmp.lt.s32.totalorder %s26, 1
          %s485 = scalar_select %p484, %s26, 1
          %s486 = smul.addr %s485, 8
          %s487 = scalar_lea.vmem %s0, %s486
        $region84: #{encoder_forward.1} parent=79 // pred_fallthru
          _
      $region80: #{encoder_forward.1} parent=5 // pred_fallthru
        _
      %p488 = scmp.le.s32.totalorder 1, %s26
      %p489 = scmp.lt.s32.totalorder %s26, 3
      %p490 = pnand %p488, %p489
      %p491 = pneg %p490
      // Predicated region
      $region85: #{encoder_forward.1} parent=5 // pred_check
        _
      $region86: #{encoder_forward.1} parent=5 // pred_check_branch
        %493 = sbr.rel (%p490) target = $region88
      $region87: #{encoder_forward.1} parent=5 // pred_region
        %s494 = ssub.s32 %s26, 1
        %p495 = scmp.lt.s32.totalorder %s31, 1
        %s496 = scalar_select %p495, %s31, 1
        %s497 = smul.addr %s496, 8
        %s498 = scalar_lea.vmem %s0, %s497
        %p499 = pneg %p52
        %p500 = pneg %p49
        %p501 = pneg %p73
        %p502 = pneg %p70
        %p503 = pneg %p94
        %p504 = pneg %p91
        %p505 = pneg %p115
        %p506 = pneg %p112
        %p507 = pneg %p136
        %p508 = pneg %p133
        %p509 = pneg %p157
        %p510 = pneg %p154
        %p511 = pneg %p178
        %p512 = pneg %p175
        %p513 = pneg %p199
        %p514 = pneg %p196
        %p515 = pneg %p220
        %p516 = pneg %p217
        %p517 = pneg %p241
        %p518 = pneg %p238
        %p519 = pneg %p262
        %p520 = pneg %p259
        %p521 = pneg %p283
        %p522 = pneg %p280
        %p523 = pneg %p304
        %p524 = pneg %p301
        %p525 = pneg %p325
        %p526 = pneg %p322
        %p527 = pneg %p346
        %p528 = pneg %p343
        %p529 = pneg %p367
        %p530 = pneg %p364
        %p531 = pneg %p388
        %p532 = pneg %p385
        %p533 = pneg %p414
        %p534 = pneg %p411
        %s535 = sand.u32 %s401, 1
        %s536 = scalar_lea.sflag [#allocation4], %s535
        %s537 = sand.u32 %s401, 1
        %s538 = smul.addr %s537, 8
        %s539 = scalar_lea.vmem [#allocation3], %s538
        %p540 = scmp.lt.s32.totalorder %s31, 1
        %s541 = scalar_select %p540, %s31, 1
        %s542 = smul.addr %s541, 8
        %s543 = scalar_lea.vmem %s0, %s542
        %v544 = vld [vmem:[%s543] sm:$0xff]
        %v545 = vld [vmem:[%s1] sm:$0xff]
        %v546 = vld [vmem:[%s1 + $0x8] sm:$0xff]
        %v547 = vld [vmem:[%s2] sm:$0x1]
        %v549 = vlaneseq
        %v550 = vshrl.u32 %v549, 7
        %v551 = vsub.s32 0, %v550
        %v552 = vrot.slane %v547, %v551
        %vm554 = vcmask 130048
        %v556 = vsel %vm554, %v544, 0
        %558 = vmatprep.subr.mxu0 0.0
        %559 = vmatpush1.msra.mxu0 0.0
        %560 = vmatprep.subr.mxu0 0.0
        %561 = vmatpush1.msra.mxu0 0.0
        %562 = vmatprep.subr.mxu0 0.0
        %563 = vmatpush1.msra.mxu0 0.0
        %564 = vmatprep.subr.mxu0 0.0
        %565 = vmatpush1.msra.mxu0 0.0
        %566 = vmatprep.subr.mxu0 0.0
        %567 = vmatpush1.msra.mxu0 0.0
        %568 = vmatprep.subr.mxu0 0.0
        %569 = vmatpush1.msra.mxu0 0.0
        %570 = vmatprep.subr.mxu0 0.0
        %571 = vmatpush1.msra.mxu0 0.0
        %572 = vmatprep.subr.mxu0 0.0
        %573 = vmatpush1.msra.mxu0 0.0
        %574 = vmatprep.subr.mxu0 0.0
        %575 = vmatpush1.msra.mxu0 0.0
        %576 = vmatprep.subr.mxu0 0.0
        %577 = vmatpush1.msra.mxu0 0.0
        %578 = vmatprep.subr.mxu0 0.0
        %579 = vmatpush1.msra.mxu0 0.0
        %580 = vmatprep.subr.mxu0 0.0
        %581 = vmatpush1.msra.mxu0 0.0
        %582 = vmatprep.subr.mxu0 0.0
        %583 = vmatpush1.msra.mxu0 0.0
        %584 = vmatprep.subr.mxu0 0.0
        %585 = vmatpush1.msra.mxu0 0.0
        %586 = vmatprep.subr.mxu0 0.0
        %587 = vmatpush1.msra.mxu0 %v546
        %588 = vmatprep.subr.mxu0 0.0
        %589 = vmatpush1.msra.mxu0 %v545
        %590 = vmatprep.subr.mxu0 0.0
        %591 = vmatpush2.msra.mxu0 0.0
        %592 = vmatprep.subr.mxu0 0.0
        %593 = vmatpush2.msra.mxu0 0.0
        %594 = vmatprep.subr.mxu0 0.0
        %595 = vmatpush2.msra.mxu0 0.0
        %596 = vmatprep.subr.mxu0 0.0
        %597 = vmatpush2.msra.mxu0 0.0
        %598 = vmatprep.subr.mxu0 0.0
        %599 = vmatpush2.msra.mxu0 0.0
        %600 = vmatprep.subr.mxu0 0.0
        %601 = vmatpush2.msra.mxu0 0.0
        %602 = vmatprep.subr.mxu0 0.0
        %603 = vmatpush2.msra.mxu0 0.0
        %604 = vmatprep.subr.mxu0 0.0
        %605 = vmatpush2.msra.mxu0 0.0
        %606 = vmatprep.subr.mxu0 0.0
        %607 = vmatpush2.msra.mxu0 0.0
        %608 = vmatprep.subr.mxu0 0.0
        %609 = vmatpush2.msra.mxu0 0.0
        %610 = vmatprep.subr.mxu0 0.0
        %611 = vmatpush2.msra.mxu0 0.0
        %612 = vmatprep.subr.mxu0 0.0
        %613 = vmatpush2.msra.mxu0 0.0
        %614 = vmatprep.subr.mxu0 0.0
        %615 = vmatpush2.msra.mxu0 0.0
        %616 = vmatprep.subr.mxu0 0.0
        %617 = vmatpush2.msra.mxu0 0.0
        %618 = vmatprep.subr.mxu0 0.0
        %619 = vmatpush2.msra.mxu0 0.0
        %620 = vmatprep.subr.mxu0 0.0
        %621 = vmatpush2.msra.mxu0 0.0
        %622 = vmatprep.mubr.f32.mxu0 0.0
        %623 = vmatmul.mubr.f32.gmra.mxu0 %v556
        %v624 = vpop.f32.mrf.mxu0
        %v625 = vadd.f32 %v552, %v624
        %v626 = vpop.f32.mrf.mxu0
        %627 = vdwg.mxu0
        %vm628 = vcmp.ge.f32.partialorder %v625, 0.0
        %v629 = vmul.f32 %v625, 0.01
        %v630 = vsel %vm628, %v625, %v629
        %v631 = vld [vmem:[%s3] sm:$0xff]
        %v632 = vld [vmem:[%s3 + $0x8] sm:$0xff]
        %v633 = vld [vmem:[%s3 + $0x10] sm:$0xff]
        %v634 = vld [vmem:[%s3 + $0x18] sm:$0xff]
        %v635 = vld [vmem:[%s4] sm:$0x1]
        %v637 = vlaneseq
        %v638 = vshrl.u32 %v637, 7
        %v639 = vsub.s32 0, %v638
        %v640 = vrot.slane %v635, %v639
        %vm642 = vcmask 261120
        %v644 = vsel %vm642, %v630, 0
        %646 = vmatprep.subr.mxu0 0.0
        %647 = vmatpush1.msra.mxu0 0.0
        %648 = vmatprep.subr.mxu0 0.0
        %649 = vmatpush1.msra.mxu0 0.0
        %650 = vmatprep.subr.mxu0 0.0
        %651 = vmatpush1.msra.mxu0 0.0
        %652 = vmatprep.subr.mxu0 0.0
        %653 = vmatpush1.msra.mxu0 0.0
        %654 = vmatprep.subr.mxu0 0.0
        %655 = vmatpush1.msra.mxu0 0.0
        %656 = vmatprep.subr.mxu0 0.0
        %657 = vmatpush1.msra.mxu0 0.0
        %658 = vmatprep.subr.mxu0 0.0
        %659 = vmatpush1.msra.mxu0 0.0
        %660 = vmatprep.subr.mxu0 0.0
        %661 = vmatpush1.msra.mxu0 0.0
        %662 = vmatprep.subr.mxu0 0.0
        %663 = vmatpush1.msra.mxu0 0.0
        %664 = vmatprep.subr.mxu0 0.0
        %665 = vmatpush1.msra.mxu0 0.0
        %666 = vmatprep.subr.mxu0 0.0
        %667 = vmatpush1.msra.mxu0 0.0
        %668 = vmatprep.subr.mxu0 0.0
        %669 = vmatpush1.msra.mxu0 0.0
        %670 = vmatprep.subr.mxu0 0.0
        %671 = vmatpush1.msra.mxu0 %v634
        %672 = vmatprep.subr.mxu0 0.0
        %673 = vmatpush1.msra.mxu0 %v633
        %674 = vmatprep.subr.mxu0 0.0
        %675 = vmatpush1.msra.mxu0 %v632
        %676 = vmatprep.subr.mxu0 0.0
        %677 = vmatpush1.msra.mxu0 %v631
        %678 = vmatprep.subr.mxu0 0.0
        %679 = vmatpush2.msra.mxu0 0.0
        %680 = vmatprep.subr.mxu0 0.0
        %681 = vmatpush2.msra.mxu0 0.0
        %682 = vmatprep.subr.mxu0 0.0
        %683 = vmatpush2.msra.mxu0 0.0
        %684 = vmatprep.subr.mxu0 0.0
        %685 = vmatpush2.msra.mxu0 0.0
        %686 = vmatprep.subr.mxu0 0.0
        %687 = vmatpush2.msra.mxu0 0.0
        %688 = vmatprep.subr.mxu0 0.0
        %689 = vmatpush2.msra.mxu0 0.0
        %690 = vmatprep.subr.mxu0 0.0
        %691 = vmatpush2.msra.mxu0 0.0
        %692 = vmatprep.subr.mxu0 0.0
        %693 = vmatpush2.msra.mxu0 0.0
        %694 = vmatprep.subr.mxu0 0.0
        %695 = vmatpush2.msra.mxu0 0.0
        %696 = vmatprep.subr.mxu0 0.0
        %697 = vmatpush2.msra.mxu0 0.0
        %698 = vmatprep.subr.mxu0 0.0
        %699 = vmatpush2.msra.mxu0 0.0
        %700 = vmatprep.subr.mxu0 0.0
        %701 = vmatpush2.msra.mxu0 0.0
        %702 = vmatprep.subr.mxu0 0.0
        %703 = vmatpush2.msra.mxu0 0.0
        %704 = vmatprep.subr.mxu0 0.0
        %705 = vmatpush2.msra.mxu0 0.0
        %706 = vmatprep.subr.mxu0 0.0
        %707 = vmatpush2.msra.mxu0 0.0
        %708 = vmatprep.subr.mxu0 0.0
        %709 = vmatpush2.msra.mxu0 0.0
        %710 = vmatprep.mubr.f32.mxu0 0.0
        %711 = vmatmul.mubr.f32.gmra.mxu0 %v644
        %v712 = vpop.f32.mrf.mxu0
        %v713 = vadd.f32 %v640, %v712
        %v714 = vpop.f32.mrf.mxu0
        %715 = vdwg.mxu0
        %vm716 = vcmp.ge.f32.partialorder %v713, 0.0
        %v717 = vmul.f32 %v713, 0.01
        %v718 = vsel %vm716, %v713, %v717
        %v719 = vld [vmem:[%s5] sm:$0x1]
        %v720 = vld [vmem:[%s6] sm:$0x1]
        %v721 = vsel %vm642, %v718, 0.0
        %722 = vadd.xlane.f32.xlu0 %v721
        %v723 = vpop.xlane.xlu0 %722
        %v724 = vrcp.pop 32.0
        %v725 = vmul.f32 %v723, %v724
        %v726 = vsub.f32 %v718, %v725
        %v727 = vmul.f32 %v726, %v726
        %v728 = vsel %vm642, %v727, 0.0
        %729 = vadd.xlane.f32.xlu0 %v728
        %v730 = vpop.xlane.xlu0 %729
        %v731 = vmul.f32 %v730, %v724
        %v732 = vadd.f32 %v731, 1e-05
        %v733 = vrsqrt.pop %v732
        %v734 = vmul.f32 %v726, %v733
        %v736 = vlaneseq
        %v737 = vshrl.u32 %v736, 7
        %v738 = vsub.s32 0, %v737
        %v739 = vrot.slane %v719, %v738
        %v741 = vmul.f32 %v734, %v739
        %v743 = vlaneseq
        %v744 = vshrl.u32 %v743, 7
        %v745 = vsub.s32 0, %v744
        %v746 = vrot.slane %v720, %v745
        %v748 = vadd.f32 %v741, %v746
        %v749 = vld [vmem:[%s7] sm:$0xff]
        %v750 = vld [vmem:[%s7 + $0x8] sm:$0xff]
        %v751 = vld [vmem:[%s7 + $0x10] sm:$0xff]
        %v752 = vld [vmem:[%s7 + $0x18] sm:$0xff]
        %v753 = vld [vmem:[%s8] sm:$0x1]
        %v755 = vlaneseq
        %v756 = vshrl.u32 %v755, 7
        %v757 = vsub.s32 0, %v756
        %v758 = vrot.slane %v753, %v757
        %v761 = vsel %vm642, %v748, 0
        %763 = vmatprep.subr.mxu0 0.0
        %764 = vmatpush1.msra.mxu0 0.0
        %765 = vmatprep.subr.mxu0 0.0
        %766 = vmatpush1.msra.mxu0 0.0
        %767 = vmatprep.subr.mxu0 0.0
        %768 = vmatpush1.msra.mxu0 0.0
        %769 = vmatprep.subr.mxu0 0.0
        %770 = vmatpush1.msra.mxu0 0.0
        %771 = vmatprep.subr.mxu0 0.0
        %772 = vmatpush1.msra.mxu0 0.0
        %773 = vmatprep.subr.mxu0 0.0
        %774 = vmatpush1.msra.mxu0 0.0
        %775 = vmatprep.subr.mxu0 0.0
        %776 = vmatpush1.msra.mxu0 0.0
        %777 = vmatprep.subr.mxu0 0.0
        %778 = vmatpush1.msra.mxu0 0.0
        %779 = vmatprep.subr.mxu0 0.0
        %780 = vmatpush1.msra.mxu0 0.0
        %781 = vmatprep.subr.mxu0 0.0
        %782 = vmatpush1.msra.mxu0 0.0
        %783 = vmatprep.subr.mxu0 0.0
        %784 = vmatpush1.msra.mxu0 0.0
        %785 = vmatprep.subr.mxu0 0.0
        %786 = vmatpush1.msra.mxu0 0.0
        %787 = vmatprep.subr.mxu0 0.0
        %788 = vmatpush1.msra.mxu0 %v752
        %789 = vmatprep.subr.mxu0 0.0
        %790 = vmatpush1.msra.mxu0 %v751
        %791 = vmatprep.subr.mxu0 0.0
        %792 = vmatpush1.msra.mxu0 %v750
        %793 = vmatprep.subr.mxu0 0.0
        %794 = vmatpush1.msra.mxu0 %v749
        %795 = vmatprep.subr.mxu0 0.0
        %796 = vmatpush2.msra.mxu0 0.0
        %797 = vmatprep.subr.mxu0 0.0
        %798 = vmatpush2.msra.mxu0 0.0
        %799 = vmatprep.subr.mxu0 0.0
        %800 = vmatpush2.msra.mxu0 0.0
        %801 = vmatprep.subr.mxu0 0.0
        %802 = vmatpush2.msra.mxu0 0.0
        %803 = vmatprep.subr.mxu0 0.0
        %804 = vmatpush2.msra.mxu0 0.0
        %805 = vmatprep.subr.mxu0 0.0
        %806 = vmatpush2.msra.mxu0 0.0
        %807 = vmatprep.subr.mxu0 0.0
        %808 = vmatpush2.msra.mxu0 0.0
        %809 = vmatprep.subr.mxu0 0.0
        %810 = vmatpush2.msra.mxu0 0.0
        %811 = vmatprep.subr.mxu0 0.0
        %812 = vmatpush2.msra.mxu0 0.0
        %813 = vmatprep.subr.mxu0 0.0
        %814 = vmatpush2.msra.mxu0 0.0
        %815 = vmatprep.subr.mxu0 0.0
        %816 = vmatpush2.msra.mxu0 0.0
        %817 = vmatprep.subr.mxu0 0.0
        %818 = vmatpush2.msra.mxu0 0.0
        %819 = vmatprep.subr.mxu0 0.0
        %820 = vmatpush2.msra.mxu0 0.0
        %821 = vmatprep.subr.mxu0 0.0
        %822 = vmatpush2.msra.mxu0 0.0
        %823 = vmatprep.subr.mxu0 0.0
        %824 = vmatpush2.msra.mxu0 0.0
        %825 = vmatprep.subr.mxu0 0.0
        %826 = vmatpush2.msra.mxu0 0.0
        %827 = vmatprep.mubr.f32.mxu0 0.0
        %828 = vmatmul.mubr.f32.gmra.mxu0 %v761
        %v829 = vpop.f32.mrf.mxu0
        %v830 = vadd.f32 %v758, %v829
        %v831 = vpop.f32.mrf.mxu0
        %832 = vdwg.mxu0
        %834 = vrot.lane.b32.xlu0 %v830, 96
        %v835 = vpop.permute.xlu0 %834
        %vm836 = vcmask 64512
        %v837 = vsel %vm836, %v830, 0
        %v839 = vsel %vm836, %v835, 0
        %841 = vmatprep.subr.mxu0 0.0
        %842 = vmatpush1.xpose.msra.mxu0 0.0
        %843 = vmatprep.subr.mxu0 0.0
        %844 = vmatpush1.xpose.msra.mxu0 0.0
        %845 = vmatprep.subr.mxu0 0.0
        %846 = vmatpush1.xpose.msra.mxu0 0.0
        %847 = vmatprep.subr.mxu0 0.0
        %848 = vmatpush1.xpose.msra.mxu0 0.0
        %849 = vmatprep.subr.mxu0 0.0
        %850 = vmatpush1.xpose.msra.mxu0 0.0
        %851 = vmatprep.subr.mxu0 0.0
        %852 = vmatpush1.xpose.msra.mxu0 0.0
        %853 = vmatprep.subr.mxu0 0.0
        %854 = vmatpush1.xpose.msra.mxu0 0.0
        %855 = vmatprep.subr.mxu0 0.0
        %856 = vmatpush1.xpose.msra.mxu0 0.0
        %857 = vmatprep.subr.mxu0 0.0
        %858 = vmatpush1.xpose.msra.mxu0 0.0
        %859 = vmatprep.subr.mxu0 0.0
        %860 = vmatpush1.xpose.msra.mxu0 0.0
        %861 = vmatprep.subr.mxu0 0.0
        %862 = vmatpush1.xpose.msra.mxu0 0.0
        %863 = vmatprep.subr.mxu0 0.0
        %864 = vmatpush1.xpose.msra.mxu0 0.0
        %865 = vmatprep.subr.mxu0 0.0
        %866 = vmatpush1.xpose.msra.mxu0 0.0
        %867 = vmatprep.subr.mxu0 0.0
        %868 = vmatpush1.xpose.msra.mxu0 0.0
        %869 = vmatprep.subr.mxu0 0.0
        %870 = vmatpush1.xpose.msra.mxu0 0.0
        %871 = vmatprep.subr.mxu0 0.0
        %872 = vmatpush1.xpose.msra.mxu0 %v839
        %873 = vmatprep.subr.mxu0 0.0
        %874 = vmatpush2.xpose.msra.mxu0 0.0
        %875 = vmatprep.subr.mxu0 0.0
        %876 = vmatpush2.xpose.msra.mxu0 0.0
        %877 = vmatprep.subr.mxu0 0.0
        %878 = vmatpush2.xpose.msra.mxu0 0.0
        %879 = vmatprep.subr.mxu0 0.0
        %880 = vmatpush2.xpose.msra.mxu0 0.0
        %881 = vmatprep.subr.mxu0 0.0
        %882 = vmatpush2.xpose.msra.mxu0 0.0
        %883 = vmatprep.subr.mxu0 0.0
        %884 = vmatpush2.xpose.msra.mxu0 0.0
        %885 = vmatprep.subr.mxu0 0.0
        %886 = vmatpush2.xpose.msra.mxu0 0.0
        %887 = vmatprep.subr.mxu0 0.0
        %888 = vmatpush2.xpose.msra.mxu0 0.0
        %889 = vmatprep.subr.mxu0 0.0
        %890 = vmatpush2.xpose.msra.mxu0 0.0
        %891 = vmatprep.subr.mxu0 0.0
        %892 = vmatpush2.xpose.msra.mxu0 0.0
        %893 = vmatprep.subr.mxu0 0.0
        %894 = vmatpush2.xpose.msra.mxu0 0.0
        %895 = vmatprep.subr.mxu0 0.0
        %896 = vmatpush2.xpose.msra.mxu0 0.0
        %897 = vmatprep.subr.mxu0 0.0
        %898 = vmatpush2.xpose.msra.mxu0 0.0
        %899 = vmatprep.subr.mxu0 0.0
        %900 = vmatpush2.xpose.msra.mxu0 0.0
        %901 = vmatprep.subr.mxu0 0.0
        %902 = vmatpush2.xpose.msra.mxu0 0.0
        %903 = vmatprep.subr.mxu0 0.0
        %904 = vmatpush2.xpose.msra.mxu0 0.0
        %905 = vmatprep.mubr.f32.mxu0 0.0
        %906 = vmatmul.mubr.f32.gmra.mxu0 %v837
        %v907 = vpop.f32.mrf.mxu0
        %v908 = vadd.f32 0.0, %v907
        %v909 = vpop.f32.mrf.mxu0
        %910 = vdwg.mxu0
        %v911 = vmul.f32 %v908, 0.35355338
        %v912 = vsel %vm836, %v911, -inf
        %913 = vmax.xlane.f32.xlu0 %v912
        %v914 = vpop.xlane.xlu0 %913
        %v915 = vsub.f32 %v911, %v914
        %v916 = vmul.f32 %v915, 1.442695
        %v917 = vpow.pop %v916
        %v918 = vsel %vm836, %v917, 0.0
        %919 = vadd.xlane.f32.xlu0 %v918
        %v920 = vpop.xlane.xlu0 %919
        %921 = vrot.lane.b32.xlu0 %v830, 64
        %v922 = vpop.permute.xlu0 %921
        %v925 = vsel %vm836, %v917, 0
        %927 = vmatprep.subr.mxu0 0.0
        %928 = vmatpush1.msra.mxu0 0.0
        %929 = vmatprep.subr.mxu0 0.0
        %930 = vmatpush1.msra.mxu0 0.0
        %931 = vmatprep.subr.mxu0 0.0
        %932 = vmatpush1.msra.mxu0 0.0
        %933 = vmatprep.subr.mxu0 0.0
        %934 = vmatpush1.msra.mxu0 0.0
        %935 = vmatprep.subr.mxu0 0.0
        %936 = vmatpush1.msra.mxu0 0.0
        %937 = vmatprep.subr.mxu0 0.0
        %938 = vmatpush1.msra.mxu0 0.0
        %939 = vmatprep.subr.mxu0 0.0
        %940 = vmatpush1.msra.mxu0 0.0
        %941 = vmatprep.subr.mxu0 0.0
        %942 = vmatpush1.msra.mxu0 0.0
        %943 = vmatprep.subr.mxu0 0.0
        %944 = vmatpush1.msra.mxu0 0.0
        %945 = vmatprep.subr.mxu0 0.0
        %946 = vmatpush1.msra.mxu0 0.0
        %947 = vmatprep.subr.mxu0 0.0
        %948 = vmatpush1.msra.mxu0 0.0
        %949 = vmatprep.subr.mxu0 0.0
        %950 = vmatpush1.msra.mxu0 0.0
        %951 = vmatprep.subr.mxu0 0.0
        %952 = vmatpush1.msra.mxu0 0.0
        %953 = vmatprep.subr.mxu0 0.0
        %954 = vmatpush1.msra.mxu0 0.0
        %955 = vmatprep.subr.mxu0 0.0
        %956 = vmatpush1.msra.mxu0 0.0
        %957 = vmatprep.subr.mxu0 0.0
        %958 = vmatpush1.msra.mxu0 %v922
        %959 = vmatprep.subr.mxu0 0.0
        %960 = vmatpush2.msra.mxu0 0.0
        %961 = vmatprep.subr.mxu0 0.0
        %962 = vmatpush2.msra.mxu0 0.0
        %963 = vmatprep.subr.mxu0 0.0
        %964 = vmatpush2.msra.mxu0 0.0
        %965 = vmatprep.subr.mxu0 0.0
        %966 = vmatpush2.msra.mxu0 0.0
        %967 = vmatprep.subr.mxu0 0.0
        %968 = vmatpush2.msra.mxu0 0.0
        %969 = vmatprep.subr.mxu0 0.0
        %970 = vmatpush2.msra.mxu0 0.0
        %971 = vmatprep.subr.mxu0 0.0
        %972 = vmatpush2.msra.mxu0 0.0
        %973 = vmatprep.subr.mxu0 0.0
        %974 = vmatpush2.msra.mxu0 0.0
        %975 = vmatprep.subr.mxu0 0.0
        %976 = vmatpush2.msra.mxu0 0.0
        %977 = vmatprep.subr.mxu0 0.0
        %978 = vmatpush2.msra.mxu0 0.0
        %979 = vmatprep.subr.mxu0 0.0
        %980 = vmatpush2.msra.mxu0 0.0
        %981 = vmatprep.subr.mxu0 0.0
        %982 = vmatpush2.msra.mxu0 0.0
        %983 = vmatprep.subr.mxu0 0.0
        %984 = vmatpush2.msra.mxu0 0.0
        %985 = vmatprep.subr.mxu0 0.0
        %986 = vmatpush2.msra.mxu0 0.0
        %987 = vmatprep.subr.mxu0 0.0
        %988 = vmatpush2.msra.mxu0 0.0
        %989 = vmatprep.subr.mxu0 0.0
        %990 = vmatpush2.msra.mxu0 0.0
        %991 = vmatprep.mubr.f32.mxu0 0.0
        %992 = vmatmul.mubr.f32.gmra.mxu0 %v925
        %v993 = vpop.f32.mrf.mxu0
        %v994 = vadd.f32 0.0, %v993
        %v995 = vpop.f32.mrf.mxu0
        %996 = vdwg.mxu0
        %v997 = vrcp.pop %v920
        %v998 = vmul.f32 %v994, %v997
        %999 = vst.msk [vmem:[#allocation2] sm:$0xff] %vm836, %v998
        %1000 = vrot.lane.b32.xlu0 %v830, 120
        %v1001 = vpop.permute.xlu0 %1000
        %1002 = vrot.lane.b32.xlu0 %v830, 88
        %v1003 = vpop.permute.xlu0 %1002
        %v1004 = vsel %vm836, %v1001, 0
        %v1006 = vsel %vm836, %v1003, 0
        %1008 = vmatprep.subr.mxu0 0.0
        %1009 = vmatpush1.xpose.msra.mxu0 0.0
        %1010 = vmatprep.subr.mxu0 0.0
        %1011 = vmatpush1.xpose.msra.mxu0 0.0
        %1012 = vmatprep.subr.mxu0 0.0
        %1013 = vmatpush1.xpose.msra.mxu0 0.0
        %1014 = vmatprep.subr.mxu0 0.0
        %1015 = vmatpush1.xpose.msra.mxu0 0.0
        %1016 = vmatprep.subr.mxu0 0.0
        %1017 = vmatpush1.xpose.msra.mxu0 0.0
        %1018 = vmatprep.subr.mxu0 0.0
        %1019 = vmatpush1.xpose.msra.mxu0 0.0
        %1020 = vmatprep.subr.mxu0 0.0
        %1021 = vmatpush1.xpose.msra.mxu0 0.0
        %1022 = vmatprep.subr.mxu0 0.0
        %1023 = vmatpush1.xpose.msra.mxu0 0.0
        %1024 = vmatprep.subr.mxu0 0.0
        %1025 = vmatpush1.xpose.msra.mxu0 0.0
        %1026 = vmatprep.subr.mxu0 0.0
        %1027 = vmatpush1.xpose.msra.mxu0 0.0
        %1028 = vmatprep.subr.mxu0 0.0
        %1029 = vmatpush1.xpose.msra.mxu0 0.0
        %1030 = vmatprep.subr.mxu0 0.0
        %1031 = vmatpush1.xpose.msra.mxu0 0.0
        %1032 = vmatprep.subr.mxu0 0.0
        %1033 = vmatpush1.xpose.msra.mxu0 0.0
        %1034 = vmatprep.subr.mxu0 0.0
        %1035 = vmatpush1.xpose.msra.mxu0 0.0
        %1036 = vmatprep.subr.mxu0 0.0
        %1037 = vmatpush1.xpose.msra.mxu0 0.0
        %1038 = vmatprep.subr.mxu0 0.0
        %1039 = vmatpush1.xpose.msra.mxu0 %v1006
        %1040 = vmatprep.subr.mxu0 0.0
        %1041 = vmatpush2.xpose.msra.mxu0 0.0
        %1042 = vmatprep.subr.mxu0 0.0
        %1043 = vmatpush2.xpose.msra.mxu0 0.0
        %1044 = vmatprep.subr.mxu0 0.0
        %1045 = vmatpush2.xpose.msra.mxu0 0.0
        %1046 = vmatprep.subr.mxu0 0.0
        %1047 = vmatpush2.xpose.msra.mxu0 0.0
        %1048 = vmatprep.subr.mxu0 0.0
        %1049 = vmatpush2.xpose.msra.mxu0 0.0
        %1050 = vmatprep.subr.mxu0 0.0
        %1051 = vmatpush2.xpose.msra.mxu0 0.0
        %1052 = vmatprep.subr.mxu0 0.0
        %1053 = vmatpush2.xpose.msra.mxu0 0.0
        %1054 = vmatprep.subr.mxu0 0.0
        %1055 = vmatpush2.xpose.msra.mxu0 0.0
        %1056 = vmatprep.subr.mxu0 0.0
        %1057 = vmatpush2.xpose.msra.mxu0 0.0
        %1058 = vmatprep.subr.mxu0 0.0
        %1059 = vmatpush2.xpose.msra.mxu0 0.0
        %1060 = vmatprep.subr.mxu0 0.0
        %1061 = vmatpush2.xpose.msra.mxu0 0.0
        %1062 = vmatprep.subr.mxu0 0.0
        %1063 = vmatpush2.xpose.msra.mxu0 0.0
        %1064 = vmatprep.subr.mxu0 0.0
        %1065 = vmatpush2.xpose.msra.mxu0 0.0
        %1066 = vmatprep.subr.mxu0 0.0
        %1067 = vmatpush2.xpose.msra.mxu0 0.0
        %1068 = vmatprep.subr.mxu0 0.0
        %1069 = vmatpush2.xpose.msra.mxu0 0.0
        %1070 = vmatprep.subr.mxu0 0.0
        %1071 = vmatpush2.xpose.msra.mxu0 0.0
        %1072 = vmatprep.mubr.f32.mxu0 0.0
        %1073 = vmatmul.mubr.f32.gmra.mxu0 %v1004
        %v1074 = vpop.f32.mrf.mxu0
        %v1075 = vadd.f32 0.0, %v1074
        %v1076 = vpop.f32.mrf.mxu0
        %1077 = vdwg.mxu0
        %v1078 = vmul.f32 %v1075, 0.35355338
        %v1079 = vsel %vm836, %v1078, -inf
        %1080 = vmax.xlane.f32.xlu0 %v1079
        %v1081 = vpop.xlane.xlu0 %1080
        %v1082 = vsub.f32 %v1078, %v1081
        %v1083 = vmul.f32 %v1082, 1.442695
        %v1084 = vpow.pop %v1083
        %v1085 = vsel %vm836, %v1084, 0.0
        %1086 = vadd.xlane.f32.xlu0 %v1085
        %v1087 = vpop.xlane.xlu0 %1086
        %1088 = vrot.lane.b32.xlu0 %v830, 56
        %v1089 = vpop.permute.xlu0 %1088
        %v1092 = vsel %vm836, %v1084, 0
        %1094 = vmatprep.subr.mxu0 0.0
        %1095 = vmatpush1.msra.mxu0 0.0
        %1096 = vmatprep.subr.mxu0 0.0
        %1097 = vmatpush1.msra.mxu0 0.0
        %1098 = vmatprep.subr.mxu0 0.0
        %1099 = vmatpush1.msra.mxu0 0.0
        %1100 = vmatprep.subr.mxu0 0.0
        %1101 = vmatpush1.msra.mxu0 0.0
        %1102 = vmatprep.subr.mxu0 0.0
        %1103 = vmatpush1.msra.mxu0 0.0
        %1104 = vmatprep.subr.mxu0 0.0
        %1105 = vmatpush1.msra.mxu0 0.0
        %1106 = vmatprep.subr.mxu0 0.0
        %1107 = vmatpush1.msra.mxu0 0.0
        %1108 = vmatprep.subr.mxu0 0.0
        %1109 = vmatpush1.msra.mxu0 0.0
        %1110 = vmatprep.subr.mxu0 0.0
        %1111 = vmatpush1.msra.mxu0 0.0
        %1112 = vmatprep.subr.mxu0 0.0
        %1113 = vmatpush1.msra.mxu0 0.0
        %1114 = vmatprep.subr.mxu0 0.0
        %1115 = vmatpush1.msra.mxu0 0.0
        %1116 = vmatprep.subr.mxu0 0.0
        %1117 = vmatpush1.msra.mxu0 0.0
        %1118 = vmatprep.subr.mxu0 0.0
        %1119 = vmatpush1.msra.mxu0 0.0
        %1120 = vmatprep.subr.mxu0 0.0
        %1121 = vmatpush1.msra.mxu0 0.0
        %1122 = vmatprep.subr.mxu0 0.0
        %1123 = vmatpush1.msra.mxu0 0.0
        %1124 = vmatprep.subr.mxu0 0.0
        %1125 = vmatpush1.msra.mxu0 %v1089
        %1126 = vmatprep.subr.mxu0 0.0
        %1127 = vmatpush2.msra.mxu0 0.0
        %1128 = vmatprep.subr.mxu0 0.0
        %1129 = vmatpush2.msra.mxu0 0.0
        %1130 = vmatprep.subr.mxu0 0.0
        %1131 = vmatpush2.msra.mxu0 0.0
        %1132 = vmatprep.subr.mxu0 0.0
        %1133 = vmatpush2.msra.mxu0 0.0
        %1134 = vmatprep.subr.mxu0 0.0
        %1135 = vmatpush2.msra.mxu0 0.0
        %1136 = vmatprep.subr.mxu0 0.0
        %1137 = vmatpush2.msra.mxu0 0.0
        %1138 = vmatprep.subr.mxu0 0.0
        %1139 = vmatpush2.msra.mxu0 0.0
        %1140 = vmatprep.subr.mxu0 0.0
        %1141 = vmatpush2.msra.mxu0 0.0
        %1142 = vmatprep.subr.mxu0 0.0
        %1143 = vmatpush2.msra.mxu0 0.0
        %1144 = vmatprep.subr.mxu0 0.0
        %1145 = vmatpush2.msra.mxu0 0.0
        %1146 = vmatprep.subr.mxu0 0.0
        %1147 = vmatpush2.msra.mxu0 0.0
        %1148 = vmatprep.subr.mxu0 0.0
        %1149 = vmatpush2.msra.mxu0 0.0
        %1150 = vmatprep.subr.mxu0 0.0
        %1151 = vmatpush2.msra.mxu0 0.0
        %1152 = vmatprep.subr.mxu0 0.0
        %1153 = vmatpush2.msra.mxu0 0.0
        %1154 = vmatprep.subr.mxu0 0.0
        %1155 = vmatpush2.msra.mxu0 0.0
        %1156 = vmatprep.subr.mxu0 0.0
        %1157 = vmatpush2.msra.mxu0 0.0
        %1158 = vmatprep.mubr.f32.mxu0 0.0
        %1159 = vmatmul.mubr.f32.gmra.mxu0 %v1092
        %v1160 = vpop.f32.mrf.mxu0
        %v1161 = vadd.f32 0.0, %v1160
        %v1162 = vpop.f32.mrf.mxu0
        %1163 = vdwg.mxu0
        %v1164 = vrcp.pop %v1087
        %v1165 = vmul.f32 %v1161, %v1164
        %1167 = vrot.lane.b32.xlu0 %v1165, 8
        %v1168 = vpop.permute.xlu0 %1167
        %vm1170 = vcmask 130112
        %1171 = vst.msk [vmem:[#allocation2] sm:$0xff] %vm1170, %v1168
        %1172 = vrot.lane.b32.xlu0 %v830, 112
        %v1173 = vpop.permute.xlu0 %1172
        %1174 = vrot.lane.b32.xlu0 %v830, 80
        %v1175 = vpop.permute.xlu0 %1174
        %v1176 = vsel %vm836, %v1173, 0
        %v1178 = vsel %vm836, %v1175, 0
        %1180 = vmatprep.subr.mxu0 0.0
        %1181 = vmatpush1.xpose.msra.mxu0 0.0
        %1182 = vmatprep.subr.mxu0 0.0
        %1183 = vmatpush1.xpose.msra.mxu0 0.0
        %1184 = vmatprep.subr.mxu0 0.0
        %1185 = vmatpush1.xpose.msra.mxu0 0.0
        %1186 = vmatprep.subr.mxu0 0.0
        %1187 = vmatpush1.xpose.msra.mxu0 0.0
        %1188 = vmatprep.subr.mxu0 0.0
        %1189 = vmatpush1.xpose.msra.mxu0 0.0
        %1190 = vmatprep.subr.mxu0 0.0
        %1191 = vmatpush1.xpose.msra.mxu0 0.0
        %1192 = vmatprep.subr.mxu0 0.0
        %1193 = vmatpush1.xpose.msra.mxu0 0.0
        %1194 = vmatprep.subr.mxu0 0.0
        %1195 = vmatpush1.xpose.msra.mxu0 0.0
        %1196 = vmatprep.subr.mxu0 0.0
        %1197 = vmatpush1.xpose.msra.mxu0 0.0
        %1198 = vmatprep.subr.mxu0 0.0
        %1199 = vmatpush1.xpose.msra.mxu0 0.0
        %1200 = vmatprep.subr.mxu0 0.0
        %1201 = vmatpush1.xpose.msra.mxu0 0.0
        %1202 = vmatprep.subr.mxu0 0.0
        %1203 = vmatpush1.xpose.msra.mxu0 0.0
        %1204 = vmatprep.subr.mxu0 0.0
        %1205 = vmatpush1.xpose.msra.mxu0 0.0
        %1206 = vmatprep.subr.mxu0 0.0
        %1207 = vmatpush1.xpose.msra.mxu0 0.0
        %1208 = vmatprep.subr.mxu0 0.0
        %1209 = vmatpush1.xpose.msra.mxu0 0.0
        %1210 = vmatprep.subr.mxu0 0.0
        %1211 = vmatpush1.xpose.msra.mxu0 %v1178
        %1212 = vmatprep.subr.mxu0 0.0
        %1213 = vmatpush2.xpose.msra.mxu0 0.0
        %1214 = vmatprep.subr.mxu0 0.0
        %1215 = vmatpush2.xpose.msra.mxu0 0.0
        %1216 = vmatprep.subr.mxu0 0.0
        %1217 = vmatpush2.xpose.msra.mxu0 0.0
        %1218 = vmatprep.subr.mxu0 0.0
        %1219 = vmatpush2.xpose.msra.mxu0 0.0
        %1220 = vmatprep.subr.mxu0 0.0
        %1221 = vmatpush2.xpose.msra.mxu0 0.0
        %1222 = vmatprep.subr.mxu0 0.0
        %1223 = vmatpush2.xpose.msra.mxu0 0.0
        %1224 = vmatprep.subr.mxu0 0.0
        %1225 = vmatpush2.xpose.msra.mxu0 0.0
        %1226 = vmatprep.subr.mxu0 0.0
        %1227 = vmatpush2.xpose.msra.mxu0 0.0
        %1228 = vmatprep.subr.mxu0 0.0
        %1229 = vmatpush2.xpose.msra.mxu0 0.0
        %1230 = vmatprep.subr.mxu0 0.0
        %1231 = vmatpush2.xpose.msra.mxu0 0.0
        %1232 = vmatprep.subr.mxu0 0.0
        %1233 = vmatpush2.xpose.msra.mxu0 0.0
        %1234 = vmatprep.subr.mxu0 0.0
        %1235 = vmatpush2.xpose.msra.mxu0 0.0
        %1236 = vmatprep.subr.mxu0 0.0
        %1237 = vmatpush2.xpose.msra.mxu0 0.0
        %1238 = vmatprep.subr.mxu0 0.0
        %1239 = vmatpush2.xpose.msra.mxu0 0.0
        %1240 = vmatprep.subr.mxu0 0.0
        %1241 = vmatpush2.xpose.msra.mxu0 0.0
        %1242 = vmatprep.subr.mxu0 0.0
        %1243 = vmatpush2.xpose.msra.mxu0 0.0
        %1244 = vmatprep.mubr.f32.mxu0 0.0
        %1245 = vmatmul.mubr.f32.gmra.mxu0 %v1176
        %v1246 = vpop.f32.mrf.mxu0
        %v1247 = vadd.f32 0.0, %v1246
        %v1248 = vpop.f32.mrf.mxu0
        %1249 = vdwg.mxu0
        %v1250 = vmul.f32 %v1247, 0.35355338
        %v1251 = vsel %vm836, %v1250, -inf
        %1252 = vmax.xlane.f32.xlu0 %v1251
        %v1253 = vpop.xlane.xlu0 %1252
        %v1254 = vsub.f32 %v1250, %v1253
        %v1255 = vmul.f32 %v1254, 1.442695
        %v1256 = vpow.pop %v1255
        %v1257 = vsel %vm836, %v1256, 0.0
        %1258 = vadd.xlane.f32.xlu0 %v1257
        %v1259 = vpop.xlane.xlu0 %1258
        %1260 = vrot.lane.b32.xlu0 %v830, 48
        %v1261 = vpop.permute.xlu0 %1260
        %v1264 = vsel %vm836, %v1256, 0
        %1266 = vmatprep.subr.mxu0 0.0
        %1267 = vmatpush1.msra.mxu0 0.0
        %1268 = vmatprep.subr.mxu0 0.0
        %1269 = vmatpush1.msra.mxu0 0.0
        %1270 = vmatprep.subr.mxu0 0.0
        %1271 = vmatpush1.msra.mxu0 0.0
        %1272 = vmatprep.subr.mxu0 0.0
        %1273 = vmatpush1.msra.mxu0 0.0
        %1274 = vmatprep.subr.mxu0 0.0
        %1275 = vmatpush1.msra.mxu0 0.0
        %1276 = vmatprep.subr.mxu0 0.0
        %1277 = vmatpush1.msra.mxu0 0.0
        %1278 = vmatprep.subr.mxu0 0.0
        %1279 = vmatpush1.msra.mxu0 0.0
        %1280 = vmatprep.subr.mxu0 0.0
        %1281 = vmatpush1.msra.mxu0 0.0
        %1282 = vmatprep.subr.mxu0 0.0
        %1283 = vmatpush1.msra.mxu0 0.0
        %1284 = vmatprep.subr.mxu0 0.0
        %1285 = vmatpush1.msra.mxu0 0.0
        %1286 = vmatprep.subr.mxu0 0.0
        %1287 = vmatpush1.msra.mxu0 0.0
        %1288 = vmatprep.subr.mxu0 0.0
        %1289 = vmatpush1.msra.mxu0 0.0
        %1290 = vmatprep.subr.mxu0 0.0
        %1291 = vmatpush1.msra.mxu0 0.0
        %1292 = vmatprep.subr.mxu0 0.0
        %1293 = vmatpush1.msra.mxu0 0.0
        %1294 = vmatprep.subr.mxu0 0.0
        %1295 = vmatpush1.msra.mxu0 0.0
        %1296 = vmatprep.subr.mxu0 0.0
        %1297 = vmatpush1.msra.mxu0 %v1261
        %1298 = vmatprep.subr.mxu0 0.0
        %1299 = vmatpush2.msra.mxu0 0.0
        %1300 = vmatprep.subr.mxu0 0.0
        %1301 = vmatpush2.msra.mxu0 0.0
        %1302 = vmatprep.subr.mxu0 0.0
        %1303 = vmatpush2.msra.mxu0 0.0
        %1304 = vmatprep.subr.mxu0 0.0
        %1305 = vmatpush2.msra.mxu0 0.0
        %1306 = vmatprep.subr.mxu0 0.0
        %1307 = vmatpush2.msra.mxu0 0.0
        %1308 = vmatprep.subr.mxu0 0.0
        %1309 = vmatpush2.msra.mxu0 0.0
        %1310 = vmatprep.subr.mxu0 0.0
        %1311 = vmatpush2.msra.mxu0 0.0
        %1312 = vmatprep.subr.mxu0 0.0
        %1313 = vmatpush2.msra.mxu0 0.0
        %1314 = vmatprep.subr.mxu0 0.0
        %1315 = vmatpush2.msra.mxu0 0.0
        %1316 = vmatprep.subr.mxu0 0.0
        %1317 = vmatpush2.msra.mxu0 0.0
        %1318 = vmatprep.subr.mxu0 0.0
        %1319 = vmatpush2.msra.mxu0 0.0
        %1320 = vmatprep.subr.mxu0 0.0
        %1321 = vmatpush2.msra.mxu0 0.0
        %1322 = vmatprep.subr.mxu0 0.0
        %1323 = vmatpush2.msra.mxu0 0.0
        %1324 = vmatprep.subr.mxu0 0.0
        %1325 = vmatpush2.msra.mxu0 0.0
        %1326 = vmatprep.subr.mxu0 0.0
        %1327 = vmatpush2.msra.mxu0 0.0
        %1328 = vmatprep.subr.mxu0 0.0
        %1329 = vmatpush2.msra.mxu0 0.0
        %1330 = vmatprep.mubr.f32.mxu0 0.0
        %1331 = vmatmul.mubr.f32.gmra.mxu0 %v1264
        %v1332 = vpop.f32.mrf.mxu0
        %v1333 = vadd.f32 0.0, %v1332
        %v1334 = vpop.f32.mrf.mxu0
        %1335 = vdwg.mxu0
        %v1336 = vrcp.pop %v1259
        %v1337 = vmul.f32 %v1333, %v1336
        %1339 = vrot.lane.b32.xlu0 %v1337, 16
        %v1340 = vpop.permute.xlu0 %1339
        %vm1342 = vcmask 195712
        %1343 = vst.msk [vmem:[#allocation2] sm:$0xff] %vm1342, %v1340
        %1344 = vrot.lane.b32.xlu0 %v830, 104
        %v1345 = vpop.permute.xlu0 %1344
        %1346 = vrot.lane.b32.xlu0 %v830, 72
        %v1347 = vpop.permute.xlu0 %1346
        %v1348 = vsel %vm836, %v1345, 0
        %v1350 = vsel %vm836, %v1347, 0
        %1352 = vmatprep.subr.mxu0 0.0
        %1353 = vmatpush1.xpose.msra.mxu0 0.0
        %1354 = vmatprep.subr.mxu0 0.0
        %1355 = vmatpush1.xpose.msra.mxu0 0.0
        %1356 = vmatprep.subr.mxu0 0.0
        %1357 = vmatpush1.xpose.msra.mxu0 0.0
        %1358 = vmatprep.subr.mxu0 0.0
        %1359 = vmatpush1.xpose.msra.mxu0 0.0
        %1360 = vmatprep.subr.mxu0 0.0
        %1361 = vmatpush1.xpose.msra.mxu0 0.0
        %1362 = vmatprep.subr.mxu0 0.0
        %1363 = vmatpush1.xpose.msra.mxu0 0.0
        %1364 = vmatprep.subr.mxu0 0.0
        %1365 = vmatpush1.xpose.msra.mxu0 0.0
        %1366 = vmatprep.subr.mxu0 0.0
        %1367 = vmatpush1.xpose.msra.mxu0 0.0
        %1368 = vmatprep.subr.mxu0 0.0
        %1369 = vmatpush1.xpose.msra.mxu0 0.0
        %1370 = vmatprep.subr.mxu0 0.0
        %1371 = vmatpush1.xpose.msra.mxu0 0.0
        %1372 = vmatprep.subr.mxu0 0.0
        %1373 = vmatpush1.xpose.msra.mxu0 0.0
        %1374 = vmatprep.subr.mxu0 0.0
        %1375 = vmatpush1.xpose.msra.mxu0 0.0
        %1376 = vmatprep.subr.mxu0 0.0
        %1377 = vmatpush1.xpose.msra.mxu0 0.0
        %1378 = vmatprep.subr.mxu0 0.0
        %1379 = vmatpush1.xpose.msra.mxu0 0.0
        %1380 = vmatprep.subr.mxu0 0.0
        %1381 = vmatpush1.xpose.msra.mxu0 0.0
        %1382 = vmatprep.subr.mxu0 0.0
        %1383 = vmatpush1.xpose.msra.mxu0 %v1350
        %1384 = vmatprep.subr.mxu0 0.0
        %1385 = vmatpush2.xpose.msra.mxu0 0.0
        %1386 = vmatprep.subr.mxu0 0.0
        %1387 = vmatpush2.xpose.msra.mxu0 0.0
        %1388 = vmatprep.subr.mxu0 0.0
        %1389 = vmatpush2.xpose.msra.mxu0 0.0
        %1390 = vmatprep.subr.mxu0 0.0
        %1391 = vmatpush2.xpose.msra.mxu0 0.0
        %1392 = vmatprep.subr.mxu0 0.0
        %1393 = vmatpush2.xpose.msra.mxu0 0.0
        %1394 = vmatprep.subr.mxu0 0.0
        %1395 = vmatpush2.xpose.msra.mxu0 0.0
        %1396 = vmatprep.subr.mxu0 0.0
        %1397 = vmatpush2.xpose.msra.mxu0 0.0
        %1398 = vmatprep.subr.mxu0 0.0
        %1399 = vmatpush2.xpose.msra.mxu0 0.0
        %1400 = vmatprep.subr.mxu0 0.0
        %1401 = vmatpush2.xpose.msra.mxu0 0.0
        %1402 = vmatprep.subr.mxu0 0.0
        %1403 = vmatpush2.xpose.msra.mxu0 0.0
        %1404 = vmatprep.subr.mxu0 0.0
        %1405 = vmatpush2.xpose.msra.mxu0 0.0
        %1406 = vmatprep.subr.mxu0 0.0
        %1407 = vmatpush2.xpose.msra.mxu0 0.0
        %1408 = vmatprep.subr.mxu0 0.0
        %1409 = vmatpush2.xpose.msra.mxu0 0.0
        %1410 = vmatprep.subr.mxu0 0.0
        %1411 = vmatpush2.xpose.msra.mxu0 0.0
        %1412 = vmatprep.subr.mxu0 0.0
        %1413 = vmatpush2.xpose.msra.mxu0 0.0
        %1414 = vmatprep.subr.mxu0 0.0
        %1415 = vmatpush2.xpose.msra.mxu0 0.0
        %1416 = vmatprep.mubr.f32.mxu0 0.0
        %1417 = vmatmul.mubr.f32.gmra.mxu0 %v1348
        %v1418 = vpop.f32.mrf.mxu0
        %v1419 = vadd.f32 0.0, %v1418
        %v1420 = vpop.f32.mrf.mxu0
        %1421 = vdwg.mxu0
        %v1422 = vmul.f32 %v1419, 0.35355338
        %v1423 = vsel %vm836, %v1422, -inf
        %1424 = vmax.xlane.f32.xlu0 %v1423
        %v1425 = vpop.xlane.xlu0 %1424
        %v1426 = vsub.f32 %v1422, %v1425
        %v1427 = vmul.f32 %v1426, 1.442695
        %v1428 = vpow.pop %v1427
        %v1429 = vsel %vm836, %v1428, 0.0
        %1430 = vadd.xlane.f32.xlu0 %v1429
        %v1431 = vpop.xlane.xlu0 %1430
        %1432 = vrot.lane.b32.xlu0 %v830, 40
        %v1433 = vpop.permute.xlu0 %1432
        %v1436 = vsel %vm836, %v1428, 0
        %1438 = vmatprep.subr.mxu0 0.0
        %1439 = vmatpush1.msra.mxu0 0.0
        %1440 = vmatprep.subr.mxu0 0.0
        %1441 = vmatpush1.msra.mxu0 0.0
        %1442 = vmatprep.subr.mxu0 0.0
        %1443 = vmatpush1.msra.mxu0 0.0
        %1444 = vmatprep.subr.mxu0 0.0
        %1445 = vmatpush1.msra.mxu0 0.0
        %1446 = vmatprep.subr.mxu0 0.0
        %1447 = vmatpush1.msra.mxu0 0.0
        %1448 = vmatprep.subr.mxu0 0.0
        %1449 = vmatpush1.msra.mxu0 0.0
        %1450 = vmatprep.subr.mxu0 0.0
        %1451 = vmatpush1.msra.mxu0 0.0
        %1452 = vmatprep.subr.mxu0 0.0
        %1453 = vmatpush1.msra.mxu0 0.0
        %1454 = vmatprep.subr.mxu0 0.0
        %1455 = vmatpush1.msra.mxu0 0.0
        %1456 = vmatprep.subr.mxu0 0.0
        %1457 = vmatpush1.msra.mxu0 0.0
        %1458 = vmatprep.subr.mxu0 0.0
        %1459 = vmatpush1.msra.mxu0 0.0
        %1460 = vmatprep.subr.mxu0 0.0
        %1461 = vmatpush1.msra.mxu0 0.0
        %1462 = vmatprep.subr.mxu0 0.0
        %1463 = vmatpush1.msra.mxu0 0.0
        %1464 = vmatprep.subr.mxu0 0.0
        %1465 = vmatpush1.msra.mxu0 0.0
        %1466 = vmatprep.subr.mxu0 0.0
        %1467 = vmatpush1.msra.mxu0 0.0
        %1468 = vmatprep.subr.mxu0 0.0
        %1469 = vmatpush1.msra.mxu0 %v1433
        %1470 = vmatprep.subr.mxu0 0.0
        %1471 = vmatpush2.msra.mxu0 0.0
        %1472 = vmatprep.subr.mxu0 0.0
        %1473 = vmatpush2.msra.mxu0 0.0
        %1474 = vmatprep.subr.mxu0 0.0
        %1475 = vmatpush2.msra.mxu0 0.0
        %1476 = vmatprep.subr.mxu0 0.0
        %1477 = vmatpush2.msra.mxu0 0.0
        %1478 = vmatprep.subr.mxu0 0.0
        %1479 = vmatpush2.msra.mxu0 0.0
        %1480 = vmatprep.subr.mxu0 0.0
        %1481 = vmatpush2.msra.mxu0 0.0
        %1482 = vmatprep.subr.mxu0 0.0
        %1483 = vmatpush2.msra.mxu0 0.0
        %1484 = vmatprep.subr.mxu0 0.0
        %1485 = vmatpush2.msra.mxu0 0.0
        %1486 = vmatprep.subr.mxu0 0.0
        %1487 = vmatpush2.msra.mxu0 0.0
        %1488 = vmatprep.subr.mxu0 0.0
        %1489 = vmatpush2.msra.mxu0 0.0
        %1490 = vmatprep.subr.mxu0 0.0
        %1491 = vmatpush2.msra.mxu0 0.0
        %1492 = vmatprep.subr.mxu0 0.0
        %1493 = vmatpush2.msra.mxu0 0.0
        %1494 = vmatprep.subr.mxu0 0.0
        %1495 = vmatpush2.msra.mxu0 0.0
        %1496 = vmatprep.subr.mxu0 0.0
        %1497 = vmatpush2.msra.mxu0 0.0
        %1498 = vmatprep.subr.mxu0 0.0
        %1499 = vmatpush2.msra.mxu0 0.0
        %1500 = vmatprep.subr.mxu0 0.0
        %1501 = vmatpush2.msra.mxu0 0.0
        %1502 = vmatprep.mubr.f32.mxu0 0.0
        %1503 = vmatmul.mubr.f32.gmra.mxu0 %v1436
        %v1504 = vpop.f32.mrf.mxu0
        %v1505 = vadd.f32 0.0, %v1504
        %v1506 = vpop.f32.mrf.mxu0
        %1507 = vdwg.mxu0
        %v1508 = vrcp.pop %v1431
        %v1509 = vmul.f32 %v1505, %v1508
        %1511 = vrot.lane.b32.xlu0 %v1509, 24
        %v1512 = vpop.permute.xlu0 %1511
        %vm1514 = vcmask 261312
        %1515 = vst.msk [vmem:[#allocation2] sm:$0xff] %vm1514, %v1512
        %v1516 = vld [vmem:[#allocation2] sm:$0xff]
        %v1517 = vld [vmem:[%s9] sm:$0xff]
        %v1518 = vld [vmem:[%s9 + $0x8] sm:$0xff]
        %v1519 = vld [vmem:[%s9 + $0x10] sm:$0xff]
        %v1520 = vld [vmem:[%s9 + $0x18] sm:$0xff]
        %v1521 = vld [vmem:[%s10] sm:$0x1]
        %v1523 = vlaneseq
        %v1524 = vshrl.u32 %v1523, 7
        %v1525 = vsub.s32 0, %v1524
        %v1526 = vrot.slane %v1521, %v1525
        %v1529 = vsel %vm642, %v1516, 0
        %1531 = vmatprep.subr.mxu0 0.0
        %1532 = vmatpush1.msra.mxu0 0.0
        %1533 = vmatprep.subr.mxu0 0.0
        %1534 = vmatpush1.msra.mxu0 0.0
        %1535 = vmatprep.subr.mxu0 0.0
        %1536 = vmatpush1.msra.mxu0 0.0
        %1537 = vmatprep.subr.mxu0 0.0
        %1538 = vmatpush1.msra.mxu0 0.0
        %1539 = vmatprep.subr.mxu0 0.0
        %1540 = vmatpush1.msra.mxu0 0.0
        %1541 = vmatprep.subr.mxu0 0.0
        %1542 = vmatpush1.msra.mxu0 0.0
        %1543 = vmatprep.subr.mxu0 0.0
        %1544 = vmatpush1.msra.mxu0 0.0
        %1545 = vmatprep.subr.mxu0 0.0
        %1546 = vmatpush1.msra.mxu0 0.0
        %1547 = vmatprep.subr.mxu0 0.0
        %1548 = vmatpush1.msra.mxu0 0.0
        %1549 = vmatprep.subr.mxu0 0.0
        %1550 = vmatpush1.msra.mxu0 0.0
        %1551 = vmatprep.subr.mxu0 0.0
        %1552 = vmatpush1.msra.mxu0 0.0
        %1553 = vmatprep.subr.mxu0 0.0
        %1554 = vmatpush1.msra.mxu0 0.0
        %1555 = vmatprep.subr.mxu0 0.0
        %1556 = vmatpush1.msra.mxu0 %v1520
        %1557 = vmatprep.subr.mxu0 0.0
        %1558 = vmatpush1.msra.mxu0 %v1519
        %1559 = vmatprep.subr.mxu0 0.0
        %1560 = vmatpush1.msra.mxu0 %v1518
        %1561 = vmatprep.subr.mxu0 0.0
        %1562 = vmatpush1.msra.mxu0 %v1517
        %1563 = vmatprep.subr.mxu0 0.0
        %1564 = vmatpush2.msra.mxu0 0.0
        %1565 = vmatprep.subr.mxu0 0.0
        %1566 = vmatpush2.msra.mxu0 0.0
        %1567 = vmatprep.subr.mxu0 0.0
        %1568 = vmatpush2.msra.mxu0 0.0
        %1569 = vmatprep.subr.mxu0 0.0
        %1570 = vmatpush2.msra.mxu0 0.0
        %1571 = vmatprep.subr.mxu0 0.0
        %1572 = vmatpush2.msra.mxu0 0.0
        %1573 = vmatprep.subr.mxu0 0.0
        %1574 = vmatpush2.msra.mxu0 0.0
        %1575 = vmatprep.subr.mxu0 0.0
        %1576 = vmatpush2.msra.mxu0 0.0
        %1577 = vmatprep.subr.mxu0 0.0
        %1578 = vmatpush2.msra.mxu0 0.0
        %1579 = vmatprep.subr.mxu0 0.0
        %1580 = vmatpush2.msra.mxu0 0.0
        %1581 = vmatprep.subr.mxu0 0.0
        %1582 = vmatpush2.msra.mxu0 0.0
        %1583 = vmatprep.subr.mxu0 0.0
        %1584 = vmatpush2.msra.mxu0 0.0
        %1585 = vmatprep.subr.mxu0 0.0
        %1586 = vmatpush2.msra.mxu0 0.0
        %1587 = vmatprep.subr.mxu0 0.0
        %1588 = vmatpush2.msra.mxu0 0.0
        %1589 = vmatprep.subr.mxu0 0.0
        %1590 = vmatpush2.msra.mxu0 0.0
        %1591 = vmatprep.subr.mxu0 0.0
        %1592 = vmatpush2.msra.mxu0 0.0
        %1593 = vmatprep.subr.mxu0 0.0
        %1594 = vmatpush2.msra.mxu0 0.0
        %1595 = vmatprep.mubr.f32.mxu0 0.0
        %1596 = vmatmul.mubr.f32.gmra.mxu0 %v1529
        %v1597 = vpop.f32.mrf.mxu0
        %v1598 = vadd.f32 %v1526, %v1597
        %v1599 = vpop.f32.mrf.mxu0
        %1600 = vdwg.mxu0
        %v1601 = vadd.f32 %v1598, %v718
        %v1602 = vld [vmem:[%s11] sm:$0x1]
        %v1603 = vld [vmem:[%s12] sm:$0x1]
        %v1604 = vsel %vm642, %v1601, 0.0
        %1605 = vadd.xlane.f32.xlu0 %v1604
        %v1606 = vpop.xlane.xlu0 %1605
        %v1607 = vmul.f32 %v1606, %v724
        %v1608 = vsub.f32 %v1601, %v1607
        %v1609 = vmul.f32 %v1608, %v1608
        %v1610 = vsel %vm642, %v1609, 0.0
        %1611 = vadd.xlane.f32.xlu0 %v1610
        %v1612 = vpop.xlane.xlu0 %1611
        %v1613 = vmul.f32 %v1612, %v724
        %v1614 = vadd.f32 %v1613, 1e-05
        %v1615 = vrsqrt.pop %v1614
        %v1616 = vmul.f32 %v1608, %v1615
        %v1618 = vlaneseq
        %v1619 = vshrl.u32 %v1618, 7
        %v1620 = vsub.s32 0, %v1619
        %v1621 = vrot.slane %v1602, %v1620
        %v1623 = vmul.f32 %v1616, %v1621
        %v1625 = vlaneseq
        %v1626 = vshrl.u32 %v1625, 7
        %v1627 = vsub.s32 0, %v1626
        %v1628 = vrot.slane %v1603, %v1627
        %v1630 = vadd.f32 %v1623, %v1628
        %v1631 = vld [vmem:[%s13] sm:$0xff]
        %v1632 = vld [vmem:[%s13 + $0x8] sm:$0xff]
        %v1633 = vld [vmem:[%s13 + $0x10] sm:$0xff]
        %v1634 = vld [vmem:[%s13 + $0x18] sm:$0xff]
        %v1635 = vld [vmem:[%s14] sm:$0x1]
        %v1637 = vlaneseq
        %v1638 = vshrl.u32 %v1637, 7
        %v1639 = vsub.s32 0, %v1638
        %v1640 = vrot.slane %v1635, %v1639
        %v1643 = vsel %vm642, %v1630, 0
        %1645 = vmatprep.subr.mxu0 0.0
        %1646 = vmatpush1.msra.mxu0 0.0
        %1647 = vmatprep.subr.mxu0 0.0
        %1648 = vmatpush1.msra.mxu0 0.0
        %1649 = vmatprep.subr.mxu0 0.0
        %1650 = vmatpush1.msra.mxu0 0.0
        %1651 = vmatprep.subr.mxu0 0.0
        %1652 = vmatpush1.msra.mxu0 0.0
        %1653 = vmatprep.subr.mxu0 0.0
        %1654 = vmatpush1.msra.mxu0 0.0
        %1655 = vmatprep.subr.mxu0 0.0
        %1656 = vmatpush1.msra.mxu0 0.0
        %1657 = vmatprep.subr.mxu0 0.0
        %1658 = vmatpush1.msra.mxu0 0.0
        %1659 = vmatprep.subr.mxu0 0.0
        %1660 = vmatpush1.msra.mxu0 0.0
        %1661 = vmatprep.subr.mxu0 0.0
        %1662 = vmatpush1.msra.mxu0 0.0
        %1663 = vmatprep.subr.mxu0 0.0
        %1664 = vmatpush1.msra.mxu0 0.0
        %1665 = vmatprep.subr.mxu0 0.0
        %1666 = vmatpush1.msra.mxu0 0.0
        %1667 = vmatprep.subr.mxu0 0.0
        %1668 = vmatpush1.msra.mxu0 0.0
        %1669 = vmatprep.subr.mxu0 0.0
        %1670 = vmatpush1.msra.mxu0 %v1634
        %1671 = vmatprep.subr.mxu0 0.0
        %1672 = vmatpush1.msra.mxu0 %v1633
        %1673 = vmatprep.subr.mxu0 0.0
        %1674 = vmatpush1.msra.mxu0 %v1632
        %1675 = vmatprep.subr.mxu0 0.0
        %1676 = vmatpush1.msra.mxu0 %v1631
        %1677 = vmatprep.subr.mxu0 0.0
        %1678 = vmatpush2.msra.mxu0 0.0
        %1679 = vmatprep.subr.mxu0 0.0
        %1680 = vmatpush2.msra.mxu0 0.0
        %1681 = vmatprep.subr.mxu0 0.0
        %1682 = vmatpush2.msra.mxu0 0.0
        %1683 = vmatprep.subr.mxu0 0.0
        %1684 = vmatpush2.msra.mxu0 0.0
        %1685 = vmatprep.subr.mxu0 0.0
        %1686 = vmatpush2.msra.mxu0 0.0
        %1687 = vmatprep.subr.mxu0 0.0
        %1688 = vmatpush2.msra.mxu0 0.0
        %1689 = vmatprep.subr.mxu0 0.0
        %1690 = vmatpush2.msra.mxu0 0.0
        %1691 = vmatprep.subr.mxu0 0.0
        %1692 = vmatpush2.msra.mxu0 0.0
        %1693 = vmatprep.subr.mxu0 0.0
        %1694 = vmatpush2.msra.mxu0 0.0
        %1695 = vmatprep.subr.mxu0 0.0
        %1696 = vmatpush2.msra.mxu0 0.0
        %1697 = vmatprep.subr.mxu0 0.0
        %1698 = vmatpush2.msra.mxu0 0.0
        %1699 = vmatprep.subr.mxu0 0.0
        %1700 = vmatpush2.msra.mxu0 0.0
        %1701 = vmatprep.subr.mxu0 0.0
        %1702 = vmatpush2.msra.mxu0 0.0
        %1703 = vmatprep.subr.mxu0 0.0
        %1704 = vmatpush2.msra.mxu0 0.0
        %1705 = vmatprep.subr.mxu0 0.0
        %1706 = vmatpush2.msra.mxu0 0.0
        %1707 = vmatprep.subr.mxu0 0.0
        %1708 = vmatpush2.msra.mxu0 0.0
        %1709 = vmatprep.mubr.f32.mxu0 0.0
        %1710 = vmatmul.mubr.f32.gmra.mxu0 %v1643
        %v1711 = vpop.f32.mrf.mxu0
        %v1712 = vadd.f32 %v1640, %v1711
        %v1713 = vpop.f32.mrf.mxu0
        %1714 = vdwg.mxu0
        %vm1715 = vcmp.ge.f32.partialorder %v1712, 0.0
        %v1716 = vmul.f32 %v1712, 0.01
        %v1717 = vsel %vm1715, %v1712, %v1716
        %v1718 = vld [vmem:[%s15] sm:$0xff]
        %v1719 = vld [vmem:[%s15 + $0x8] sm:$0xff]
        %v1720 = vld [vmem:[%s15 + $0x10] sm:$0xff]
        %v1721 = vld [vmem:[%s15 + $0x18] sm:$0xff]
        %v1722 = vld [vmem:[%s15 + $0x20] sm:$0xff]
        %v1723 = vld [vmem:[%s15 + $0x28] sm:$0xff]
        %v1724 = vld [vmem:[%s15 + $0x30] sm:$0xff]
        %v1725 = vld [vmem:[%s15 + $0x38] sm:$0xff]
        %v1726 = vld [vmem:[%s16] sm:$0x1]
        %v1728 = vlaneseq
        %v1729 = vshrl.u32 %v1728, 7
        %v1730 = vsub.s32 0, %v1729
        %v1731 = vrot.slane %v1726, %v1730
        %vm1733 = vcmask 523264
        %v1735 = vsel %vm1733, %v1717, 0
        %1737 = vmatprep.subr.mxu0 0.0
        %1738 = vmatpush1.msra.mxu0 0.0
        %1739 = vmatprep.subr.mxu0 0.0
        %1740 = vmatpush1.msra.mxu0 0.0
        %1741 = vmatprep.subr.mxu0 0.0
        %1742 = vmatpush1.msra.mxu0 0.0
        %1743 = vmatprep.subr.mxu0 0.0
        %1744 = vmatpush1.msra.mxu0 0.0
        %1745 = vmatprep.subr.mxu0 0.0
        %1746 = vmatpush1.msra.mxu0 0.0
        %1747 = vmatprep.subr.mxu0 0.0
        %1748 = vmatpush1.msra.mxu0 0.0
        %1749 = vmatprep.subr.mxu0 0.0
        %1750 = vmatpush1.msra.mxu0 0.0
        %1751 = vmatprep.subr.mxu0 0.0
        %1752 = vmatpush1.msra.mxu0 0.0
        %1753 = vmatprep.subr.mxu0 0.0
        %1754 = vmatpush1.msra.mxu0 %v1725
        %1755 = vmatprep.subr.mxu0 0.0
        %1756 = vmatpush1.msra.mxu0 %v1724
        %1757 = vmatprep.subr.mxu0 0.0
        %1758 = vmatpush1.msra.mxu0 %v1723
        %1759 = vmatprep.subr.mxu0 0.0
        %1760 = vmatpush1.msra.mxu0 %v1722
        %1761 = vmatprep.subr.mxu0 0.0
        %1762 = vmatpush1.msra.mxu0 %v1721
        %1763 = vmatprep.subr.mxu0 0.0
        %1764 = vmatpush1.msra.mxu0 %v1720
        %1765 = vmatprep.subr.mxu0 0.0
        %1766 = vmatpush1.msra.mxu0 %v1719
        %1767 = vmatprep.subr.mxu0 0.0
        %1768 = vmatpush1.msra.mxu0 %v1718
        %1769 = vmatprep.subr.mxu0 0.0
        %1770 = vmatpush2.msra.mxu0 0.0
        %1771 = vmatprep.subr.mxu0 0.0
        %1772 = vmatpush2.msra.mxu0 0.0
        %1773 = vmatprep.subr.mxu0 0.0
        %1774 = vmatpush2.msra.mxu0 0.0
        %1775 = vmatprep.subr.mxu0 0.0
        %1776 = vmatpush2.msra.mxu0 0.0
        %1777 = vmatprep.subr.mxu0 0.0
        %1778 = vmatpush2.msra.mxu0 0.0
        %1779 = vmatprep.subr.mxu0 0.0
        %1780 = vmatpush2.msra.mxu0 0.0
        %1781 = vmatprep.subr.mxu0 0.0
        %1782 = vmatpush2.msra.mxu0 0.0
        %1783 = vmatprep.subr.mxu0 0.0
        %1784 = vmatpush2.msra.mxu0 0.0
        %1785 = vmatprep.subr.mxu0 0.0
        %1786 = vmatpush2.msra.mxu0 0.0
        %1787 = vmatprep.subr.mxu0 0.0
        %1788 = vmatpush2.msra.mxu0 0.0
        %1789 = vmatprep.subr.mxu0 0.0
        %1790 = vmatpush2.msra.mxu0 0.0
        %1791 = vmatprep.subr.mxu0 0.0
        %1792 = vmatpush2.msra.mxu0 0.0
        %1793 = vmatprep.subr.mxu0 0.0
        %1794 = vmatpush2.msra.mxu0 0.0
        %1795 = vmatprep.subr.mxu0 0.0
        %1796 = vmatpush2.msra.mxu0 0.0
        %1797 = vmatprep.subr.mxu0 0.0
        %1798 = vmatpush2.msra.mxu0 0.0
        %1799 = vmatprep.subr.mxu0 0.0
        %1800 = vmatpush2.msra.mxu0 0.0
        %1801 = vmatprep.mubr.f32.mxu0 0.0
        %1802 = vmatmul.mubr.f32.gmra.mxu0 %v1735
        %v1803 = vpop.f32.mrf.mxu0
        %v1804 = vadd.f32 %v1731, %v1803
        %v1805 = vpop.f32.mrf.mxu0
        %1806 = vdwg.mxu0
        %vm1807 = vcmp.ge.f32.partialorder %v1804, 0.0
        %v1808 = vmul.f32 %v1804, 0.01
        %v1809 = vsel %vm1807, %v1804, %v1808
        %v1810 = vadd.f32 %v1601, %v1809
        %s1811 = scalar_lea.vmem %s5, 1
        %v1812 = vld [vmem:[%s1811] sm:$0x1]
        %s1813 = scalar_lea.vmem %s6, 1
        %v1814 = vld [vmem:[%s1813] sm:$0x1]
        %v1815 = vsel %vm642, %v1810, 0.0
        %1816 = vadd.xlane.f32.xlu0 %v1815
        %v1817 = vpop.xlane.xlu0 %1816
        %v1818 = vmul.f32 %v1817, %v724
        %v1819 = vsub.f32 %v1810, %v1818
        %v1820 = vmul.f32 %v1819, %v1819
        %v1821 = vsel %vm642, %v1820, 0.0
        %1822 = vadd.xlane.f32.xlu0 %v1821
        %v1823 = vpop.xlane.xlu0 %1822
        %v1824 = vmul.f32 %v1823, %v724
        %v1825 = vadd.f32 %v1824, 1e-05
        %v1826 = vrsqrt.pop %v1825
        %v1827 = vmul.f32 %v1819, %v1826
        %v1829 = vlaneseq
        %v1830 = vshrl.u32 %v1829, 7
        %v1831 = vsub.s32 0, %v1830
        %v1832 = vrot.slane %v1812, %v1831
        %v1834 = vmul.f32 %v1827, %v1832
        %v1836 = vlaneseq
        %v1837 = vshrl.u32 %v1836, 7
        %v1838 = vsub.s32 0, %v1837
        %v1839 = vrot.slane %v1814, %v1838
        %v1841 = vadd.f32 %v1834, %v1839
        %s1842 = scalar_lea.vmem %s7, 32
        %v1843 = vld [vmem:[%s1842] sm:$0xff]
        %v1844 = vld [vmem:[%s1842 + $0x8] sm:$0xff]
        %v1845 = vld [vmem:[%s1842 + $0x10] sm:$0xff]
        %v1846 = vld [vmem:[%s1842 + $0x18] sm:$0xff]
        %s1847 = scalar_lea.vmem %s8, 1
        %v1848 = vld [vmem:[%s1847] sm:$0x1]
        %v1850 = vlaneseq
        %v1851 = vshrl.u32 %v1850, 7
        %v1852 = vsub.s32 0, %v1851
        %v1853 = vrot.slane %v1848, %v1852
        %v1856 = vsel %vm642, %v1841, 0
        %1858 = vmatprep.subr.mxu0 0.0
        %1859 = vmatpush1.msra.mxu0 0.0
        %1860 = vmatprep.subr.mxu0 0.0
        %1861 = vmatpush1.msra.mxu0 0.0
        %1862 = vmatprep.subr.mxu0 0.0
        %1863 = vmatpush1.msra.mxu0 0.0
        %1864 = vmatprep.subr.mxu0 0.0
        %1865 = vmatpush1.msra.mxu0 0.0
        %1866 = vmatprep.subr.mxu0 0.0
        %1867 = vmatpush1.msra.mxu0 0.0
        %1868 = vmatprep.subr.mxu0 0.0
        %1869 = vmatpush1.msra.mxu0 0.0
        %1870 = vmatprep.subr.mxu0 0.0
        %1871 = vmatpush1.msra.mxu0 0.0
        %1872 = vmatprep.subr.mxu0 0.0
        %1873 = vmatpush1.msra.mxu0 0.0
        %1874 = vmatprep.subr.mxu0 0.0
        %1875 = vmatpush1.msra.mxu0 0.0
        %1876 = vmatprep.subr.mxu0 0.0
        %1877 = vmatpush1.msra.mxu0 0.0
        %1878 = vmatprep.subr.mxu0 0.0
        %1879 = vmatpush1.msra.mxu0 0.0
        %1880 = vmatprep.subr.mxu0 0.0
        %1881 = vmatpush1.msra.mxu0 0.0
        %1882 = vmatprep.subr.mxu0 0.0
        %1883 = vmatpush1.msra.mxu0 %v1846
        %1884 = vmatprep.subr.mxu0 0.0
        %1885 = vmatpush1.msra.mxu0 %v1845
        %1886 = vmatprep.subr.mxu0 0.0
        %1887 = vmatpush1.msra.mxu0 %v1844
        %1888 = vmatprep.subr.mxu0 0.0
        %1889 = vmatpush1.msra.mxu0 %v1843
        %1890 = vmatprep.subr.mxu0 0.0
        %1891 = vmatpush2.msra.mxu0 0.0
        %1892 = vmatprep.subr.mxu0 0.0
        %1893 = vmatpush2.msra.mxu0 0.0
        %1894 = vmatprep.subr.mxu0 0.0
        %1895 = vmatpush2.msra.mxu0 0.0
        %1896 = vmatprep.subr.mxu0 0.0
        %1897 = vmatpush2.msra.mxu0 0.0
        %1898 = vmatprep.subr.mxu0 0.0
        %1899 = vmatpush2.msra.mxu0 0.0
        %1900 = vmatprep.subr.mxu0 0.0
        %1901 = vmatpush2.msra.mxu0 0.0
        %1902 = vmatprep.subr.mxu0 0.0
        %1903 = vmatpush2.msra.mxu0 0.0
        %1904 = vmatprep.subr.mxu0 0.0
        %1905 = vmatpush2.msra.mxu0 0.0
        %1906 = vmatprep.subr.mxu0 0.0
        %1907 = vmatpush2.msra.mxu0 0.0
        %1908 = vmatprep.subr.mxu0 0.0
        %1909 = vmatpush2.msra.mxu0 0.0
        %1910 = vmatprep.subr.mxu0 0.0
        %1911 = vmatpush2.msra.mxu0 0.0
        %1912 = vmatprep.subr.mxu0 0.0
        %1913 = vmatpush2.msra.mxu0 0.0
        %1914 = vmatprep.subr.mxu0 0.0
        %1915 = vmatpush2.msra.mxu0 0.0
        %1916 = vmatprep.subr.mxu0 0.0
        %1917 = vmatpush2.msra.mxu0 0.0
        %1918 = vmatprep.subr.mxu0 0.0
        %1919 = vmatpush2.msra.mxu0 0.0
        %1920 = vmatprep.subr.mxu0 0.0
        %1921 = vmatpush2.msra.mxu0 0.0
        %1922 = vmatprep.mubr.f32.mxu0 0.0
        %1923 = vmatmul.mubr.f32.gmra.mxu0 %v1856
        %v1924 = vpop.f32.mrf.mxu0
        %v1925 = vadd.f32 %v1853, %v1924
        %v1926 = vpop.f32.mrf.mxu0
        %1927 = vdwg.mxu0
        %1929 = vrot.lane.b32.xlu0 %v1925, 96
        %v1930 = vpop.permute.xlu0 %1929
        %v1931 = vsel %vm836, %v1925, 0
        %v1933 = vsel %vm836, %v1930, 0
        %1935 = vmatprep.subr.mxu0 0.0
        %1936 = vmatpush1.xpose.msra.mxu0 0.0
        %1937 = vmatprep.subr.mxu0 0.0
        %1938 = vmatpush1.xpose.msra.mxu0 0.0
        %1939 = vmatprep.subr.mxu0 0.0
        %1940 = vmatpush1.xpose.msra.mxu0 0.0
        %1941 = vmatprep.subr.mxu0 0.0
        %1942 = vmatpush1.xpose.msra.mxu0 0.0
        %1943 = vmatprep.subr.mxu0 0.0
        %1944 = vmatpush1.xpose.msra.mxu0 0.0
        %1945 = vmatprep.subr.mxu0 0.0
        %1946 = vmatpush1.xpose.msra.mxu0 0.0
        %1947 = vmatprep.subr.mxu0 0.0
        %1948 = vmatpush1.xpose.msra.mxu0 0.0
        %1949 = vmatprep.subr.mxu0 0.0
        %1950 = vmatpush1.xpose.msra.mxu0 0.0
        %1951 = vmatprep.subr.mxu0 0.0
        %1952 = vmatpush1.xpose.msra.mxu0 0.0
        %1953 = vmatprep.subr.mxu0 0.0
        %1954 = vmatpush1.xpose.msra.mxu0 0.0
        %1955 = vmatprep.subr.mxu0 0.0
        %1956 = vmatpush1.xpose.msra.mxu0 0.0
        %1957 = vmatprep.subr.mxu0 0.0
        %1958 = vmatpush1.xpose.msra.mxu0 0.0
        %1959 = vmatprep.subr.mxu0 0.0
        %1960 = vmatpush1.xpose.msra.mxu0 0.0
        %1961 = vmatprep.subr.mxu0 0.0
        %1962 = vmatpush1.xpose.msra.mxu0 0.0
        %1963 = vmatprep.subr.mxu0 0.0
        %1964 = vmatpush1.xpose.msra.mxu0 0.0
        %1965 = vmatprep.subr.mxu0 0.0
        %1966 = vmatpush1.xpose.msra.mxu0 %v1933
        %1967 = vmatprep.subr.mxu0 0.0
        %1968 = vmatpush2.xpose.msra.mxu0 0.0
        %1969 = vmatprep.subr.mxu0 0.0
        %1970 = vmatpush2.xpose.msra.mxu0 0.0
        %1971 = vmatprep.subr.mxu0 0.0
        %1972 = vmatpush2.xpose.msra.mxu0 0.0
        %1973 = vmatprep.subr.mxu0 0.0
        %1974 = vmatpush2.xpose.msra.mxu0 0.0
        %1975 = vmatprep.subr.mxu0 0.0
        %1976 = vmatpush2.xpose.msra.mxu0 0.0
        %1977 = vmatprep.subr.mxu0 0.0
        %1978 = vmatpush2.xpose.msra.mxu0 0.0
        %1979 = vmatprep.subr.mxu0 0.0
        %1980 = vmatpush2.xpose.msra.mxu0 0.0
        %1981 = vmatprep.subr.mxu0 0.0
        %1982 = vmatpush2.xpose.msra.mxu0 0.0
        %1983 = vmatprep.subr.mxu0 0.0
        %1984 = vmatpush2.xpose.msra.mxu0 0.0
        %1985 = vmatprep.subr.mxu0 0.0
        %1986 = vmatpush2.xpose.msra.mxu0 0.0
        %1987 = vmatprep.subr.mxu0 0.0
        %1988 = vmatpush2.xpose.msra.mxu0 0.0
        %1989 = vmatprep.subr.mxu0 0.0
        %1990 = vmatpush2.xpose.msra.mxu0 0.0
        %1991 = vmatprep.subr.mxu0 0.0
        %1992 = vmatpush2.xpose.msra.mxu0 0.0
        %1993 = vmatprep.subr.mxu0 0.0
        %1994 = vmatpush2.xpose.msra.mxu0 0.0
        %1995 = vmatprep.subr.mxu0 0.0
        %1996 = vmatpush2.xpose.msra.mxu0 0.0
        %1997 = vmatprep.subr.mxu0 0.0
        %1998 = vmatpush2.xpose.msra.mxu0 0.0
        %1999 = vmatprep.mubr.f32.mxu0 0.0
        %2000 = vmatmul.mubr.f32.gmra.mxu0 %v1931
        %v2001 = vpop.f32.mrf.mxu0
        %v2002 = vadd.f32 0.0, %v2001
        %v2003 = vpop.f32.mrf.mxu0
        %2004 = vdwg.mxu0
        %v2005 = vmul.f32 %v2002, 0.35355338
        %v2006 = vsel %vm836, %v2005, -inf
        %2007 = vmax.xlane.f32.xlu0 %v2006
        %v2008 = vpop.xlane.xlu0 %2007
        %v2009 = vsub.f32 %v2005, %v2008
        %v2010 = vmul.f32 %v2009, 1.442695
        %v2011 = vpow.pop %v2010
        %v2012 = vsel %vm836, %v2011, 0.0
        %2013 = vadd.xlane.f32.xlu0 %v2012
        %v2014 = vpop.xlane.xlu0 %2013
        %2015 = vrot.lane.b32.xlu0 %v1925, 64
        %v2016 = vpop.permute.xlu0 %2015
        %v2019 = vsel %vm836, %v2011, 0
        %2021 = vmatprep.subr.mxu0 0.0
        %2022 = vmatpush1.msra.mxu0 0.0
        %2023 = vmatprep.subr.mxu0 0.0
        %2024 = vmatpush1.msra.mxu0 0.0
        %2025 = vmatprep.subr.mxu0 0.0
        %2026 = vmatpush1.msra.mxu0 0.0
        %2027 = vmatprep.subr.mxu0 0.0
        %2028 = vmatpush1.msra.mxu0 0.0
        %2029 = vmatprep.subr.mxu0 0.0
        %2030 = vmatpush1.msra.mxu0 0.0
        %2031 = vmatprep.subr.mxu0 0.0
        %2032 = vmatpush1.msra.mxu0 0.0
        %2033 = vmatprep.subr.mxu0 0.0
        %2034 = vmatpush1.msra.mxu0 0.0
        %2035 = vmatprep.subr.mxu0 0.0
        %2036 = vmatpush1.msra.mxu0 0.0
        %2037 = vmatprep.subr.mxu0 0.0
        %2038 = vmatpush1.msra.mxu0 0.0
        %2039 = vmatprep.subr.mxu0 0.0
        %2040 = vmatpush1.msra.mxu0 0.0
        %2041 = vmatprep.subr.mxu0 0.0
        %2042 = vmatpush1.msra.mxu0 0.0
        %2043 = vmatprep.subr.mxu0 0.0
        %2044 = vmatpush1.msra.mxu0 0.0
        %2045 = vmatprep.subr.mxu0 0.0
        %2046 = vmatpush1.msra.mxu0 0.0
        %2047 = vmatprep.subr.mxu0 0.0
        %2048 = vmatpush1.msra.mxu0 0.0
        %2049 = vmatprep.subr.mxu0 0.0
        %2050 = vmatpush1.msra.mxu0 0.0
        %2051 = vmatprep.subr.mxu0 0.0
        %2052 = vmatpush1.msra.mxu0 %v2016
        %2053 = vmatprep.subr.mxu0 0.0
        %2054 = vmatpush2.msra.mxu0 0.0
        %2055 = vmatprep.subr.mxu0 0.0
        %2056 = vmatpush2.msra.mxu0 0.0
        %2057 = vmatprep.subr.mxu0 0.0
        %2058 = vmatpush2.msra.mxu0 0.0
        %2059 = vmatprep.subr.mxu0 0.0
        %2060 = vmatpush2.msra.mxu0 0.0
        %2061 = vmatprep.subr.mxu0 0.0
        %2062 = vmatpush2.msra.mxu0 0.0
        %2063 = vmatprep.subr.mxu0 0.0
        %2064 = vmatpush2.msra.mxu0 0.0
        %2065 = vmatprep.subr.mxu0 0.0
        %2066 = vmatpush2.msra.mxu0 0.0
        %2067 = vmatprep.subr.mxu0 0.0
        %2068 = vmatpush2.msra.mxu0 0.0
        %2069 = vmatprep.subr.mxu0 0.0
        %2070 = vmatpush2.msra.mxu0 0.0
        %2071 = vmatprep.subr.mxu0 0.0
        %2072 = vmatpush2.msra.mxu0 0.0
        %2073 = vmatprep.subr.mxu0 0.0
        %2074 = vmatpush2.msra.mxu0 0.0
        %2075 = vmatprep.subr.mxu0 0.0
        %2076 = vmatpush2.msra.mxu0 0.0
        %2077 = vmatprep.subr.mxu0 0.0
        %2078 = vmatpush2.msra.mxu0 0.0
        %2079 = vmatprep.subr.mxu0 0.0
        %2080 = vmatpush2.msra.mxu0 0.0
        %2081 = vmatprep.subr.mxu0 0.0
        %2082 = vmatpush2.msra.mxu0 0.0
        %2083 = vmatprep.subr.mxu0 0.0
        %2084 = vmatpush2.msra.mxu0 0.0
        %2085 = vmatprep.mubr.f32.mxu0 0.0
        %2086 = vmatmul.mubr.f32.gmra.mxu0 %v2019
        %v2087 = vpop.f32.mrf.mxu0
        %v2088 = vadd.f32 0.0, %v2087
        %v2089 = vpop.f32.mrf.mxu0
        %2090 = vdwg.mxu0
        %v2091 = vrcp.pop %v2014
        %v2092 = vmul.f32 %v2088, %v2091
        %2093 = vst.msk [vmem:[#allocation2] sm:$0xff] %vm836, %v2092
        %2094 = vrot.lane.b32.xlu0 %v1925, 120
        %v2095 = vpop.permute.xlu0 %2094
        %2096 = vrot.lane.b32.xlu0 %v1925, 88
        %v2097 = vpop.permute.xlu0 %2096
        %v2098 = vsel %vm836, %v2095, 0
        %v2100 = vsel %vm836, %v2097, 0
        %2102 = vmatprep.subr.mxu0 0.0
        %2103 = vmatpush1.xpose.msra.mxu0 0.0
        %2104 = vmatprep.subr.mxu0 0.0
        %2105 = vmatpush1.xpose.msra.mxu0 0.0
        %2106 = vmatprep.subr.mxu0 0.0
        %2107 = vmatpush1.xpose.msra.mxu0 0.0
        %2108 = vmatprep.subr.mxu0 0.0
        %2109 = vmatpush1.xpose.msra.mxu0 0.0
        %2110 = vmatprep.subr.mxu0 0.0
        %2111 = vmatpush1.xpose.msra.mxu0 0.0
        %2112 = vmatprep.subr.mxu0 0.0
        %2113 = vmatpush1.xpose.msra.mxu0 0.0
        %2114 = vmatprep.subr.mxu0 0.0
        %2115 = vmatpush1.xpose.msra.mxu0 0.0
        %2116 = vmatprep.subr.mxu0 0.0
        %2117 = vmatpush1.xpose.msra.mxu0 0.0
        %2118 = vmatprep.subr.mxu0 0.0
        %2119 = vmatpush1.xpose.msra.mxu0 0.0
        %2120 = vmatprep.subr.mxu0 0.0
        %2121 = vmatpush1.xpose.msra.mxu0 0.0
        %2122 = vmatprep.subr.mxu0 0.0
        %2123 = vmatpush1.xpose.msra.mxu0 0.0
        %2124 = vmatprep.subr.mxu0 0.0
        %2125 = vmatpush1.xpose.msra.mxu0 0.0
        %2126 = vmatprep.subr.mxu0 0.0
        %2127 = vmatpush1.xpose.msra.mxu0 0.0
        %2128 = vmatprep.subr.mxu0 0.0
        %2129 = vmatpush1.xpose.msra.mxu0 0.0
        %2130 = vmatprep.subr.mxu0 0.0
        %2131 = vmatpush1.xpose.msra.mxu0 0.0
        %2132 = vmatprep.subr.mxu0 0.0
        %2133 = vmatpush1.xpose.msra.mxu0 %v2100
        %2134 = vmatprep.subr.mxu0 0.0
        %2135 = vmatpush2.xpose.msra.mxu0 0.0
        %2136 = vmatprep.subr.mxu0 0.0
        %2137 = vmatpush2.xpose.msra.mxu0 0.0
        %2138 = vmatprep.subr.mxu0 0.0
        %2139 = vmatpush2.xpose.msra.mxu0 0.0
        %2140 = vmatprep.subr.mxu0 0.0
        %2141 = vmatpush2.xpose.msra.mxu0 0.0
        %2142 = vmatprep.subr.mxu0 0.0
        %2143 = vmatpush2.xpose.msra.mxu0 0.0
        %2144 = vmatprep.subr.mxu0 0.0
        %2145 = vmatpush2.xpose.msra.mxu0 0.0
        %2146 = vmatprep.subr.mxu0 0.0
        %2147 = vmatpush2.xpose.msra.mxu0 0.0
        %2148 = vmatprep.subr.mxu0 0.0
        %2149 = vmatpush2.xpose.msra.mxu0 0.0
        %2150 = vmatprep.subr.mxu0 0.0
        %2151 = vmatpush2.xpose.msra.mxu0 0.0
        %2152 = vmatprep.subr.mxu0 0.0
        %2153 = vmatpush2.xpose.msra.mxu0 0.0
        %2154 = vmatprep.subr.mxu0 0.0
        %2155 = vmatpush2.xpose.msra.mxu0 0.0
        %2156 = vmatprep.subr.mxu0 0.0
        %2157 = vmatpush2.xpose.msra.mxu0 0.0
        %2158 = vmatprep.subr.mxu0 0.0
        %2159 = vmatpush2.xpose.msra.mxu0 0.0
        %2160 = vmatprep.subr.mxu0 0.0
        %2161 = vmatpush2.xpose.msra.mxu0 0.0
        %2162 = vmatprep.subr.mxu0 0.0
        %2163 = vmatpush2.xpose.msra.mxu0 0.0
        %2164 = vmatprep.subr.mxu0 0.0
        %2165 = vmatpush2.xpose.msra.mxu0 0.0
        %2166 = vmatprep.mubr.f32.mxu0 0.0
        %2167 = vmatmul.mubr.f32.gmra.mxu0 %v2098
        %v2168 = vpop.f32.mrf.mxu0
        %v2169 = vadd.f32 0.0, %v2168
        %v2170 = vpop.f32.mrf.mxu0
        %2171 = vdwg.mxu0
        %v2172 = vmul.f32 %v2169, 0.35355338
        %v2173 = vsel %vm836, %v2172, -inf
        %2174 = vmax.xlane.f32.xlu0 %v2173
        %v2175 = vpop.xlane.xlu0 %2174
        %v2176 = vsub.f32 %v2172, %v2175
        %v2177 = vmul.f32 %v2176, 1.442695
        %v2178 = vpow.pop %v2177
        %v2179 = vsel %vm836, %v2178, 0.0
        %2180 = vadd.xlane.f32.xlu0 %v2179
        %v2181 = vpop.xlane.xlu0 %2180
        %2182 = vrot.lane.b32.xlu0 %v1925, 56
        %v2183 = vpop.permute.xlu0 %2182
        %v2186 = vsel %vm836, %v2178, 0
        %2188 = vmatprep.subr.mxu0 0.0
        %2189 = vmatpush1.msra.mxu0 0.0
        %2190 = vmatprep.subr.mxu0 0.0
        %2191 = vmatpush1.msra.mxu0 0.0
        %2192 = vmatprep.subr.mxu0 0.0
        %2193 = vmatpush1.msra.mxu0 0.0
        %2194 = vmatprep.subr.mxu0 0.0
        %2195 = vmatpush1.msra.mxu0 0.0
        %2196 = vmatprep.subr.mxu0 0.0
        %2197 = vmatpush1.msra.mxu0 0.0
        %2198 = vmatprep.subr.mxu0 0.0
        %2199 = vmatpush1.msra.mxu0 0.0
        %2200 = vmatprep.subr.mxu0 0.0
        %2201 = vmatpush1.msra.mxu0 0.0
        %2202 = vmatprep.subr.mxu0 0.0
        %2203 = vmatpush1.msra.mxu0 0.0
        %2204 = vmatprep.subr.mxu0 0.0
        %2205 = vmatpush1.msra.mxu0 0.0
        %2206 = vmatprep.subr.mxu0 0.0
        %2207 = vmatpush1.msra.mxu0 0.0
        %2208 = vmatprep.subr.mxu0 0.0
        %2209 = vmatpush1.msra.mxu0 0.0
        %2210 = vmatprep.subr.mxu0 0.0
        %2211 = vmatpush1.msra.mxu0 0.0
        %2212 = vmatprep.subr.mxu0 0.0
        %2213 = vmatpush1.msra.mxu0 0.0
        %2214 = vmatprep.subr.mxu0 0.0
        %2215 = vmatpush1.msra.mxu0 0.0
        %2216 = vmatprep.subr.mxu0 0.0
        %2217 = vmatpush1.msra.mxu0 0.0
        %2218 = vmatprep.subr.mxu0 0.0
        %2219 = vmatpush1.msra.mxu0 %v2183
        %2220 = vmatprep.subr.mxu0 0.0
        %2221 = vmatpush2.msra.mxu0 0.0
        %2222 = vmatprep.subr.mxu0 0.0
        %2223 = vmatpush2.msra.mxu0 0.0
        %2224 = vmatprep.subr.mxu0 0.0
        %2225 = vmatpush2.msra.mxu0 0.0
        %2226 = vmatprep.subr.mxu0 0.0
        %2227 = vmatpush2.msra.mxu0 0.0
        %2228 = vmatprep.subr.mxu0 0.0
        %2229 = vmatpush2.msra.mxu0 0.0
        %2230 = vmatprep.subr.mxu0 0.0
        %2231 = vmatpush2.msra.mxu0 0.0
        %2232 = vmatprep.subr.mxu0 0.0
        %2233 = vmatpush2.msra.mxu0 0.0
        %2234 = vmatprep.subr.mxu0 0.0
        %2235 = vmatpush2.msra.mxu0 0.0
        %2236 = vmatprep.subr.mxu0 0.0
        %2237 = vmatpush2.msra.mxu0 0.0
        %2238 = vmatprep.subr.mxu0 0.0
        %2239 = vmatpush2.msra.mxu0 0.0
        %2240 = vmatprep.subr.mxu0 0.0
        %2241 = vmatpush2.msra.mxu0 0.0
        %2242 = vmatprep.subr.mxu0 0.0
        %2243 = vmatpush2.msra.mxu0 0.0
        %2244 = vmatprep.subr.mxu0 0.0
        %2245 = vmatpush2.msra.mxu0 0.0
        %2246 = vmatprep.subr.mxu0 0.0
        %2247 = vmatpush2.msra.mxu0 0.0
        %2248 = vmatprep.subr.mxu0 0.0
        %2249 = vmatpush2.msra.mxu0 0.0
        %2250 = vmatprep.subr.mxu0 0.0
        %2251 = vmatpush2.msra.mxu0 0.0
        %2252 = vmatprep.mubr.f32.mxu0 0.0
        %2253 = vmatmul.mubr.f32.gmra.mxu0 %v2186
        %v2254 = vpop.f32.mrf.mxu0
        %v2255 = vadd.f32 0.0, %v2254
        %v2256 = vpop.f32.mrf.mxu0
        %2257 = vdwg.mxu0
        %v2258 = vrcp.pop %v2181
        %v2259 = vmul.f32 %v2255, %v2258
        %2261 = vrot.lane.b32.xlu0 %v2259, 8
        %v2262 = vpop.permute.xlu0 %2261
        %2264 = vst.msk [vmem:[#allocation2] sm:$0xff] %vm1170, %v2262
        %2265 = vrot.lane.b32.xlu0 %v1925, 112
        %v2266 = vpop.permute.xlu0 %2265
        %2267 = vrot.lane.b32.xlu0 %v1925, 80
        %v2268 = vpop.permute.xlu0 %2267
        %v2269 = vsel %vm836, %v2266, 0
        %v2271 = vsel %vm836, %v2268, 0
        %2273 = vmatprep.subr.mxu0 0.0
        %2274 = vmatpush1.xpose.msra.mxu0 0.0
        %2275 = vmatprep.subr.mxu0 0.0
        %2276 = vmatpush1.xpose.msra.mxu0 0.0
        %2277 = vmatprep.subr.mxu0 0.0
        %2278 = vmatpush1.xpose.msra.mxu0 0.0
        %2279 = vmatprep.subr.mxu0 0.0
        %2280 = vmatpush1.xpose.msra.mxu0 0.0
        %2281 = vmatprep.subr.mxu0 0.0
        %2282 = vmatpush1.xpose.msra.mxu0 0.0
        %2283 = vmatprep.subr.mxu0 0.0
        %2284 = vmatpush1.xpose.msra.mxu0 0.0
        %2285 = vmatprep.subr.mxu0 0.0
        %2286 = vmatpush1.xpose.msra.mxu0 0.0
        %2287 = vmatprep.subr.mxu0 0.0
        %2288 = vmatpush1.xpose.msra.mxu0 0.0
        %2289 = vmatprep.subr.mxu0 0.0
        %2290 = vmatpush1.xpose.msra.mxu0 0.0
        %2291 = vmatprep.subr.mxu0 0.0
        %2292 = vmatpush1.xpose.msra.mxu0 0.0
        %2293 = vmatprep.subr.mxu0 0.0
        %2294 = vmatpush1.xpose.msra.mxu0 0.0
        %2295 = vmatprep.subr.mxu0 0.0
        %2296 = vmatpush1.xpose.msra.mxu0 0.0
        %2297 = vmatprep.subr.mxu0 0.0
        %2298 = vmatpush1.xpose.msra.mxu0 0.0
        %2299 = vmatprep.subr.mxu0 0.0
        %2300 = vmatpush1.xpose.msra.mxu0 0.0
        %2301 = vmatprep.subr.mxu0 0.0
        %2302 = vmatpush1.xpose.msra.mxu0 0.0
        %2303 = vmatprep.subr.mxu0 0.0
        %2304 = vmatpush1.xpose.msra.mxu0 %v2271
        %2305 = vmatprep.subr.mxu0 0.0
        %2306 = vmatpush2.xpose.msra.mxu0 0.0
        %2307 = vmatprep.subr.mxu0 0.0
        %2308 = vmatpush2.xpose.msra.mxu0 0.0
        %2309 = vmatprep.subr.mxu0 0.0
        %2310 = vmatpush2.xpose.msra.mxu0 0.0
        %2311 = vmatprep.subr.mxu0 0.0
        %2312 = vmatpush2.xpose.msra.mxu0 0.0
        %2313 = vmatprep.subr.mxu0 0.0
        %2314 = vmatpush2.xpose.msra.mxu0 0.0
        %2315 = vmatprep.subr.mxu0 0.0
        %2316 = vmatpush2.xpose.msra.mxu0 0.0
        %2317 = vmatprep.subr.mxu0 0.0
        %2318 = vmatpush2.xpose.msra.mxu0 0.0
        %2319 = vmatprep.subr.mxu0 0.0
        %2320 = vmatpush2.xpose.msra.mxu0 0.0
        %2321 = vmatprep.subr.mxu0 0.0
        %2322 = vmatpush2.xpose.msra.mxu0 0.0
        %2323 = vmatprep.subr.mxu0 0.0
        %2324 = vmatpush2.xpose.msra.mxu0 0.0
        %2325 = vmatprep.subr.mxu0 0.0
        %2326 = vmatpush2.xpose.msra.mxu0 0.0
        %2327 = vmatprep.subr.mxu0 0.0
        %2328 = vmatpush2.xpose.msra.mxu0 0.0
        %2329 = vmatprep.subr.mxu0 0.0
        %2330 = vmatpush2.xpose.msra.mxu0 0.0
        %2331 = vmatprep.subr.mxu0 0.0
        %2332 = vmatpush2.xpose.msra.mxu0 0.0
        %2333 = vmatprep.subr.mxu0 0.0
        %2334 = vmatpush2.xpose.msra.mxu0 0.0
        %2335 = vmatprep.subr.mxu0 0.0
        %2336 = vmatpush2.xpose.msra.mxu0 0.0
        %2337 = vmatprep.mubr.f32.mxu0 0.0
        %2338 = vmatmul.mubr.f32.gmra.mxu0 %v2269
        %v2339 = vpop.f32.mrf.mxu0
        %v2340 = vadd.f32 0.0, %v2339
        %v2341 = vpop.f32.mrf.mxu0
        %2342 = vdwg.mxu0
        %v2343 = vmul.f32 %v2340, 0.35355338
        %v2344 = vsel %vm836, %v2343, -inf
        %2345 = vmax.xlane.f32.xlu0 %v2344
        %v2346 = vpop.xlane.xlu0 %2345
        %v2347 = vsub.f32 %v2343, %v2346
        %v2348 = vmul.f32 %v2347, 1.442695
        %v2349 = vpow.pop %v2348
        %v2350 = vsel %vm836, %v2349, 0.0
        %2351 = vadd.xlane.f32.xlu0 %v2350
        %v2352 = vpop.xlane.xlu0 %2351
        %2353 = vrot.lane.b32.xlu0 %v1925, 48
        %v2354 = vpop.permute.xlu0 %2353
        %v2357 = vsel %vm836, %v2349, 0
        %2359 = vmatprep.subr.mxu0 0.0
        %2360 = vmatpush1.msra.mxu0 0.0
        %2361 = vmatprep.subr.mxu0 0.0
        %2362 = vmatpush1.msra.mxu0 0.0
        %2363 = vmatprep.subr.mxu0 0.0
        %2364 = vmatpush1.msra.mxu0 0.0
        %2365 = vmatprep.subr.mxu0 0.0
        %2366 = vmatpush1.msra.mxu0 0.0
        %2367 = vmatprep.subr.mxu0 0.0
        %2368 = vmatpush1.msra.mxu0 0.0
        %2369 = vmatprep.subr.mxu0 0.0
        %2370 = vmatpush1.msra.mxu0 0.0
        %2371 = vmatprep.subr.mxu0 0.0
        %2372 = vmatpush1.msra.mxu0 0.0
        %2373 = vmatprep.subr.mxu0 0.0
        %2374 = vmatpush1.msra.mxu0 0.0
        %2375 = vmatprep.subr.mxu0 0.0
        %2376 = vmatpush1.msra.mxu0 0.0
        %2377 = vmatprep.subr.mxu0 0.0
        %2378 = vmatpush1.msra.mxu0 0.0
        %2379 = vmatprep.subr.mxu0 0.0
        %2380 = vmatpush1.msra.mxu0 0.0
        %2381 = vmatprep.subr.mxu0 0.0
        %2382 = vmatpush1.msra.mxu0 0.0
        %2383 = vmatprep.subr.mxu0 0.0
        %2384 = vmatpush1.msra.mxu0 0.0
        %2385 = vmatprep.subr.mxu0 0.0
        %2386 = vmatpush1.msra.mxu0 0.0
        %2387 = vmatprep.subr.mxu0 0.0
        %2388 = vmatpush1.msra.mxu0 0.0
        %2389 = vmatprep.subr.mxu0 0.0
        %2390 = vmatpush1.msra.mxu0 %v2354
        %2391 = vmatprep.subr.mxu0 0.0
        %2392 = vmatpush2.msra.mxu0 0.0
        %2393 = vmatprep.subr.mxu0 0.0
        %2394 = vmatpush2.msra.mxu0 0.0
        %2395 = vmatprep.subr.mxu0 0.0
        %2396 = vmatpush2.msra.mxu0 0.0
        %2397 = vmatprep.subr.mxu0 0.0
        %2398 = vmatpush2.msra.mxu0 0.0
        %2399 = vmatprep.subr.mxu0 0.0
        %2400 = vmatpush2.msra.mxu0 0.0
        %2401 = vmatprep.subr.mxu0 0.0
        %2402 = vmatpush2.msra.mxu0 0.0
        %2403 = vmatprep.subr.mxu0 0.0
        %2404 = vmatpush2.msra.mxu0 0.0
        %2405 = vmatprep.subr.mxu0 0.0
        %2406 = vmatpush2.msra.mxu0 0.0
        %2407 = vmatprep.subr.mxu0 0.0
        %2408 = vmatpush2.msra.mxu0 0.0
        %2409 = vmatprep.subr.mxu0 0.0
        %2410 = vmatpush2.msra.mxu0 0.0
        %2411 = vmatprep.subr.mxu0 0.0
        %2412 = vmatpush2.msra.mxu0 0.0
        %2413 = vmatprep.subr.mxu0 0.0
        %2414 = vmatpush2.msra.mxu0 0.0
        %2415 = vmatprep.subr.mxu0 0.0
        %2416 = vmatpush2.msra.mxu0 0.0
        %2417 = vmatprep.subr.mxu0 0.0
        %2418 = vmatpush2.msra.mxu0 0.0
        %2419 = vmatprep.subr.mxu0 0.0
        %2420 = vmatpush2.msra.mxu0 0.0
        %2421 = vmatprep.subr.mxu0 0.0
        %2422 = vmatpush2.msra.mxu0 0.0
        %2423 = vmatprep.mubr.f32.mxu0 0.0
        %2424 = vmatmul.mubr.f32.gmra.mxu0 %v2357
        %v2425 = vpop.f32.mrf.mxu0
        %v2426 = vadd.f32 0.0, %v2425
        %v2427 = vpop.f32.mrf.mxu0
        %2428 = vdwg.mxu0
        %v2429 = vrcp.pop %v2352
        %v2430 = vmul.f32 %v2426, %v2429
        %2432 = vrot.lane.b32.xlu0 %v2430, 16
        %v2433 = vpop.permute.xlu0 %2432
        %2435 = vst.msk [vmem:[#allocation2] sm:$0xff] %vm1342, %v2433
        %2436 = vrot.lane.b32.xlu0 %v1925, 104
        %v2437 = vpop.permute.xlu0 %2436
        %2438 = vrot.lane.b32.xlu0 %v1925, 72
        %v2439 = vpop.permute.xlu0 %2438
        %v2440 = vsel %vm836, %v2437, 0
        %v2442 = vsel %vm836, %v2439, 0
        %2444 = vmatprep.subr.mxu0 0.0
        %2445 = vmatpush1.xpose.msra.mxu0 0.0
        %2446 = vmatprep.subr.mxu0 0.0
        %2447 = vmatpush1.xpose.msra.mxu0 0.0
        %2448 = vmatprep.subr.mxu0 0.0
        %2449 = vmatpush1.xpose.msra.mxu0 0.0
        %2450 = vmatprep.subr.mxu0 0.0
        %2451 = vmatpush1.xpose.msra.mxu0 0.0
        %2452 = vmatprep.subr.mxu0 0.0
        %2453 = vmatpush1.xpose.msra.mxu0 0.0
        %2454 = vmatprep.subr.mxu0 0.0
        %2455 = vmatpush1.xpose.msra.mxu0 0.0
        %2456 = vmatprep.subr.mxu0 0.0
        %2457 = vmatpush1.xpose.msra.mxu0 0.0
        %2458 = vmatprep.subr.mxu0 0.0
        %2459 = vmatpush1.xpose.msra.mxu0 0.0
        %2460 = vmatprep.subr.mxu0 0.0
        %2461 = vmatpush1.xpose.msra.mxu0 0.0
        %2462 = vmatprep.subr.mxu0 0.0
        %2463 = vmatpush1.xpose.msra.mxu0 0.0
        %2464 = vmatprep.subr.mxu0 0.0
        %2465 = vmatpush1.xpose.msra.mxu0 0.0
        %2466 = vmatprep.subr.mxu0 0.0
        %2467 = vmatpush1.xpose.msra.mxu0 0.0
        %2468 = vmatprep.subr.mxu0 0.0
        %2469 = vmatpush1.xpose.msra.mxu0 0.0
        %2470 = vmatprep.subr.mxu0 0.0
        %2471 = vmatpush1.xpose.msra.mxu0 0.0
        %2472 = vmatprep.subr.mxu0 0.0
        %2473 = vmatpush1.xpose.msra.mxu0 0.0
        %2474 = vmatprep.subr.mxu0 0.0
        %2475 = vmatpush1.xpose.msra.mxu0 %v2442
        %2476 = vmatprep.subr.mxu0 0.0
        %2477 = vmatpush2.xpose.msra.mxu0 0.0
        %2478 = vmatprep.subr.mxu0 0.0
        %2479 = vmatpush2.xpose.msra.mxu0 0.0
        %2480 = vmatprep.subr.mxu0 0.0
        %2481 = vmatpush2.xpose.msra.mxu0 0.0
        %2482 = vmatprep.subr.mxu0 0.0
        %2483 = vmatpush2.xpose.msra.mxu0 0.0
        %2484 = vmatprep.subr.mxu0 0.0
        %2485 = vmatpush2.xpose.msra.mxu0 0.0
        %2486 = vmatprep.subr.mxu0 0.0
        %2487 = vmatpush2.xpose.msra.mxu0 0.0
        %2488 = vmatprep.subr.mxu0 0.0
        %2489 = vmatpush2.xpose.msra.mxu0 0.0
        %2490 = vmatprep.subr.mxu0 0.0
        %2491 = vmatpush2.xpose.msra.mxu0 0.0
        %2492 = vmatprep.subr.mxu0 0.0
        %2493 = vmatpush2.xpose.msra.mxu0 0.0
        %2494 = vmatprep.subr.mxu0 0.0
        %2495 = vmatpush2.xpose.msra.mxu0 0.0
        %2496 = vmatprep.subr.mxu0 0.0
        %2497 = vmatpush2.xpose.msra.mxu0 0.0
        %2498 = vmatprep.subr.mxu0 0.0
        %2499 = vmatpush2.xpose.msra.mxu0 0.0
        %2500 = vmatprep.subr.mxu0 0.0
        %2501 = vmatpush2.xpose.msra.mxu0 0.0
        %2502 = vmatprep.subr.mxu0 0.0
        %2503 = vmatpush2.xpose.msra.mxu0 0.0
        %2504 = vmatprep.subr.mxu0 0.0
        %2505 = vmatpush2.xpose.msra.mxu0 0.0
        %2506 = vmatprep.subr.mxu0 0.0
        %2507 = vmatpush2.xpose.msra.mxu0 0.0
        %2508 = vmatprep.mubr.f32.mxu0 0.0
        %2509 = vmatmul.mubr.f32.gmra.mxu0 %v2440
        %v2510 = vpop.f32.mrf.mxu0
        %v2511 = vadd.f32 0.0, %v2510
        %v2512 = vpop.f32.mrf.mxu0
        %2513 = vdwg.mxu0
        %v2514 = vmul.f32 %v2511, 0.35355338
        %v2515 = vsel %vm836, %v2514, -inf
        %2516 = vmax.xlane.f32.xlu0 %v2515
        %v2517 = vpop.xlane.xlu0 %2516
        %v2518 = vsub.f32 %v2514, %v2517
        %v2519 = vmul.f32 %v2518, 1.442695
        %v2520 = vpow.pop %v2519
        %v2521 = vsel %vm836, %v2520, 0.0
        %2522 = vadd.xlane.f32.xlu0 %v2521
        %v2523 = vpop.xlane.xlu0 %2522
        %2524 = vrot.lane.b32.xlu0 %v1925, 40
        %v2525 = vpop.permute.xlu0 %2524
        %v2528 = vsel %vm836, %v2520, 0
        %2530 = vmatprep.subr.mxu0 0.0
        %2531 = vmatpush1.msra.mxu0 0.0
        %2532 = vmatprep.subr.mxu0 0.0
        %2533 = vmatpush1.msra.mxu0 0.0
        %2534 = vmatprep.subr.mxu0 0.0
        %2535 = vmatpush1.msra.mxu0 0.0
        %2536 = vmatprep.subr.mxu0 0.0
        %2537 = vmatpush1.msra.mxu0 0.0
        %2538 = vmatprep.subr.mxu0 0.0
        %2539 = vmatpush1.msra.mxu0 0.0
        %2540 = vmatprep.subr.mxu0 0.0
        %2541 = vmatpush1.msra.mxu0 0.0
        %2542 = vmatprep.subr.mxu0 0.0
        %2543 = vmatpush1.msra.mxu0 0.0
        %2544 = vmatprep.subr.mxu0 0.0
        %2545 = vmatpush1.msra.mxu0 0.0
        %2546 = vmatprep.subr.mxu0 0.0
        %2547 = vmatpush1.msra.mxu0 0.0
        %2548 = vmatprep.subr.mxu0 0.0
        %2549 = vmatpush1.msra.mxu0 0.0
        %2550 = vmatprep.subr.mxu0 0.0
        %2551 = vmatpush1.msra.mxu0 0.0
        %2552 = vmatprep.subr.mxu0 0.0
        %2553 = vmatpush1.msra.mxu0 0.0
        %2554 = vmatprep.subr.mxu0 0.0
        %2555 = vmatpush1.msra.mxu0 0.0
        %2556 = vmatprep.subr.mxu0 0.0
        %2557 = vmatpush1.msra.mxu0 0.0
        %2558 = vmatprep.subr.mxu0 0.0
        %2559 = vmatpush1.msra.mxu0 0.0
        %2560 = vmatprep.subr.mxu0 0.0
        %2561 = vmatpush1.msra.mxu0 %v2525
        %2562 = vmatprep.subr.mxu0 0.0
        %2563 = vmatpush2.msra.mxu0 0.0
        %2564 = vmatprep.subr.mxu0 0.0
        %2565 = vmatpush2.msra.mxu0 0.0
        %2566 = vmatprep.subr.mxu0 0.0
        %2567 = vmatpush2.msra.mxu0 0.0
        %2568 = vmatprep.subr.mxu0 0.0
        %2569 = vmatpush2.msra.mxu0 0.0
        %2570 = vmatprep.subr.mxu0 0.0
        %2571 = vmatpush2.msra.mxu0 0.0
        %2572 = vmatprep.subr.mxu0 0.0
        %2573 = vmatpush2.msra.mxu0 0.0
        %2574 = vmatprep.subr.mxu0 0.0
        %2575 = vmatpush2.msra.mxu0 0.0
        %2576 = vmatprep.subr.mxu0 0.0
        %2577 = vmatpush2.msra.mxu0 0.0
        %2578 = vmatprep.subr.mxu0 0.0
        %2579 = vmatpush2.msra.mxu0 0.0
        %2580 = vmatprep.subr.mxu0 0.0
        %2581 = vmatpush2.msra.mxu0 0.0
        %2582 = vmatprep.subr.mxu0 0.0
        %2583 = vmatpush2.msra.mxu0 0.0
        %2584 = vmatprep.subr.mxu0 0.0
        %2585 = vmatpush2.msra.mxu0 0.0
        %2586 = vmatprep.subr.mxu0 0.0
        %2587 = vmatpush2.msra.mxu0 0.0
        %2588 = vmatprep.subr.mxu0 0.0
        %2589 = vmatpush2.msra.mxu0 0.0
        %2590 = vmatprep.subr.mxu0 0.0
        %2591 = vmatpush2.msra.mxu0 0.0
        %2592 = vmatprep.subr.mxu0 0.0
        %2593 = vmatpush2.msra.mxu0 0.0
        %2594 = vmatprep.mubr.f32.mxu0 0.0
        %2595 = vmatmul.mubr.f32.gmra.mxu0 %v2528
        %v2596 = vpop.f32.mrf.mxu0
        %v2597 = vadd.f32 0.0, %v2596
        %v2598 = vpop.f32.mrf.mxu0
        %2599 = vdwg.mxu0
        %v2600 = vrcp.pop %v2523
        %v2601 = vmul.f32 %v2597, %v2600
        %2603 = vrot.lane.b32.xlu0 %v2601, 24
        %v2604 = vpop.permute.xlu0 %2603
        %2606 = vst.msk [vmem:[#allocation2] sm:$0xff] %vm1514, %v2604
        %v2607 = vld [vmem:[#allocation2] sm:$0xff]
        %s2608 = scalar_lea.vmem %s9, 32
        %v2609 = vld [vmem:[%s2608] sm:$0xff]
        %v2610 = vld [vmem:[%s2608 + $0x8] sm:$0xff]
        %v2611 = vld [vmem:[%s2608 + $0x10] sm:$0xff]
        %v2612 = vld [vmem:[%s2608 + $0x18] sm:$0xff]
        %s2613 = scalar_lea.vmem %s10, 1
        %v2614 = vld [vmem:[%s2613] sm:$0x1]
        %v2616 = vlaneseq
        %v2617 = vshrl.u32 %v2616, 7
        %v2618 = vsub.s32 0, %v2617
        %v2619 = vrot.slane %v2614, %v2618
        %v2622 = vsel %vm642, %v2607, 0
        %2624 = vmatprep.subr.mxu0 0.0
        %2625 = vmatpush1.msra.mxu0 0.0
        %2626 = vmatprep.subr.mxu0 0.0
        %2627 = vmatpush1.msra.mxu0 0.0
        %2628 = vmatprep.subr.mxu0 0.0
        %2629 = vmatpush1.msra.mxu0 0.0
        %2630 = vmatprep.subr.mxu0 0.0
        %2631 = vmatpush1.msra.mxu0 0.0
        %2632 = vmatprep.subr.mxu0 0.0
        %2633 = vmatpush1.msra.mxu0 0.0
        %2634 = vmatprep.subr.mxu0 0.0
        %2635 = vmatpush1.msra.mxu0 0.0
        %2636 = vmatprep.subr.mxu0 0.0
        %2637 = vmatpush1.msra.mxu0 0.0
        %2638 = vmatprep.subr.mxu0 0.0
        %2639 = vmatpush1.msra.mxu0 0.0
        %2640 = vmatprep.subr.mxu0 0.0
        %2641 = vmatpush1.msra.mxu0 0.0
        %2642 = vmatprep.subr.mxu0 0.0
        %2643 = vmatpush1.msra.mxu0 0.0
        %2644 = vmatprep.subr.mxu0 0.0
        %2645 = vmatpush1.msra.mxu0 0.0
        %2646 = vmatprep.subr.mxu0 0.0
        %2647 = vmatpush1.msra.mxu0 0.0
        %2648 = vmatprep.subr.mxu0 0.0
        %2649 = vmatpush1.msra.mxu0 %v2612
        %2650 = vmatprep.subr.mxu0 0.0
        %2651 = vmatpush1.msra.mxu0 %v2611
        %2652 = vmatprep.subr.mxu0 0.0
        %2653 = vmatpush1.msra.mxu0 %v2610
        %2654 = vmatprep.subr.mxu0 0.0
        %2655 = vmatpush1.msra.mxu0 %v2609
        %2656 = vmatprep.subr.mxu0 0.0
        %2657 = vmatpush2.msra.mxu0 0.0
        %2658 = vmatprep.subr.mxu0 0.0
        %2659 = vmatpush2.msra.mxu0 0.0
        %2660 = vmatprep.subr.mxu0 0.0
        %2661 = vmatpush2.msra.mxu0 0.0
        %2662 = vmatprep.subr.mxu0 0.0
        %2663 = vmatpush2.msra.mxu0 0.0
        %2664 = vmatprep.subr.mxu0 0.0
        %2665 = vmatpush2.msra.mxu0 0.0
        %2666 = vmatprep.subr.mxu0 0.0
        %2667 = vmatpush2.msra.mxu0 0.0
        %2668 = vmatprep.subr.mxu0 0.0
        %2669 = vmatpush2.msra.mxu0 0.0
        %2670 = vmatprep.subr.mxu0 0.0
        %2671 = vmatpush2.msra.mxu0 0.0
        %2672 = vmatprep.subr.mxu0 0.0
        %2673 = vmatpush2.msra.mxu0 0.0
        %2674 = vmatprep.subr.mxu0 0.0
        %2675 = vmatpush2.msra.mxu0 0.0
        %2676 = vmatprep.subr.mxu0 0.0
        %2677 = vmatpush2.msra.mxu0 0.0
        %2678 = vmatprep.subr.mxu0 0.0
        %2679 = vmatpush2.msra.mxu0 0.0
        %2680 = vmatprep.subr.mxu0 0.0
        %2681 = vmatpush2.msra.mxu0 0.0
        %2682 = vmatprep.subr.mxu0 0.0
        %2683 = vmatpush2.msra.mxu0 0.0
        %2684 = vmatprep.subr.mxu0 0.0
        %2685 = vmatpush2.msra.mxu0 0.0
        %2686 = vmatprep.subr.mxu0 0.0
        %2687 = vmatpush2.msra.mxu0 0.0
        %2688 = vmatprep.mubr.f32.mxu0 0.0
        %2689 = vmatmul.mubr.f32.gmra.mxu0 %v2622
        %v2690 = vpop.f32.mrf.mxu0
        %v2691 = vadd.f32 %v2619, %v2690
        %v2692 = vpop.f32.mrf.mxu0
        %2693 = vdwg.mxu0
        %v2694 = vadd.f32 %v2691, %v1810
        %s2695 = scalar_lea.vmem %s11, 1
        %v2696 = vld [vmem:[%s2695] sm:$0x1]
        %s2697 = scalar_lea.vmem %s12, 1
        %v2698 = vld [vmem:[%s2697] sm:$0x1]
        %v2699 = vsel %vm642, %v2694, 0.0
        %2700 = vadd.xlane.f32.xlu0 %v2699
        %v2701 = vpop.xlane.xlu0 %2700
        %v2702 = vmul.f32 %v2701, %v724
        %v2703 = vsub.f32 %v2694, %v2702
        %v2704 = vmul.f32 %v2703, %v2703
        %v2705 = vsel %vm642, %v2704, 0.0
        %2706 = vadd.xlane.f32.xlu0 %v2705
        %v2707 = vpop.xlane.xlu0 %2706
        %v2708 = vmul.f32 %v2707, %v724
        %v2709 = vadd.f32 %v2708, 1e-05
        %v2710 = vrsqrt.pop %v2709
        %v2711 = vmul.f32 %v2703, %v2710
        %v2713 = vlaneseq
        %v2714 = vshrl.u32 %v2713, 7
        %v2715 = vsub.s32 0, %v2714
        %v2716 = vrot.slane %v2696, %v2715
        %v2718 = vmul.f32 %v2711, %v2716
        %v2720 = vlaneseq
        %v2721 = vshrl.u32 %v2720, 7
        %v2722 = vsub.s32 0, %v2721
        %v2723 = vrot.slane %v2698, %v2722
        %v2725 = vadd.f32 %v2718, %v2723
        %s2726 = scalar_lea.vmem %s13, 32
        %v2727 = vld [vmem:[%s2726] sm:$0xff]
        %v2728 = vld [vmem:[%s2726 + $0x8] sm:$0xff]
        %v2729 = vld [vmem:[%s2726 + $0x10] sm:$0xff]
        %v2730 = vld [vmem:[%s2726 + $0x18] sm:$0xff]
        %s2731 = scalar_lea.vmem %s14, 1
        %v2732 = vld [vmem:[%s2731] sm:$0x1]
        %v2734 = vlaneseq
        %v2735 = vshrl.u32 %v2734, 7
        %v2736 = vsub.s32 0, %v2735
        %v2737 = vrot.slane %v2732, %v2736
        %v2740 = vsel %vm642, %v2725, 0
        %2742 = vmatprep.subr.mxu0 0.0
        %2743 = vmatpush1.msra.mxu0 0.0
        %2744 = vmatprep.subr.mxu0 0.0
        %2745 = vmatpush1.msra.mxu0 0.0
        %2746 = vmatprep.subr.mxu0 0.0
        %2747 = vmatpush1.msra.mxu0 0.0
        %2748 = vmatprep.subr.mxu0 0.0
        %2749 = vmatpush1.msra.mxu0 0.0
        %2750 = vmatprep.subr.mxu0 0.0
        %2751 = vmatpush1.msra.mxu0 0.0
        %2752 = vmatprep.subr.mxu0 0.0
        %2753 = vmatpush1.msra.mxu0 0.0
        %2754 = vmatprep.subr.mxu0 0.0
        %2755 = vmatpush1.msra.mxu0 0.0
        %2756 = vmatprep.subr.mxu0 0.0
        %2757 = vmatpush1.msra.mxu0 0.0
        %2758 = vmatprep.subr.mxu0 0.0
        %2759 = vmatpush1.msra.mxu0 0.0
        %2760 = vmatprep.subr.mxu0 0.0
        %2761 = vmatpush1.msra.mxu0 0.0
        %2762 = vmatprep.subr.mxu0 0.0
        %2763 = vmatpush1.msra.mxu0 0.0
        %2764 = vmatprep.subr.mxu0 0.0
        %2765 = vmatpush1.msra.mxu0 0.0
        %2766 = vmatprep.subr.mxu0 0.0
        %2767 = vmatpush1.msra.mxu0 %v2730
        %2768 = vmatprep.subr.mxu0 0.0
        %2769 = vmatpush1.msra.mxu0 %v2729
        %2770 = vmatprep.subr.mxu0 0.0
        %2771 = vmatpush1.msra.mxu0 %v2728
        %2772 = vmatprep.subr.mxu0 0.0
        %2773 = vmatpush1.msra.mxu0 %v2727
        %2774 = vmatprep.subr.mxu0 0.0
        %2775 = vmatpush2.msra.mxu0 0.0
        %2776 = vmatprep.subr.mxu0 0.0
        %2777 = vmatpush2.msra.mxu0 0.0
        %2778 = vmatprep.subr.mxu0 0.0
        %2779 = vmatpush2.msra.mxu0 0.0
        %2780 = vmatprep.subr.mxu0 0.0
        %2781 = vmatpush2.msra.mxu0 0.0
        %2782 = vmatprep.subr.mxu0 0.0
        %2783 = vmatpush2.msra.mxu0 0.0
        %2784 = vmatprep.subr.mxu0 0.0
        %2785 = vmatpush2.msra.mxu0 0.0
        %2786 = vmatprep.subr.mxu0 0.0
        %2787 = vmatpush2.msra.mxu0 0.0
        %2788 = vmatprep.subr.mxu0 0.0
        %2789 = vmatpush2.msra.mxu0 0.0
        %2790 = vmatprep.subr.mxu0 0.0
        %2791 = vmatpush2.msra.mxu0 0.0
        %2792 = vmatprep.subr.mxu0 0.0
        %2793 = vmatpush2.msra.mxu0 0.0
        %2794 = vmatprep.subr.mxu0 0.0
        %2795 = vmatpush2.msra.mxu0 0.0
        %2796 = vmatprep.subr.mxu0 0.0
        %2797 = vmatpush2.msra.mxu0 0.0
        %2798 = vmatprep.subr.mxu0 0.0
        %2799 = vmatpush2.msra.mxu0 0.0
        %2800 = vmatprep.subr.mxu0 0.0
        %2801 = vmatpush2.msra.mxu0 0.0
        %2802 = vmatprep.subr.mxu0 0.0
        %2803 = vmatpush2.msra.mxu0 0.0
        %2804 = vmatprep.subr.mxu0 0.0
        %2805 = vmatpush2.msra.mxu0 0.0
        %2806 = vmatprep.mubr.f32.mxu0 0.0
        %2807 = vmatmul.mubr.f32.gmra.mxu0 %v2740
        %v2808 = vpop.f32.mrf.mxu0
        %v2809 = vadd.f32 %v2737, %v2808
        %v2810 = vpop.f32.mrf.mxu0
        %2811 = vdwg.mxu0
        %vm2812 = vcmp.ge.f32.partialorder %v2809, 0.0
        %v2813 = vmul.f32 %v2809, 0.01
        %v2814 = vsel %vm2812, %v2809, %v2813
        %s2815 = scalar_lea.vmem %s15, 64
        %v2816 = vld [vmem:[%s2815] sm:$0xff]
        %v2817 = vld [vmem:[%s2815 + $0x8] sm:$0xff]
        %v2818 = vld [vmem:[%s2815 + $0x10] sm:$0xff]
        %v2819 = vld [vmem:[%s2815 + $0x18] sm:$0xff]
        %v2820 = vld [vmem:[%s2815 + $0x20] sm:$0xff]
        %v2821 = vld [vmem:[%s2815 + $0x28] sm:$0xff]
        %v2822 = vld [vmem:[%s2815 + $0x30] sm:$0xff]
        %v2823 = vld [vmem:[%s2815 + $0x38] sm:$0xff]
        %s2824 = scalar_lea.vmem %s16, 1
        %v2825 = vld [vmem:[%s2824] sm:$0x1]
        %v2827 = vlaneseq
        %v2828 = vshrl.u32 %v2827, 7
        %v2829 = vsub.s32 0, %v2828
        %v2830 = vrot.slane %v2825, %v2829
        %v2833 = vsel %vm1733, %v2814, 0
        %2835 = vmatprep.subr.mxu0 0.0
        %2836 = vmatpush1.msra.mxu0 0.0
        %2837 = vmatprep.subr.mxu0 0.0
        %2838 = vmatpush1.msra.mxu0 0.0
        %2839 = vmatprep.subr.mxu0 0.0
        %2840 = vmatpush1.msra.mxu0 0.0
        %2841 = vmatprep.subr.mxu0 0.0
        %2842 = vmatpush1.msra.mxu0 0.0
        %2843 = vmatprep.subr.mxu0 0.0
        %2844 = vmatpush1.msra.mxu0 0.0
        %2845 = vmatprep.subr.mxu0 0.0
        %2846 = vmatpush1.msra.mxu0 0.0
        %2847 = vmatprep.subr.mxu0 0.0
        %2848 = vmatpush1.msra.mxu0 0.0
        %2849 = vmatprep.subr.mxu0 0.0
        %2850 = vmatpush1.msra.mxu0 0.0
        %2851 = vmatprep.subr.mxu0 0.0
        %2852 = vmatpush1.msra.mxu0 %v2823
        %2853 = vmatprep.subr.mxu0 0.0
        %2854 = vmatpush1.msra.mxu0 %v2822
        %2855 = vmatprep.subr.mxu0 0.0
        %2856 = vmatpush1.msra.mxu0 %v2821
        %2857 = vmatprep.subr.mxu0 0.0
        %2858 = vmatpush1.msra.mxu0 %v2820
        %2859 = vmatprep.subr.mxu0 0.0
        %2860 = vmatpush1.msra.mxu0 %v2819
        %2861 = vmatprep.subr.mxu0 0.0
        %2862 = vmatpush1.msra.mxu0 %v2818
        %2863 = vmatprep.subr.mxu0 0.0
        %2864 = vmatpush1.msra.mxu0 %v2817
        %2865 = vmatprep.subr.mxu0 0.0
        %2866 = vmatpush1.msra.mxu0 %v2816
        %2867 = vmatprep.subr.mxu0 0.0
        %2868 = vmatpush2.msra.mxu0 0.0
        %2869 = vmatprep.subr.mxu0 0.0
        %2870 = vmatpush2.msra.mxu0 0.0
        %2871 = vmatprep.subr.mxu0 0.0
        %2872 = vmatpush2.msra.mxu0 0.0
        %2873 = vmatprep.subr.mxu0 0.0
        %2874 = vmatpush2.msra.mxu0 0.0
        %2875 = vmatprep.subr.mxu0 0.0
        %2876 = vmatpush2.msra.mxu0 0.0
        %2877 = vmatprep.subr.mxu0 0.0
        %2878 = vmatpush2.msra.mxu0 0.0
        %2879 = vmatprep.subr.mxu0 0.0
        %2880 = vmatpush2.msra.mxu0 0.0
        %2881 = vmatprep.subr.mxu0 0.0
        %2882 = vmatpush2.msra.mxu0 0.0
        %2883 = vmatprep.subr.mxu0 0.0
        %2884 = vmatpush2.msra.mxu0 0.0
        %2885 = vmatprep.subr.mxu0 0.0
        %2886 = vmatpush2.msra.mxu0 0.0
        %2887 = vmatprep.subr.mxu0 0.0
        %2888 = vmatpush2.msra.mxu0 0.0
        %2889 = vmatprep.subr.mxu0 0.0
        %2890 = vmatpush2.msra.mxu0 0.0
        %2891 = vmatprep.subr.mxu0 0.0
        %2892 = vmatpush2.msra.mxu0 0.0
        %2893 = vmatprep.subr.mxu0 0.0
        %2894 = vmatpush2.msra.mxu0 0.0
        %2895 = vmatprep.subr.mxu0 0.0
        %2896 = vmatpush2.msra.mxu0 0.0
        %2897 = vmatprep.subr.mxu0 0.0
        %2898 = vmatpush2.msra.mxu0 0.0
        %2899 = vmatprep.mubr.f32.mxu0 0.0
        %2900 = vmatmul.mubr.f32.gmra.mxu0 %v2833
        %v2901 = vpop.f32.mrf.mxu0
        %v2902 = vadd.f32 %v2830, %v2901
        %v2903 = vpop.f32.mrf.mxu0
        %2904 = vdwg.mxu0
        %vm2905 = vcmp.ge.f32.partialorder %v2902, 0.0
        %v2906 = vmul.f32 %v2902, 0.01
        %v2907 = vsel %vm2905, %v2902, %v2906
        %v2908 = vadd.f32 %v2694, %v2907
        %2909 = vst.msk [vmem:[%s539] sm:$0xff] %vm642, %v2908
        %s2910 = sand.u32 %s401, 1
        %s2911 = scalar_lea.sflag [#allocation4], %s2910
        %s2912 = sand.u32 %s401, 1
        %s2913 = smul.addr %s2912, 8
        %s2914 = scalar_lea.vmem [#allocation3], %s2913
        // Predicated region
        $region89: #{encoder_forward.1} parent=87 // pred_check
          %p2915 = pneg %p411
        $region90: #{encoder_forward.1} parent=87 // pred_check_branch
          %2917 = sbr.rel (%p2915) target = $region92
        $region91: #{encoder_forward.1} parent=87 // pred_region
          %s2919 = ssub.s32 128, 128
          %2920 = vsyncadd %s2911, %s2919
          %s2921 = smul.addr %s31, 128
          %s2922 = scalar_lea.hbm %s17, %s2921
          %s2924 = sshll.u32 %s2914, 4
          %s2925 = int_to_ptr.vmem [resolvable:$true] %s2924
          %2927 = dma.vmem_to_hbm [thread:$0]  %s2925, 128, %s2922, %s2911
        $region92: #{encoder_forward.1} parent=87 // pred_fallthru
          _
      $region88: #{encoder_forward.1} parent=5 // pred_fallthru
        _
      %p2928 = scmp.le.s32.totalorder 2, %s26
      // Predicated region
      $region93: #{encoder_forward.1} parent=5 // pred_check
        %p2929 = pneg %p2928
      $region94: #{encoder_forward.1} parent=5 // pred_check_branch
        %2931 = sbr.rel (%p2929) target = $region96
      $region95: #{encoder_forward.1} parent=5 // pred_region
        %s2932 = ssub.s32 %s26, 2
        // Predicated region
        $region97: #{encoder_forward.1} parent=95 // pred_check
          %p2933 = pneg %p417
        $region98: #{encoder_forward.1} parent=95 // pred_check_branch
          %2935 = sbr.rel (%p2933) target = $region100
        $region99: #{encoder_forward.1} parent=95 // pred_region
          %s2936 = sand.u32 %s402, 1
          %s2937 = scalar_lea.sflag [#allocation4], %s2936
          %s2938 = sand.u32 %s402, 1
          %s2939 = smul.addr %s2938, 8
          %s2940 = scalar_lea.vmem [#allocation3], %s2939
          %2941 = dma.done %s2937, 128
        $region100: #{encoder_forward.1} parent=95 // pred_fallthru
          _
      $region96: #{encoder_forward.1} parent=5 // pred_fallthru
        _
    $region6: #{encoder_forward.1} parent=1 // loop_footer
      %s30 = sadd.s32 1, %s26
    $region7: #{encoder_forward.1} parent=1 // loop_footer_branch
      %25 = sbr.rel target = $region3
    $region8: #{encoder_forward.1} parent=1 // loop_exit
      _
    %2942 = vsyncpa [#allocation4], 1
    %s2943 = scalar_lea.sflag [#allocation4], 1
    %2944 = vsyncpa %s2943, 1

</llo_original>
